<compile_context>
chip_gen: v6e
topology: v6e:2x2x1
jax: 0.10.0
libtpu: 0.0.40
codegen_flags: <defaults>
</compile_context>

<pallas_src>
import math
import functools

import jax
import jax.numpy as jnp
import numpy as np
from jax.experimental import pallas as pl
from jax.experimental.pallas import tpu as pltpu


K_PAD = 128  # im2col contraction depth padded to one full MXU lane width


# ----------------------------------------------------------------------------
# Fused per-batch kernel: conv(matmul) -> LN+ReLU -> attn -> mix -> LN
# ----------------------------------------------------------------------------
def _fused_thd_kernel(p1_ref, p2_ref, w1_ref, w2_ref, cb_ref, ln_ref,
                      o1_ref, o2_ref, *, d_model):
    # p*_ref : (1, N, K_PAD)  im2col patches (zero padded along K)
    # w*_ref : (K_PAD, C)     conv weights  (zero padded along K)
    # cb_ref : (2, C)         conv biases   [cb1; cb2]
    # ln_ref : (8, C)         LN params     [g1;b1;g2;b2;g3;b3;g4;b4]
    # o*_ref : (1, N, C)
    inv_sqrt_d = 1.0 / math.sqrt(d_model)

    def layernorm(x, g, b):
        mu = jnp.mean(x, axis=-1, keepdims=True)
        xc = x - mu
        var = jnp.mean(xc * xc, axis=-1, keepdims=True)
        return xc * jax.lax.rsqrt(var + 1e-5) * g + b

    # --- conv: one K=128 matmul per stream, plus bias -------------------------
    y1 = jnp.dot(p1_ref[0], w1_ref[...], preferred_element_type=jnp.float32)
    y1 = y1 + cb_ref[0:1, :]
    y2 = jnp.dot(p2_ref[0], w2_ref[...], preferred_element_type=jnp.float32)
    y2 = y2 + cb_ref[1:2, :]

    # --- LN + ReLU -------------------------------------------------------------
    x1 = jnp.maximum(layernorm(y1, ln_ref[0:1, :], ln_ref[1:2, :]), 0.0)
    x2 = jnp.maximum(layernorm(y2, ln_ref[2:3, :], ln_ref[3:4, :]), 0.0)

    # --- self-attention: NT matmul, scale folded into lhs, deferred norm ------
    def attn_unnormalized(x):
        s = jax.lax.dot_general(
            x * inv_sqrt_d, x,
            dimension_numbers=(((1,), (1,)), ((), ())),
            preferred_element_type=jnp.float32)          # (N, N)
        m = jnp.max(s, axis=-1, keepdims=True)
        e = jnp.exp(s - m)
        r = jnp.sum(e, axis=-1, keepdims=True)
        return e, r

    e1, r1 = attn_unnormalized(x1)
    e2, r2 = attn_unnormalized(x2)

    # mixing matmuls on unnormalized probs; normalize the (N, C) result instead
    x1m = jnp.dot(e2, x1, preferred_element_type=jnp.float32)
    x1m = x1m * pl.reciprocal(r2, approx=True)
    x2m = jnp.dot(e1, x2, preferred_element_type=jnp.float32)
    x2m = x2m * pl.reciprocal(r1, approx=True)

    # --- residual + final LayerNorms -------------------------------------------
    o1_ref[0] = layernorm(x1 + x1m, ln_ref[4:5, :], ln_ref[5:6, :])
    o2_ref[0] = layernorm(x2 + x2m, ln_ref[6:7, :], ln_ref[7:8, :])


# ----------------------------------------------------------------------------
# Wrapper: im2col + weight/param packing + one pallas_call
# ----------------------------------------------------------------------------
def _im2col_3x3(x_nchw):
    """NCHW -> (B, H*W, K_PAD) zero-padded 3x3 'same' patch matrix."""
    x = jnp.transpose(x_nchw, (0, 2, 3, 1))                      # NHWC
    B, H, W, Cin = x.shape
    xp = jnp.pad(x, ((0, 0), (1, 1), (1, 1), (0, 0)))
    taps = [xp[:, ky:ky + H, kx:kx + W, :]
            for ky in range(3) for kx in range(3)]
    p = jnp.concatenate(taps, axis=-1).reshape(B, H * W, 9 * Cin)
    return jnp.pad(p, ((0, 0), (0, 0), (0, K_PAD - 9 * Cin)))


def _pad_weight(w_hwio):
    """(3,3,Cin,Cout) -> (K_PAD, Cout); row order matches _im2col_3x3 taps."""
    kh, kw, cin, cout = w_hwio.shape
    w2d = w_hwio.reshape(kh * kw * cin, cout)
    return jnp.pad(w2d, ((0, K_PAD - kh * kw * cin), (0, 0)))


def thd_stack_forward(x1_nchw, x2_nchw, params, d_model):
    B, _, H, W = x1_nchw.shape
    N = H * W
    C = d_model

    p1 = _im2col_3x3(x1_nchw)                                    # (B, N, 128)
    p2 = _im2col_3x3(x2_nchw)                                    # (B, N, 128)
    w1 = _pad_weight(params["w1"])                               # (128, C)
    w2 = _pad_weight(params["w2"])                               # (128, C)
    cb = jnp.stack([params["cb1"], params["cb2"]], axis=0)       # (2, C)
    ln = jnp.stack([params[k] for k in
                    ("g1", "b1", "g2", "b2", "g3", "b3", "g4", "b4")],
                   axis=0)                                       # (8, C)

    tok_in = pl.BlockSpec((1, N, K_PAD), lambda b: (b, 0, 0))
    w_spec = pl.BlockSpec((K_PAD, C), lambda b: (0, 0))
    tok_out = pl.BlockSpec((1, N, C), lambda b: (b, 0, 0))

    kernel = functools.partial(_fused_thd_kernel, d_model=d_model)
    return pl.pallas_call(
        kernel,
        out_shape=(jax.ShapeDtypeStruct((B, N, C), jnp.float32),
                   jax.ShapeDtypeStruct((B, N, C), jnp.float32)),
        grid=(B,),
        in_specs=[tok_in, tok_in, w_spec, w_spec,
                  pl.BlockSpec((2, C), lambda b: (0, 0)),
                  pl.BlockSpec((8, C), lambda b: (0, 0))],
        out_specs=(tok_out, tok_out),
        compiler_params=pltpu.CompilerParams(
            dimension_semantics=("parallel",)),
    )(p1, p2, w1, w2, cb, ln)


# ----------------------------------------------------------------------------
# Pure-JAX reference (for correctness check)
# ----------------------------------------------------------------------------
def thd_stack_reference(x1_nchw, x2_nchw, params, d_model):
    def conv(x_nchw, w_hwio, b):
        x = jnp.transpose(x_nchw, (0, 2, 3, 1))
        y = jax.lax.conv_general_dilated(
            x, w_hwio, (1, 1), "SAME",
            dimension_numbers=("NHWC", "HWIO", "NHWC"))
        y = y + b
        B, H, W, C = y.shape
        return y.reshape(B, H * W, C)              # == 'b c h w -> b (h w) c'

    def layernorm(x, g, b):
        mu = jnp.mean(x, axis=-1, keepdims=True)
        var = jnp.mean((x - mu) ** 2, axis=-1, keepdims=True)
        return (x - mu) * jax.lax.rsqrt(var + 1e-5) * g + b

    def attn(x):
        s = jnp.einsum("bnc,bmc->bnm", x, x) / math.sqrt(d_model)
        return jax.nn.softmax(s, axis=-1)

    y1 = conv(x1_nchw, params["w1"], params["cb1"])
    y2 = conv(x2_nchw, params["w2"], params["cb2"])
    x1 = jax.nn.relu(layernorm(y1, params["g1"], params["b1"]))
    x2 = jax.nn.relu(layernorm(y2, params["g2"], params["b2"]))
    a1, a2 = attn(x1), attn(x2)
    x1_ = jnp.einsum("bnm,bmc->bnc", a2, x1)
    x2_ = jnp.einsum("bnm,bmc->bnc", a1, x2)
    o1 = layernorm(x1 + x1_, params["g3"], params["b3"])
    o2 = layernorm(x2 + x2_, params["g4"], params["b4"])
    return o1, o2


if __name__ == "__main__":
    B, H, W = 2, 16, 16
    x1_channels, x2_channels, d_model = 4, 3, 32

    key = jax.random.PRNGKey(0)
    k1, k2, k3, k4, k5, k6 = jax.random.split(key, 6)

    # Deterministic parameter init (shapes match nn.Conv2d / nn.LayerNorm).
    params = {
        "w1": jax.random.normal(k1, (3, 3, x1_channels, d_model), jnp.float32) * 0.1,
        "cb1": jax.random.normal(k2, (d_model,), jnp.float32) * 0.05,
        "w2": jax.random.normal(k3, (3, 3, x2_channels, d_model), jnp.float32) * 0.1,
        "cb2": jax.random.normal(k4, (d_model,), jnp.float32) * 0.05,
        # LayerNorm params (PyTorch default init: weight=1, bias=0).
        "g1": jnp.ones((d_model,), jnp.float32), "b1": jnp.zeros((d_model,), jnp.float32),
        "g2": jnp.ones((d_model,), jnp.float32), "b2": jnp.zeros((d_model,), jnp.float32),
        "g3": jnp.ones((d_model,), jnp.float32), "b3": jnp.zeros((d_model,), jnp.float32),
        "g4": jnp.ones((d_model,), jnp.float32), "b4": jnp.zeros((d_model,), jnp.float32),
    }

    x1 = jax.random.normal(k5, (B, x1_channels, H, W), jnp.float32)   # NCHW
    x2 = jax.random.normal(k6, (B, x2_channels, H, W), jnp.float32)   # NCHW

    o1, o2 = thd_stack_forward(x1, x2, params, d_model)
    jax.block_until_ready((o1, o2))

    r1, r2 = thd_stack_reference(x1, x2, params, d_model)
    # Tolerance 1e-3: the EUP approximate reciprocal used for the deferred
    # softmax normalization carries ~1e-4 relative error.
    np.testing.assert_allclose(np.asarray(o1), np.asarray(r1), rtol=1e-3, atol=1e-3)
    np.testing.assert_allclose(np.asarray(o2), np.asarray(r2), rtol=1e-3, atol=1e-3)

    print("KERNEL_OK")
</pallas_src>

<mosaic_0001>
module attributes {stable_mosaic.version = 11 : i64} {
  func.func @_fused_thd_kernel(%arg0: i32, %arg1: memref<1x256x128xf32, #tpu.memory_space<vmem>>, %arg2: memref<1x256x128xf32, #tpu.memory_space<vmem>>, %arg3: memref<128x32xf32, #tpu.memory_space<vmem>>, %arg4: memref<128x32xf32, #tpu.memory_space<vmem>>, %arg5: memref<2x32xf32, #tpu.memory_space<vmem>>, %arg6: memref<8x32xf32, #tpu.memory_space<vmem>>, %arg7: memref<1x256x32xf32, #tpu.memory_space<vmem>>, %arg8: memref<1x256x32xf32, #tpu.memory_space<vmem>>) attributes {dimension_semantics = [#tpu.dimension_semantics<parallel>], iteration_bounds = array<i64: 2>, scalar_prefetch = 0 : i64, scratch_operands = 0 : i64, tpu.core_type = #tpu.core_type<tc>, window_params = [{transform_indices = @transform_0, window_bounds = array<i64: 1, 256, 128>}, {transform_indices = @transform_1, window_bounds = array<i64: 1, 256, 128>}, {pipeline_mode = #tpu.pipeline_mode<synchronous>, transform_indices = @transform_2, window_bounds = array<i64: 128, 32>}, {pipeline_mode = #tpu.pipeline_mode<synchronous>, transform_indices = @transform_3, window_bounds = array<i64: 128, 32>}, {pipeline_mode = #tpu.pipeline_mode<synchronous>, transform_indices = @transform_4, window_bounds = array<i64: 2, 32>}, {pipeline_mode = #tpu.pipeline_mode<synchronous>, transform_indices = @transform_5, window_bounds = array<i64: 8, 32>}, {transform_indices = @transform_6, window_bounds = array<i64: 1, 256, 32>}, {transform_indices = @transform_7, window_bounds = array<i64: 1, 256, 32>}]} {
    %c0 = arith.constant 0 : index
    %c0_0 = arith.constant 0 : index
    %c0_1 = arith.constant 0 : index
    %0 = vector.load %arg1[%c0, %c0_0, %c0_1] : memref<1x256x128xf32, #tpu.memory_space<vmem>>, vector<1x256x128xf32>
    %1 = vector.shape_cast %0 : vector<1x256x128xf32> to vector<256x128xf32>
    %c0_2 = arith.constant 0 : index
    %c0_3 = arith.constant 0 : index
    %2 = vector.load %arg3[%c0_2, %c0_3] : memref<128x32xf32, #tpu.memory_space<vmem>>, vector<128x32xf32>
    %cst = arith.constant dense<0.000000e+00> : vector<256x32xf32>
    %3 = tpu.matmul %1, %2, %cst {dimension_numbers = #tpu.dot_dimension_numbers<[1], [0], [0], [1], [0, 0, 1, 1], [], []>} : vector<256x128xf32>, vector<128x32xf32>, vector<256x32xf32> -> vector<256x32xf32>
    %c0_4 = arith.constant 0 : index
    %c0_5 = arith.constant 0 : index
    %4 = vector.load %arg5[%c0_4, %c0_5] : memref<2x32xf32, #tpu.memory_space<vmem>>, vector<1x32xf32>
    %5 = vector.broadcast %4 : vector<1x32xf32> to vector<256x32xf32>
    %6 = arith.addf %3, %5 : vector<256x32xf32>
    %c0_6 = arith.constant 0 : index
    %c0_7 = arith.constant 0 : index
    %c0_8 = arith.constant 0 : index
    %7 = vector.load %arg2[%c0_6, %c0_7, %c0_8] : memref<1x256x128xf32, #tpu.memory_space<vmem>>, vector<1x256x128xf32>
    %8 = vector.shape_cast %7 : vector<1x256x128xf32> to vector<256x128xf32>
    %c0_9 = arith.constant 0 : index
    %c0_10 = arith.constant 0 : index
    %9 = vector.load %arg4[%c0_9, %c0_10] : memref<128x32xf32, #tpu.memory_space<vmem>>, vector<128x32xf32>
    %cst_11 = arith.constant dense<0.000000e+00> : vector<256x32xf32>
    %10 = tpu.matmul %8, %9, %cst_11 {dimension_numbers = #tpu.dot_dimension_numbers<[1], [0], [0], [1], [0, 0, 1, 1], [], []>} : vector<256x128xf32>, vector<128x32xf32>, vector<256x32xf32> -> vector<256x32xf32>
    %c1 = arith.constant 1 : index
    %c0_12 = arith.constant 0 : index
    %11 = vector.load %arg5[%c1, %c0_12] : memref<2x32xf32, #tpu.memory_space<vmem>>, vector<1x32xf32>
    %12 = vector.broadcast %11 : vector<1x32xf32> to vector<256x32xf32>
    %13 = arith.addf %10, %12 : vector<256x32xf32>
    %c0_13 = arith.constant 0 : index
    %c0_14 = arith.constant 0 : index
    %14 = vector.load %arg6[%c0_13, %c0_14] : memref<8x32xf32, #tpu.memory_space<vmem>>, vector<1x32xf32>
    %c1_15 = arith.constant 1 : index
    %c0_16 = arith.constant 0 : index
    %15 = vector.load %arg6[%c1_15, %c0_16] : memref<8x32xf32, #tpu.memory_space<vmem>>, vector<1x32xf32>
    %cst_17 = arith.constant dense<0.000000e+00> : vector<256xf32>
    %16 = vector.multi_reduction <add>, %6, %cst_17 [1] : vector<256x32xf32> to vector<256xf32>
    %17 = vector.shape_cast %16 : vector<256xf32> to vector<256x1xf32>
    %cst_18 = arith.constant 3.200000e+01 : f32
    %18 = vector.broadcast %cst_18 : f32 to vector<256x1xf32>
    %19 = arith.divf %17, %18 : vector<256x1xf32>
    %20 = vector.broadcast %19 : vector<256x1xf32> to vector<256x32xf32>
    %21 = arith.subf %6, %20 : vector<256x32xf32>
    %22 = arith.mulf %21, %21 : vector<256x32xf32>
    %cst_19 = arith.constant dense<0.000000e+00> : vector<256xf32>
    %23 = vector.multi_reduction <add>, %22, %cst_19 [1] : vector<256x32xf32> to vector<256xf32>
    %24 = vector.shape_cast %23 : vector<256xf32> to vector<256x1xf32>
    %cst_20 = arith.constant 3.200000e+01 : f32
    %25 = vector.broadcast %cst_20 : f32 to vector<256x1xf32>
    %26 = arith.divf %24, %25 : vector<256x1xf32>
    %cst_21 = arith.constant 9.99999974E-6 : f32
    %27 = vector.broadcast %cst_21 : f32 to vector<256x1xf32>
    %28 = arith.addf %26, %27 : vector<256x1xf32>
    %29 = math.rsqrt %28 : vector<256x1xf32>
    %30 = vector.broadcast %29 : vector<256x1xf32> to vector<256x32xf32>
    %31 = arith.mulf %21, %30 : vector<256x32xf32>
    %32 = vector.broadcast %14 : vector<1x32xf32> to vector<256x32xf32>
    %33 = arith.mulf %31, %32 : vector<256x32xf32>
    %34 = vector.broadcast %15 : vector<1x32xf32> to vector<256x32xf32>
    %35 = arith.addf %33, %34 : vector<256x32xf32>
    %cst_22 = arith.constant 0.000000e+00 : f32
    %36 = vector.broadcast %cst_22 : f32 to vector<256x32xf32>
    %37 = arith.maximumf %35, %36 : vector<256x32xf32>
    %c2 = arith.constant 2 : index
    %c0_23 = arith.constant 0 : index
    %38 = vector.load %arg6[%c2, %c0_23] : memref<8x32xf32, #tpu.memory_space<vmem>>, vector<1x32xf32>
    %c3 = arith.constant 3 : index
    %c0_24 = arith.constant 0 : index
    %39 = vector.load %arg6[%c3, %c0_24] : memref<8x32xf32, #tpu.memory_space<vmem>>, vector<1x32xf32>
    %cst_25 = arith.constant dense<0.000000e+00> : vector<256xf32>
    %40 = vector.multi_reduction <add>, %13, %cst_25 [1] : vector<256x32xf32> to vector<256xf32>
    %41 = vector.shape_cast %40 : vector<256xf32> to vector<256x1xf32>
    %cst_26 = arith.constant 3.200000e+01 : f32
    %42 = vector.broadcast %cst_26 : f32 to vector<256x1xf32>
    %43 = arith.divf %41, %42 : vector<256x1xf32>
    %44 = vector.broadcast %43 : vector<256x1xf32> to vector<256x32xf32>
    %45 = arith.subf %13, %44 : vector<256x32xf32>
    %46 = arith.mulf %45, %45 : vector<256x32xf32>
    %cst_27 = arith.constant dense<0.000000e+00> : vector<256xf32>
    %47 = vector.multi_reduction <add>, %46, %cst_27 [1] : vector<256x32xf32> to vector<256xf32>
    %48 = vector.shape_cast %47 : vector<256xf32> to vector<256x1xf32>
    %cst_28 = arith.constant 3.200000e+01 : f32
    %49 = vector.broadcast %cst_28 : f32 to vector<256x1xf32>
    %50 = arith.divf %48, %49 : vector<256x1xf32>
    %cst_29 = arith.constant 9.99999974E-6 : f32
    %51 = vector.broadcast %cst_29 : f32 to vector<256x1xf32>
    %52 = arith.addf %50, %51 : vector<256x1xf32>
    %53 = math.rsqrt %52 : vector<256x1xf32>
    %54 = vector.broadcast %53 : vector<256x1xf32> to vector<256x32xf32>
    %55 = arith.mulf %45, %54 : vector<256x32xf32>
    %56 = vector.broadcast %38 : vector<1x32xf32> to vector<256x32xf32>
    %57 = arith.mulf %55, %56 : vector<256x32xf32>
    %58 = vector.broadcast %39 : vector<1x32xf32> to vector<256x32xf32>
    %59 = arith.addf %57, %58 : vector<256x32xf32>
    %cst_30 = arith.constant 0.000000e+00 : f32
    %60 = vector.broadcast %cst_30 : f32 to vector<256x32xf32>
    %61 = arith.maximumf %59, %60 : vector<256x32xf32>
    %cst_31 = arith.constant 0.176776692 : f32
    %62 = vector.broadcast %cst_31 : f32 to vector<256x32xf32>
    %63 = arith.mulf %37, %62 : vector<256x32xf32>
    %cst_32 = arith.constant dense<0.000000e+00> : vector<256x256xf32>
    %64 = tpu.matmul %63, %37, %cst_32 {dimension_numbers = #tpu.dot_dimension_numbers<[1], [1], [0], [0], [0, 0, 1, 0], [], []>} : vector<256x32xf32>, vector<256x32xf32>, vector<256x256xf32> -> vector<256x256xf32>
    %cst_33 = arith.constant dense<0xFF800000> : vector<256xf32>
    %65 = vector.multi_reduction <maximumf>, %64, %cst_33 [1] : vector<256x256xf32> to vector<256xf32>
    %66 = vector.shape_cast %65 : vector<256xf32> to vector<256x1xf32>
    %67 = vector.broadcast %66 : vector<256x1xf32> to vector<256x256xf32>
    %68 = arith.subf %64, %67 : vector<256x256xf32>
    %69 = math.exp %68 : vector<256x256xf32>
    %cst_34 = arith.constant dense<0.000000e+00> : vector<256xf32>
    %70 = vector.multi_reduction <add>, %69, %cst_34 [1] : vector<256x256xf32> to vector<256xf32>
    %71 = vector.shape_cast %70 : vector<256xf32> to vector<256x1xf32>
    %cst_35 = arith.constant 0.176776692 : f32
    %72 = vector.broadcast %cst_35 : f32 to vector<256x32xf32>
    %73 = arith.mulf %61, %72 : vector<256x32xf32>
    %cst_36 = arith.constant dense<0.000000e+00> : vector<256x256xf32>
    %74 = tpu.matmul %73, %61, %cst_36 {dimension_numbers = #tpu.dot_dimension_numbers<[1], [1], [0], [0], [0, 0, 1, 0], [], []>} : vector<256x32xf32>, vector<256x32xf32>, vector<256x256xf32> -> vector<256x256xf32>
    %cst_37 = arith.constant dense<0xFF800000> : vector<256xf32>
    %75 = vector.multi_reduction <maximumf>, %74, %cst_37 [1] : vector<256x256xf32> to vector<256xf32>
    %76 = vector.shape_cast %75 : vector<256xf32> to vector<256x1xf32>
    %77 = vector.broadcast %76 : vector<256x1xf32> to vector<256x256xf32>
    %78 = arith.subf %74, %77 : vector<256x256xf32>
    %79 = math.exp %78 : vector<256x256xf32>
    %cst_38 = arith.constant dense<0.000000e+00> : vector<256xf32>
    %80 = vector.multi_reduction <add>, %79, %cst_38 [1] : vector<256x256xf32> to vector<256xf32>
    %81 = vector.shape_cast %80 : vector<256xf32> to vector<256x1xf32>
    %cst_39 = arith.constant dense<0.000000e+00> : vector<256x32xf32>
    %82 = tpu.matmul %79, %37, %cst_39 {dimension_numbers = #tpu.dot_dimension_numbers<[1], [0], [0], [1], [0, 0, 1, 1], [], []>} : vector<256x256xf32>, vector<256x32xf32>, vector<256x32xf32> -> vector<256x32xf32>
    %83 = tpu.reciprocal %81 {approx = true} : vector<256x1xf32> -> vector<256x1xf32>
    %84 = vector.broadcast %83 : vector<256x1xf32> to vector<256x32xf32>
    %85 = arith.mulf %82, %84 : vector<256x32xf32>
    %cst_40 = arith.constant dense<0.000000e+00> : vector<256x32xf32>
    %86 = tpu.matmul %69, %61, %cst_40 {dimension_numbers = #tpu.dot_dimension_numbers<[1], [0], [0], [1], [0, 0, 1, 1], [], []>} : vector<256x256xf32>, vector<256x32xf32>, vector<256x32xf32> -> vector<256x32xf32>
    %87 = tpu.reciprocal %71 {approx = true} : vector<256x1xf32> -> vector<256x1xf32>
    %88 = vector.broadcast %87 : vector<256x1xf32> to vector<256x32xf32>
    %89 = arith.mulf %86, %88 : vector<256x32xf32>
    %90 = arith.addf %37, %85 : vector<256x32xf32>
    %c4 = arith.constant 4 : index
    %c0_41 = arith.constant 0 : index
    %91 = vector.load %arg6[%c4, %c0_41] : memref<8x32xf32, #tpu.memory_space<vmem>>, vector<1x32xf32>
    %c5 = arith.constant 5 : index
    %c0_42 = arith.constant 0 : index
    %92 = vector.load %arg6[%c5, %c0_42] : memref<8x32xf32, #tpu.memory_space<vmem>>, vector<1x32xf32>
    %cst_43 = arith.constant dense<0.000000e+00> : vector<256xf32>
    %93 = vector.multi_reduction <add>, %90, %cst_43 [1] : vector<256x32xf32> to vector<256xf32>
    %94 = vector.shape_cast %93 : vector<256xf32> to vector<256x1xf32>
    %cst_44 = arith.constant 3.200000e+01 : f32
    %95 = vector.broadcast %cst_44 : f32 to vector<256x1xf32>
    %96 = arith.divf %94, %95 : vector<256x1xf32>
    %97 = vector.broadcast %96 : vector<256x1xf32> to vector<256x32xf32>
    %98 = arith.subf %90, %97 : vector<256x32xf32>
    %99 = arith.mulf %98, %98 : vector<256x32xf32>
    %cst_45 = arith.constant dense<0.000000e+00> : vector<256xf32>
    %100 = vector.multi_reduction <add>, %99, %cst_45 [1] : vector<256x32xf32> to vector<256xf32>
    %101 = vector.shape_cast %100 : vector<256xf32> to vector<256x1xf32>
    %cst_46 = arith.constant 3.200000e+01 : f32
    %102 = vector.broadcast %cst_46 : f32 to vector<256x1xf32>
    %103 = arith.divf %101, %102 : vector<256x1xf32>
    %cst_47 = arith.constant 9.99999974E-6 : f32
    %104 = vector.broadcast %cst_47 : f32 to vector<256x1xf32>
    %105 = arith.addf %103, %104 : vector<256x1xf32>
    %106 = math.rsqrt %105 : vector<256x1xf32>
    %107 = vector.broadcast %106 : vector<256x1xf32> to vector<256x32xf32>
    %108 = arith.mulf %98, %107 : vector<256x32xf32>
    %109 = vector.broadcast %91 : vector<1x32xf32> to vector<256x32xf32>
    %110 = arith.mulf %108, %109 : vector<256x32xf32>
    %111 = vector.broadcast %92 : vector<1x32xf32> to vector<256x32xf32>
    %112 = arith.addf %110, %111 : vector<256x32xf32>
    %c0_48 = arith.constant 0 : index
    %c0_49 = arith.constant 0 : index
    %c0_50 = arith.constant 0 : index
    %113 = vector.load %arg7[%c0_48, %c0_49, %c0_50] : memref<1x256x32xf32, #tpu.memory_space<vmem>>, vector<1x256x32xf32>
    %114 = vector.shape_cast %113 : vector<1x256x32xf32> to vector<256x32xf32>
    %115 = vector.shape_cast %112 : vector<256x32xf32> to vector<1x256x32xf32>
    tpu.vector_store %arg7[%c0_48, %c0_49, %c0_50], %115 {strides = array<i32>} : memref<1x256x32xf32, #tpu.memory_space<vmem>>, vector<1x256x32xf32>,
    %116 = arith.addf %61, %89 : vector<256x32xf32>
    %c6 = arith.constant 6 : index
    %c0_51 = arith.constant 0 : index
    %117 = vector.load %arg6[%c6, %c0_51] : memref<8x32xf32, #tpu.memory_space<vmem>>, vector<1x32xf32>
    %c7 = arith.constant 7 : index
    %c0_52 = arith.constant 0 : index
    %118 = vector.load %arg6[%c7, %c0_52] : memref<8x32xf32, #tpu.memory_space<vmem>>, vector<1x32xf32>
    %cst_53 = arith.constant dense<0.000000e+00> : vector<256xf32>
    %119 = vector.multi_reduction <add>, %116, %cst_53 [1] : vector<256x32xf32> to vector<256xf32>
    %120 = vector.shape_cast %119 : vector<256xf32> to vector<256x1xf32>
    %cst_54 = arith.constant 3.200000e+01 : f32
    %121 = vector.broadcast %cst_54 : f32 to vector<256x1xf32>
    %122 = arith.divf %120, %121 : vector<256x1xf32>
    %123 = vector.broadcast %122 : vector<256x1xf32> to vector<256x32xf32>
    %124 = arith.subf %116, %123 : vector<256x32xf32>
    %125 = arith.mulf %124, %124 : vector<256x32xf32>
    %cst_55 = arith.constant dense<0.000000e+00> : vector<256xf32>
    %126 = vector.multi_reduction <add>, %125, %cst_55 [1] : vector<256x32xf32> to vector<256xf32>
    %127 = vector.shape_cast %126 : vector<256xf32> to vector<256x1xf32>
    %cst_56 = arith.constant 3.200000e+01 : f32
    %128 = vector.broadcast %cst_56 : f32 to vector<256x1xf32>
    %129 = arith.divf %127, %128 : vector<256x1xf32>
    %cst_57 = arith.constant 9.99999974E-6 : f32
    %130 = vector.broadcast %cst_57 : f32 to vector<256x1xf32>
    %131 = arith.addf %129, %130 : vector<256x1xf32>
    %132 = math.rsqrt %131 : vector<256x1xf32>
    %133 = vector.broadcast %132 : vector<256x1xf32> to vector<256x32xf32>
    %134 = arith.mulf %124, %133 : vector<256x32xf32>
    %135 = vector.broadcast %117 : vector<1x32xf32> to vector<256x32xf32>
    %136 = arith.mulf %134, %135 : vector<256x32xf32>
    %137 = vector.broadcast %118 : vector<1x32xf32> to vector<256x32xf32>
    %138 = arith.addf %136, %137 : vector<256x32xf32>
    %c0_58 = arith.constant 0 : index
    %c0_59 = arith.constant 0 : index
    %c0_60 = arith.constant 0 : index
    %139 = vector.load %arg8[%c0_58, %c0_59, %c0_60] : memref<1x256x32xf32, #tpu.memory_space<vmem>>, vector<1x256x32xf32>
    %140 = vector.shape_cast %139 : vector<1x256x32xf32> to vector<256x32xf32>
    %141 = vector.shape_cast %138 : vector<256x32xf32> to vector<1x256x32xf32>
    tpu.vector_store %arg8[%c0_58, %c0_59, %c0_60], %141 {strides = array<i32>} : memref<1x256x32xf32, #tpu.memory_space<vmem>>, vector<1x256x32xf32>,
    return
  }
  func.func @transform_0(%arg0: i32) -> (i32, i32, i32) {
    %c0_i32 = arith.constant 0 : i32
    %c0_i32_0 = arith.constant 0 : i32
    %c0_i32_1 = arith.constant 0 : i32
    return %arg0, %c0_i32, %c0_i32_0 : i32, i32, i32
  }
  func.func @transform_1(%arg0: i32) -> (i32, i32, i32) {
    %c0_i32 = arith.constant 0 : i32
    %c0_i32_0 = arith.constant 0 : i32
    %c0_i32_1 = arith.constant 0 : i32
    return %arg0, %c0_i32, %c0_i32_0 : i32, i32, i32
  }
  func.func @transform_2(%arg0: i32) -> (i32, i32) {
    %c0_i32 = arith.constant 0 : i32
    %c0_i32_0 = arith.constant 0 : i32
    %c0_i32_1 = arith.constant 0 : i32
    return %c0_i32, %c0_i32_0 : i32, i32
  }
  func.func @transform_3(%arg0: i32) -> (i32, i32) {
    %c0_i32 = arith.constant 0 : i32
    %c0_i32_0 = arith.constant 0 : i32
    %c0_i32_1 = arith.constant 0 : i32
    return %c0_i32, %c0_i32_0 : i32, i32
  }
  func.func @transform_4(%arg0: i32) -> (i32, i32) {
    %c0_i32 = arith.constant 0 : i32
    %c0_i32_0 = arith.constant 0 : i32
    %c0_i32_1 = arith.constant 0 : i32
    return %c0_i32, %c0_i32_0 : i32, i32
  }
  func.func @transform_5(%arg0: i32) -> (i32, i32) {
    %c0_i32 = arith.constant 0 : i32
    %c0_i32_0 = arith.constant 0 : i32
    %c0_i32_1 = arith.constant 0 : i32
    return %c0_i32, %c0_i32_0 : i32, i32
  }
  func.func @transform_6(%arg0: i32) -> (i32, i32, i32) {
    %c0_i32 = arith.constant 0 : i32
    %c0_i32_0 = arith.constant 0 : i32
    %c0_i32_1 = arith.constant 0 : i32
    return %arg0, %c0_i32, %c0_i32_0 : i32, i32, i32
  }
  func.func @transform_7(%arg0: i32) -> (i32, i32, i32) {
    %c0_i32 = arith.constant 0 : i32
    %c0_i32_0 = arith.constant 0 : i32
    %c0_i32_1 = arith.constant 0 : i32
    return %arg0, %c0_i32, %c0_i32_0 : i32, i32, i32
  }
}

</mosaic_0001>

<llo_original>
// kernel: tpu_custom_call.1
$region0: #{tpu_custom_call.1}
  #allocation0 [shape = 'u32[]', space=smem, size = 0x4, offset = 0x4, fixed_abs, tag = 'smem constant byte address 0x4 - core index']
  #allocation1 [shape = 'u32[144,128]{1,0:T(1,128)}', space=vmem, size = 0x12000, scoped, tag = 'internal scratch']
  %s0 = inlined_call_operand.hbm [shape: f32[2,256,128], index: 0, kind: input, shape index: {}]
  %s1 = inlined_call_operand.hbm [shape: f32[2,256,128], index: 1, kind: input, shape index: {}]
  %s2 = inlined_call_operand.vmem [shape: f32[128,32], index: 2, kind: input, shape index: {}]
  %s3 = inlined_call_operand.vmem [shape: f32[128,32], index: 3, kind: input, shape index: {}]
  %s4 = inlined_call_operand.vmem [shape: f32[2,32], index: 4, kind: input, shape index: {}]
  %s5 = inlined_call_operand.vmem [shape: f32[8,32], index: 5, kind: input, shape index: {}]
  %s6 = inlined_call_operand.vmem [shape: f32[2,256,32], index: 6, kind: output, shape index: {0}]
  %s7 = inlined_call_operand.vmem [shape: f32[2,256,32], index: 7, kind: output, shape index: {1}]
  %8 = xla_tuple %s6, %s7
  %s9 = sld [smem:[#allocation0]]
  $region73: #{tpu_custom_call.1} parent=0
    _
  %s11 = ssub.s32 1, %s9
  %s12 = scalar_select 0, %s11, %s9
  $region1: #{tpu_custom_call.1} parent=0
    #allocation2 [shape = 'u8[262144]{0}', space=vmem, size = 0x40000, scoped, tag = 'input window, operand 0']
    #allocation3 [shape = 's32[2]{0}', space=sflag, size = 0x8, scoped, tag = 'scoped memory for tpu_custom_call.1']
    #allocation4 [shape = 'u8[262144]{0}', space=vmem, size = 0x40000, scoped, tag = 'input window, operand 1']
    #allocation5 [shape = 's32[2]{0}', space=sflag, size = 0x8, scoped, tag = 'scoped memory for tpu_custom_call.1']
    %13 = vsyncpa [#allocation3], 0
    %s14 = scalar_lea.sflag [#allocation3], 1
    %15 = vsyncpa %s14, 0
    %16 = vsyncpa [#allocation5], 0
    %s17 = scalar_lea.sflag [#allocation5], 1
    %18 = vsyncpa %s17, 0
    loop: start=0, step=1, limit=4
    $region2: #{tpu_custom_call.1} parent=1 // loop_pre_header
      _
    $region3: #{tpu_custom_call.1} parent=1 // loop_header
      %s20 = sphi 0, %s24
      %p21 = scmp.ge.s32.totalorder %s20, 4
      %s30 = sphi 0, %s32
      %s33 = sphi 0, %s30
      %s34 = sphi 0, %s33
      %s50 = sphi 0, %s34
      %s56 = sphi 0, %s58
      %s59 = sphi 0, %s56
      %s60 = sphi 0, %s59
      %s76 = sphi 0, %s60
      %s80 = sphi 0, %s80
      %s82 = sphi 0, %s80
      %s83 = sphi 0, %s82
      %s97 = sphi 0, %s83
      %s101 = sphi 0, %s101
      %s103 = sphi 0, %s101
      %s104 = sphi 0, %s103
      %s118 = sphi 0, %s104
      %s122 = sphi 0, %s122
      %s124 = sphi 0, %s122
      %s125 = sphi 0, %s124
      %s139 = sphi 0, %s125
      %s143 = sphi 0, %s143
      %s145 = sphi 0, %s143
      %s146 = sphi 0, %s145
      %s160 = sphi 0, %s146
      %s166 = sphi 0, %s168
      %s169 = sphi 0, %s166
      %s170 = sphi 0, %s169
      %s186 = sphi 0, %s170
      %s192 = sphi 0, %s194
      %s195 = sphi 0, %s192
      %s196 = sphi 0, %s195
      %s212 = sphi 0, %s196
    $region4: #{tpu_custom_call.1} parent=1 // loop_header_branch
      %23 = sbr.rel (%p21) target = $region8
    $region5: #{tpu_custom_call.1} parent=1 // loop_body
      %s25 = ssub.s32 %s20, 1
      %s26 = ssub.s32 %s20, 2
      %s27 = sadd.s32 %s20, 1
      %s28 = ssub.s32 %s20, %s27
      %p29 = scmp.eq.s32.totalorder %s28, 0
      %s31 = sadd.s32 %s30, 1
      %s32 = scalar_select %p29, %s30, %s31
      %p35 = pneg %p29
      %p36 = scmp.eq.s32.totalorder %s20, 1
      %p37 = por %p35, %p36
      %p38 = scmp.ne.s32.totalorder %s30, %s33
      %p39 = scmp.eq.s32.totalorder %s20, 0
      %p40 = por %p38, %p39
      %p41 = scmp.ne.s32.totalorder %s30, %s33
      %p42 = scmp.eq.s32.totalorder %s25, 1
      %p43 = por %p41, %p42
      %p44 = scmp.ne.s32.totalorder %s33, %s34
      %p45 = scmp.eq.s32.totalorder %s25, 0
      %p46 = por %p44, %p45
      %p47 = scmp.ne.s32.totalorder %s33, %s34
      %p48 = scmp.eq.s32.totalorder %s26, 1
      %p49 = por %p47, %p48
      %p51 = scmp.ne.s32.totalorder %s34, %s50
      %p52 = scmp.eq.s32.totalorder %s26, 0
      %p53 = por %p51, %p52
      %s54 = ssub.s32 %s20, %s27
      %p55 = scmp.eq.s32.totalorder %s54, 0
      %s57 = sadd.s32 %s56, 1
      %s58 = scalar_select %p55, %s56, %s57
      %p61 = pneg %p55
      %p62 = scmp.eq.s32.totalorder %s20, 1
      %p63 = por %p61, %p62
      %p64 = scmp.ne.s32.totalorder %s56, %s59
      %p65 = scmp.eq.s32.totalorder %s20, 0
      %p66 = por %p64, %p65
      %p67 = scmp.ne.s32.totalorder %s56, %s59
      %p68 = scmp.eq.s32.totalorder %s25, 1
      %p69 = por %p67, %p68
      %p70 = scmp.ne.s32.totalorder %s59, %s60
      %p71 = scmp.eq.s32.totalorder %s25, 0
      %p72 = por %p70, %p71
      %p73 = scmp.ne.s32.totalorder %s59, %s60
      %p74 = scmp.eq.s32.totalorder %s26, 1
      %p75 = por %p73, %p74
      %p77 = scmp.ne.s32.totalorder %s60, %s76
      %p78 = scmp.eq.s32.totalorder %s26, 0
      %p79 = por %p77, %p78
      %s81 = sadd.s32 %s80, 1
      %p84 = scmp.eq.s32.totalorder %s20, 1
      %p85 = scmp.ne.s32.totalorder %s80, %s82
      %p86 = scmp.eq.s32.totalorder %s20, 0
      %p87 = por %p85, %p86
      %p88 = scmp.ne.s32.totalorder %s80, %s82
      %p89 = scmp.eq.s32.totalorder %s25, 1
      %p90 = por %p88, %p89
      %p91 = scmp.ne.s32.totalorder %s82, %s83
      %p92 = scmp.eq.s32.totalorder %s25, 0
      %p93 = por %p91, %p92
      %p94 = scmp.ne.s32.totalorder %s82, %s83
      %p95 = scmp.eq.s32.totalorder %s26, 1
      %p96 = por %p94, %p95
      %p98 = scmp.ne.s32.totalorder %s83, %s97
      %p99 = scmp.eq.s32.totalorder %s26, 0
      %p100 = por %p98, %p99
      %s102 = sadd.s32 %s101, 1
      %p105 = scmp.eq.s32.totalorder %s20, 1
      %p106 = scmp.ne.s32.totalorder %s101, %s103
      %p107 = scmp.eq.s32.totalorder %s20, 0
      %p108 = por %p106, %p107
      %p109 = scmp.ne.s32.totalorder %s101, %s103
      %p110 = scmp.eq.s32.totalorder %s25, 1
      %p111 = por %p109, %p110
      %p112 = scmp.ne.s32.totalorder %s103, %s104
      %p113 = scmp.eq.s32.totalorder %s25, 0
      %p114 = por %p112, %p113
      %p115 = scmp.ne.s32.totalorder %s103, %s104
      %p116 = scmp.eq.s32.totalorder %s26, 1
      %p117 = por %p115, %p116
      %p119 = scmp.ne.s32.totalorder %s104, %s118
      %p120 = scmp.eq.s32.totalorder %s26, 0
      %p121 = por %p119, %p120
      %s123 = sadd.s32 %s122, 1
      %p126 = scmp.eq.s32.totalorder %s20, 1
      %p127 = scmp.ne.s32.totalorder %s122, %s124
      %p128 = scmp.eq.s32.totalorder %s20, 0
      %p129 = por %p127, %p128
      %p130 = scmp.ne.s32.totalorder %s122, %s124
      %p131 = scmp.eq.s32.totalorder %s25, 1
      %p132 = por %p130, %p131
      %p133 = scmp.ne.s32.totalorder %s124, %s125
      %p134 = scmp.eq.s32.totalorder %s25, 0
      %p135 = por %p133, %p134
      %p136 = scmp.ne.s32.totalorder %s124, %s125
      %p137 = scmp.eq.s32.totalorder %s26, 1
      %p138 = por %p136, %p137
      %p140 = scmp.ne.s32.totalorder %s125, %s139
      %p141 = scmp.eq.s32.totalorder %s26, 0
      %p142 = por %p140, %p141
      %s144 = sadd.s32 %s143, 1
      %p147 = scmp.eq.s32.totalorder %s20, 1
      %p148 = scmp.ne.s32.totalorder %s143, %s145
      %p149 = scmp.eq.s32.totalorder %s20, 0
      %p150 = por %p148, %p149
      %p151 = scmp.ne.s32.totalorder %s143, %s145
      %p152 = scmp.eq.s32.totalorder %s25, 1
      %p153 = por %p151, %p152
      %p154 = scmp.ne.s32.totalorder %s145, %s146
      %p155 = scmp.eq.s32.totalorder %s25, 0
      %p156 = por %p154, %p155
      %p157 = scmp.ne.s32.totalorder %s145, %s146
      %p158 = scmp.eq.s32.totalorder %s26, 1
      %p159 = por %p157, %p158
      %p161 = scmp.ne.s32.totalorder %s146, %s160
      %p162 = scmp.eq.s32.totalorder %s26, 0
      %p163 = por %p161, %p162
      %s164 = ssub.s32 %s20, %s27
      %p165 = scmp.eq.s32.totalorder %s164, 0
      %s167 = sadd.s32 %s166, 1
      %s168 = scalar_select %p165, %s166, %s167
      %p171 = pneg %p165
      %p172 = scmp.eq.s32.totalorder %s20, 1
      %p173 = por %p171, %p172
      %p174 = scmp.ne.s32.totalorder %s166, %s169
      %p175 = scmp.eq.s32.totalorder %s20, 0
      %p176 = por %p174, %p175
      %p177 = scmp.ne.s32.totalorder %s166, %s169
      %p178 = scmp.eq.s32.totalorder %s25, 1
      %p179 = por %p177, %p178
      %p180 = scmp.ne.s32.totalorder %s169, %s170
      %p181 = scmp.eq.s32.totalorder %s25, 0
      %p182 = por %p180, %p181
      %p183 = scmp.ne.s32.totalorder %s169, %s170
      %p184 = scmp.eq.s32.totalorder %s26, 1
      %p185 = por %p183, %p184
      %p187 = scmp.ne.s32.totalorder %s170, %s186
      %p188 = scmp.eq.s32.totalorder %s26, 0
      %p189 = por %p187, %p188
      %s190 = ssub.s32 %s20, %s27
      %p191 = scmp.eq.s32.totalorder %s190, 0
      %s193 = sadd.s32 %s192, 1
      %s194 = scalar_select %p191, %s192, %s193
      %p197 = pneg %p191
      %p198 = scmp.eq.s32.totalorder %s20, 1
      %p199 = por %p197, %p198
      %p200 = scmp.ne.s32.totalorder %s192, %s195
      %p201 = scmp.eq.s32.totalorder %s20, 0
      %p202 = por %p200, %p201
      %p203 = scmp.ne.s32.totalorder %s192, %s195
      %p204 = scmp.eq.s32.totalorder %s25, 1
      %p205 = por %p203, %p204
      %p206 = scmp.ne.s32.totalorder %s195, %s196
      %p207 = scmp.eq.s32.totalorder %s25, 0
      %p208 = por %p206, %p207
      %p209 = scmp.ne.s32.totalorder %s195, %s196
      %p210 = scmp.eq.s32.totalorder %s26, 1
      %p211 = por %p209, %p210
      %p213 = scmp.ne.s32.totalorder %s196, %s212
      %p214 = scmp.eq.s32.totalorder %s26, 0
      %p215 = por %p213, %p214
      %p216 = scmp.le.s32.totalorder 1, %s20
      %p217 = scmp.lt.s32.totalorder %s20, 3
      %p218 = pnand %p216, %p217
      %p219 = pneg %p218
      // Predicated region
      $region9: #{tpu_custom_call.1} parent=5 // pred_check
        _
      $region10: #{tpu_custom_call.1} parent=5 // pred_check_branch
        %221 = sbr.rel (%p218) target = $region12
      $region11: #{tpu_custom_call.1} parent=5 // pred_region
        %s222 = ssub.s32 %s20, 1
        // Predicated region
        $region13: #{tpu_custom_call.1} parent=11 // pred_check
          %p223 = pneg %p93
        $region14: #{tpu_custom_call.1} parent=11 // pred_check_branch
          %225 = sbr.rel (%p223) target = $region16
        $region15: #{tpu_custom_call.1} parent=11 // pred_region
          _
        $region16: #{tpu_custom_call.1} parent=11 // pred_fallthru
          _
        // Predicated region
        $region17: #{tpu_custom_call.1} parent=11 // pred_check
          %p226 = pneg %p114
        $region18: #{tpu_custom_call.1} parent=11 // pred_check_branch
          %228 = sbr.rel (%p226) target = $region20
        $region19: #{tpu_custom_call.1} parent=11 // pred_region
          _
        $region20: #{tpu_custom_call.1} parent=11 // pred_fallthru
          _
        // Predicated region
        $region21: #{tpu_custom_call.1} parent=11 // pred_check
          %p229 = pneg %p135
        $region22: #{tpu_custom_call.1} parent=11 // pred_check_branch
          %231 = sbr.rel (%p229) target = $region24
        $region23: #{tpu_custom_call.1} parent=11 // pred_region
          _
        $region24: #{tpu_custom_call.1} parent=11 // pred_fallthru
          _
        // Predicated region
        $region25: #{tpu_custom_call.1} parent=11 // pred_check
          %p232 = pneg %p156
        $region26: #{tpu_custom_call.1} parent=11 // pred_check_branch
          %234 = sbr.rel (%p232) target = $region28
        $region27: #{tpu_custom_call.1} parent=11 // pred_region
          _
        $region28: #{tpu_custom_call.1} parent=11 // pred_fallthru
          _
      $region12: #{tpu_custom_call.1} parent=5 // pred_fallthru
        _
      %p235 = scmp.lt.s32.totalorder %s20, 2
      // Predicated region
      $region29: #{tpu_custom_call.1} parent=5 // pred_check
        %p236 = pneg %p235
      $region30: #{tpu_custom_call.1} parent=5 // pred_check_branch
        %238 = sbr.rel (%p236) target = $region32
      $region31: #{tpu_custom_call.1} parent=5 // pred_region
        // Predicated region
        $region33: #{tpu_custom_call.1} parent=31 // pred_check
          %p239 = pneg %p40
        $region34: #{tpu_custom_call.1} parent=31 // pred_check_branch
          %241 = sbr.rel (%p239) target = $region36
        $region35: #{tpu_custom_call.1} parent=31 // pred_region
          %s242 = sand.u32 %s30, 1
          %s243 = scalar_lea.sflag [#allocation3], %s242
          %s244 = sand.u32 %s30, 1
          %s245 = smul.addr %s244, 256
          %s246 = scalar_lea.vmem [#allocation2], %s245
          %s248 = ssub.s32 4096, 4096
          %249 = vsyncadd %s243, %s248
          %s250 = smul.addr %s20, 32
          %s251 = smul.addr %s250, 128
          %s252 = scalar_lea.hbm %s0, %s251
          %s253 = sshll.u32 %s246, 4
          %s254 = int_to_ptr.vmem [resolvable:$true] %s253
          %259 = dma.hbm_to_vmem [thread:$0]  %s252, 4096, %s254, %s243, 128, 128, 8
        $region36: #{tpu_custom_call.1} parent=31 // pred_fallthru
          _
        // Predicated region
        $region37: #{tpu_custom_call.1} parent=31 // pred_check
          %p260 = pneg %p66
        $region38: #{tpu_custom_call.1} parent=31 // pred_check_branch
          %262 = sbr.rel (%p260) target = $region40
        $region39: #{tpu_custom_call.1} parent=31 // pred_region
          %s263 = sand.u32 %s56, 1
          %s264 = scalar_lea.sflag [#allocation5], %s263
          %s265 = sand.u32 %s56, 1
          %s266 = smul.addr %s265, 256
          %s267 = scalar_lea.vmem [#allocation4], %s266
          %s269 = ssub.s32 4096, 4096
          %270 = vsyncadd %s264, %s269
          %s271 = smul.addr %s20, 32
          %s272 = smul.addr %s271, 128
          %s273 = scalar_lea.hbm %s1, %s272
          %s274 = sshll.u32 %s267, 4
          %s275 = int_to_ptr.vmem [resolvable:$true] %s274
          %280 = dma.hbm_to_vmem [thread:$0]  %s273, 4096, %s275, %s264, 128, 128, 8
        $region40: #{tpu_custom_call.1} parent=31 // pred_fallthru
          _
      $region32: #{tpu_custom_call.1} parent=5 // pred_fallthru
        _
      %p281 = scmp.le.s32.totalorder 1, %s20
      %p282 = scmp.lt.s32.totalorder %s20, 3
      %p283 = pnand %p281, %p282
      %p284 = pneg %p283
      // Predicated region
      $region41: #{tpu_custom_call.1} parent=5 // pred_check
        _
      $region42: #{tpu_custom_call.1} parent=5 // pred_check_branch
        %286 = sbr.rel (%p283) target = $region44
      $region43: #{tpu_custom_call.1} parent=5 // pred_region
        %s287 = ssub.s32 %s20, 1
        %s288 = sand.u32 %s33, 1
        %s289 = scalar_lea.sflag [#allocation3], %s288
        %s290 = sand.u32 %s33, 1
        %s291 = smul.addr %s290, 256
        %s292 = scalar_lea.vmem [#allocation2], %s291
        // Predicated region
        $region45: #{tpu_custom_call.1} parent=43 // pred_check
          %p293 = pneg %p46
        $region46: #{tpu_custom_call.1} parent=43 // pred_check_branch
          %295 = sbr.rel (%p293) target = $region48
        $region47: #{tpu_custom_call.1} parent=43 // pred_region
          %296 = dma.done %s289, 4096
        $region48: #{tpu_custom_call.1} parent=43 // pred_fallthru
          _
        %s297 = sand.u32 %s59, 1
        %s298 = scalar_lea.sflag [#allocation5], %s297
        %s299 = sand.u32 %s59, 1
        %s300 = smul.addr %s299, 256
        %s301 = scalar_lea.vmem [#allocation4], %s300
        // Predicated region
        $region49: #{tpu_custom_call.1} parent=43 // pred_check
          %p302 = pneg %p72
        $region50: #{tpu_custom_call.1} parent=43 // pred_check_branch
          %304 = sbr.rel (%p302) target = $region52
        $region51: #{tpu_custom_call.1} parent=43 // pred_region
          %305 = dma.done %s298, 4096
        $region52: #{tpu_custom_call.1} parent=43 // pred_fallthru
          _
        %s306 = sand.u32 %s33, 1
        %s307 = scalar_lea.sflag [#allocation3], %s306
        %s308 = sand.u32 %s33, 1
        %s309 = smul.addr %s308, 256
        %s310 = scalar_lea.vmem [#allocation2], %s309
        %p311 = pneg %p46
        %p312 = pneg %p43
        %s313 = sand.u32 %s59, 1
        %s314 = scalar_lea.sflag [#allocation5], %s313
        %s315 = sand.u32 %s59, 1
        %s316 = smul.addr %s315, 256
        %s317 = scalar_lea.vmem [#allocation4], %s316
        %p318 = pneg %p72
        %p319 = pneg %p69
        %p320 = pneg %p93
        %p321 = pneg %p90
        %p322 = pneg %p114
        %p323 = pneg %p111
        %p324 = pneg %p135
        %p325 = pneg %p132
        %p326 = pneg %p156
        %p327 = pneg %p153
        %p328 = pneg %p182
        %p329 = pneg %p179
        %p330 = scmp.lt.s32.totalorder %s25, 1
        %s331 = scalar_select %p330, %s25, 1
        %s332 = smul.addr %s331, 32
        %s333 = smul.addr %s332, 8
        %s334 = scalar_lea.vmem %s6, %s333
        %p335 = pneg %p208
        %p336 = pneg %p205
        %p337 = scmp.lt.s32.totalorder %s25, 1
        %s338 = scalar_select %p337, %s25, 1
        %s339 = smul.addr %s338, 32
        %s340 = smul.addr %s339, 8
        %s341 = scalar_lea.vmem %s7, %s340
        %p342 = scmp.lt.s32.totalorder %s25, 1
        %s343 = scalar_select %p342, %s25, 1
        %s344 = smul.addr %s343, 32
        %s345 = smul.addr %s344, 8
        %s346 = scalar_lea.vmem %s6, %s345
        %p347 = scmp.lt.s32.totalorder %s25, 1
        %s348 = scalar_select %p347, %s25, 1
        %s349 = smul.addr %s348, 32
        %s350 = smul.addr %s349, 8
        %s351 = scalar_lea.vmem %s7, %s350
        %v352 = vld [vmem:[%s292] sm:$0xff]
        %v353 = vld [vmem:[%s292 + $0x8] sm:$0xff]
        %v354 = vld [vmem:[%s292 + $0x10] sm:$0xff]
        %v355 = vld [vmem:[%s292 + $0x18] sm:$0xff]
        %v356 = vld [vmem:[%s292 + $0x20] sm:$0xff]
        %v357 = vld [vmem:[%s292 + $0x28] sm:$0xff]
        %v358 = vld [vmem:[%s292 + $0x30] sm:$0xff]
        %v359 = vld [vmem:[%s292 + $0x38] sm:$0xff]
        %v360 = vld [vmem:[%s292 + $0x40] sm:$0xff]
        %v361 = vld [vmem:[%s292 + $0x48] sm:$0xff]
        %v362 = vld [vmem:[%s292 + $0x50] sm:$0xff]
        %v363 = vld [vmem:[%s292 + $0x58] sm:$0xff]
        %v364 = vld [vmem:[%s292 + $0x60] sm:$0xff]
        %v365 = vld [vmem:[%s292 + $0x68] sm:$0xff]
        %v366 = vld [vmem:[%s292 + $0x70] sm:$0xff]
        %v367 = vld [vmem:[%s292 + $0x78] sm:$0xff]
        %v368 = vld [vmem:[%s292 + $0x80] sm:$0xff]
        %v369 = vld [vmem:[%s292 + $0x88] sm:$0xff]
        %v370 = vld [vmem:[%s292 + $0x90] sm:$0xff]
        %v371 = vld [vmem:[%s292 + $0x98] sm:$0xff]
        %v372 = vld [vmem:[%s292 + $0xa0] sm:$0xff]
        %v373 = vld [vmem:[%s292 + $0xa8] sm:$0xff]
        %v374 = vld [vmem:[%s292 + $0xb0] sm:$0xff]
        %v375 = vld [vmem:[%s292 + $0xb8] sm:$0xff]
        %v376 = vld [vmem:[%s292 + $0xc0] sm:$0xff]
        %v377 = vld [vmem:[%s292 + $0xc8] sm:$0xff]
        %v378 = vld [vmem:[%s292 + $0xd0] sm:$0xff]
        %v379 = vld [vmem:[%s292 + $0xd8] sm:$0xff]
        %v380 = vld [vmem:[%s292 + $0xe0] sm:$0xff]
        %v381 = vld [vmem:[%s292 + $0xe8] sm:$0xff]
        %v382 = vld [vmem:[%s292 + $0xf0] sm:$0xff]
        %v383 = vld [vmem:[%s292 + $0xf8] sm:$0xff]
        %v384 = vld [vmem:[%s2] sm:$0xff]
        %v385 = vld [vmem:[%s2 + $0x8] sm:$0xff]
        %v386 = vld [vmem:[%s2 + $0x10] sm:$0xff]
        %v387 = vld [vmem:[%s2 + $0x18] sm:$0xff]
        %v388 = vld [vmem:[%s2 + $0x20] sm:$0xff]
        %v389 = vld [vmem:[%s2 + $0x28] sm:$0xff]
        %v390 = vld [vmem:[%s2 + $0x30] sm:$0xff]
        %v391 = vld [vmem:[%s2 + $0x38] sm:$0xff]
        %v392 = vld [vmem:[%s2 + $0x40] sm:$0xff]
        %v393 = vld [vmem:[%s2 + $0x48] sm:$0xff]
        %v394 = vld [vmem:[%s2 + $0x50] sm:$0xff]
        %v395 = vld [vmem:[%s2 + $0x58] sm:$0xff]
        %v396 = vld [vmem:[%s2 + $0x60] sm:$0xff]
        %v397 = vld [vmem:[%s2 + $0x68] sm:$0xff]
        %v398 = vld [vmem:[%s2 + $0x70] sm:$0xff]
        %v399 = vld [vmem:[%s2 + $0x78] sm:$0xff]
        %v400 = vld [vmem:[%s4] sm:$0x1]
        %v401 = vlaneseq
        %v402 = vshrl.u32 %v401, 7
        %v403 = vsub.s32 0, %v402
        %v404 = vrot.slane %v400, %v403
        %405 = vmatprep.subr.mxu0 0.0
        %406 = vmatpush1.msra.mxu0 %v399
        %407 = vmatprep.subr.mxu0 0.0
        %408 = vmatpush1.msra.mxu0 %v398
        %409 = vmatprep.subr.mxu0 0.0
        %410 = vmatpush1.msra.mxu0 %v397
        %411 = vmatprep.subr.mxu0 0.0
        %412 = vmatpush1.msra.mxu0 %v396
        %413 = vmatprep.subr.mxu0 0.0
        %414 = vmatpush1.msra.mxu0 %v395
        %415 = vmatprep.subr.mxu0 0.0
        %416 = vmatpush1.msra.mxu0 %v394
        %417 = vmatprep.subr.mxu0 0.0
        %418 = vmatpush1.msra.mxu0 %v393
        %419 = vmatprep.subr.mxu0 0.0
        %420 = vmatpush1.msra.mxu0 %v392
        %421 = vmatprep.subr.mxu0 0.0
        %422 = vmatpush1.msra.mxu0 %v391
        %423 = vmatprep.subr.mxu0 0.0
        %424 = vmatpush1.msra.mxu0 %v390
        %425 = vmatprep.subr.mxu0 0.0
        %426 = vmatpush1.msra.mxu0 %v389
        %427 = vmatprep.subr.mxu0 0.0
        %428 = vmatpush1.msra.mxu0 %v388
        %429 = vmatprep.subr.mxu0 0.0
        %430 = vmatpush1.msra.mxu0 %v387
        %431 = vmatprep.subr.mxu0 0.0
        %432 = vmatpush1.msra.mxu0 %v386
        %433 = vmatprep.subr.mxu0 0.0
        %434 = vmatpush1.msra.mxu0 %v385
        %435 = vmatprep.subr.mxu0 0.0
        %436 = vmatpush1.msra.mxu0 %v384
        %437 = vmatprep.subr.mxu0 0.0
        %438 = vmatpush2.msra.mxu0 0.0
        %439 = vmatprep.subr.mxu0 0.0
        %440 = vmatpush2.msra.mxu0 0.0
        %441 = vmatprep.subr.mxu0 0.0
        %442 = vmatpush2.msra.mxu0 0.0
        %443 = vmatprep.subr.mxu0 0.0
        %444 = vmatpush2.msra.mxu0 0.0
        %445 = vmatprep.subr.mxu0 0.0
        %446 = vmatpush2.msra.mxu0 0.0
        %447 = vmatprep.subr.mxu0 0.0
        %448 = vmatpush2.msra.mxu0 0.0
        %449 = vmatprep.subr.mxu0 0.0
        %450 = vmatpush2.msra.mxu0 0.0
        %451 = vmatprep.subr.mxu0 0.0
        %452 = vmatpush2.msra.mxu0 0.0
        %453 = vmatprep.subr.mxu0 0.0
        %454 = vmatpush2.msra.mxu0 0.0
        %455 = vmatprep.subr.mxu0 0.0
        %456 = vmatpush2.msra.mxu0 0.0
        %457 = vmatprep.subr.mxu0 0.0
        %458 = vmatpush2.msra.mxu0 0.0
        %459 = vmatprep.subr.mxu0 0.0
        %460 = vmatpush2.msra.mxu0 0.0
        %461 = vmatprep.subr.mxu0 0.0
        %462 = vmatpush2.msra.mxu0 0.0
        %463 = vmatprep.subr.mxu0 0.0
        %464 = vmatpush2.msra.mxu0 0.0
        %465 = vmatprep.subr.mxu0 0.0
        %466 = vmatpush2.msra.mxu0 0.0
        %467 = vmatprep.subr.mxu0 0.0
        %468 = vmatpush2.msra.mxu0 0.0
        %469 = vmatprep.mubr.f32.mxu0 0.0
        %470 = vmatmul.mubr.f32.gmra.mxu0 %v352
        %v471 = vpop.f32.mrf.mxu0
        %v472 = vadd.f32 %v404, %v471
        %v473 = vpop.f32.mrf.mxu0
        %474 = vmatprep.mubr.f32.mxu0 0.0
        %475 = vmatmul.mubr.f32.gmra.mxu0 %v353
        %v476 = vpop.f32.mrf.mxu0
        %v477 = vadd.f32 %v404, %v476
        %v478 = vpop.f32.mrf.mxu0
        %479 = vmatprep.mubr.f32.mxu0 0.0
        %480 = vmatmul.mubr.f32.gmra.mxu0 %v354
        %v481 = vpop.f32.mrf.mxu0
        %v482 = vadd.f32 %v404, %v481
        %v483 = vpop.f32.mrf.mxu0
        %484 = vmatprep.mubr.f32.mxu0 0.0
        %485 = vmatmul.mubr.f32.gmra.mxu0 %v355
        %v486 = vpop.f32.mrf.mxu0
        %v487 = vadd.f32 %v404, %v486
        %v488 = vpop.f32.mrf.mxu0
        %489 = vmatprep.mubr.f32.mxu0 0.0
        %490 = vmatmul.mubr.f32.gmra.mxu0 %v356
        %v491 = vpop.f32.mrf.mxu0
        %v492 = vadd.f32 %v404, %v491
        %v493 = vpop.f32.mrf.mxu0
        %494 = vmatprep.mubr.f32.mxu0 0.0
        %495 = vmatmul.mubr.f32.gmra.mxu0 %v357
        %v496 = vpop.f32.mrf.mxu0
        %v497 = vadd.f32 %v404, %v496
        %v498 = vpop.f32.mrf.mxu0
        %499 = vmatprep.mubr.f32.mxu0 0.0
        %500 = vmatmul.mubr.f32.gmra.mxu0 %v358
        %v501 = vpop.f32.mrf.mxu0
        %v502 = vadd.f32 %v404, %v501
        %v503 = vpop.f32.mrf.mxu0
        %504 = vmatprep.mubr.f32.mxu0 0.0
        %505 = vmatmul.mubr.f32.gmra.mxu0 %v359
        %v506 = vpop.f32.mrf.mxu0
        %v507 = vadd.f32 %v404, %v506
        %v508 = vpop.f32.mrf.mxu0
        %509 = vmatprep.mubr.f32.mxu0 0.0
        %510 = vmatmul.mubr.f32.gmra.mxu0 %v360
        %v511 = vpop.f32.mrf.mxu0
        %v512 = vadd.f32 %v404, %v511
        %v513 = vpop.f32.mrf.mxu0
        %514 = vmatprep.mubr.f32.mxu0 0.0
        %515 = vmatmul.mubr.f32.gmra.mxu0 %v361
        %v516 = vpop.f32.mrf.mxu0
        %v517 = vadd.f32 %v404, %v516
        %v518 = vpop.f32.mrf.mxu0
        %519 = vmatprep.mubr.f32.mxu0 0.0
        %520 = vmatmul.mubr.f32.gmra.mxu0 %v362
        %v521 = vpop.f32.mrf.mxu0
        %v522 = vadd.f32 %v404, %v521
        %v523 = vpop.f32.mrf.mxu0
        %524 = vmatprep.mubr.f32.mxu0 0.0
        %525 = vmatmul.mubr.f32.gmra.mxu0 %v363
        %v526 = vpop.f32.mrf.mxu0
        %v527 = vadd.f32 %v404, %v526
        %v528 = vpop.f32.mrf.mxu0
        %529 = vmatprep.mubr.f32.mxu0 0.0
        %530 = vmatmul.mubr.f32.gmra.mxu0 %v364
        %v531 = vpop.f32.mrf.mxu0
        %v532 = vadd.f32 %v404, %v531
        %v533 = vpop.f32.mrf.mxu0
        %534 = vmatprep.mubr.f32.mxu0 0.0
        %535 = vmatmul.mubr.f32.gmra.mxu0 %v365
        %v536 = vpop.f32.mrf.mxu0
        %v537 = vadd.f32 %v404, %v536
        %v538 = vpop.f32.mrf.mxu0
        %539 = vmatprep.mubr.f32.mxu0 0.0
        %540 = vmatmul.mubr.f32.gmra.mxu0 %v366
        %v541 = vpop.f32.mrf.mxu0
        %v542 = vadd.f32 %v404, %v541
        %v543 = vpop.f32.mrf.mxu0
        %544 = vmatprep.mubr.f32.mxu0 0.0
        %545 = vmatmul.mubr.f32.gmra.mxu0 %v367
        %v546 = vpop.f32.mrf.mxu0
        %v547 = vadd.f32 %v404, %v546
        %v548 = vpop.f32.mrf.mxu0
        %549 = vmatprep.mubr.f32.mxu0 0.0
        %550 = vmatmul.mubr.f32.gmra.mxu0 %v368
        %v551 = vpop.f32.mrf.mxu0
        %v552 = vadd.f32 %v404, %v551
        %v553 = vpop.f32.mrf.mxu0
        %554 = vmatprep.mubr.f32.mxu0 0.0
        %555 = vmatmul.mubr.f32.gmra.mxu0 %v369
        %v556 = vpop.f32.mrf.mxu0
        %v557 = vadd.f32 %v404, %v556
        %v558 = vpop.f32.mrf.mxu0
        %559 = vmatprep.mubr.f32.mxu0 0.0
        %560 = vmatmul.mubr.f32.gmra.mxu0 %v370
        %v561 = vpop.f32.mrf.mxu0
        %v562 = vadd.f32 %v404, %v561
        %v563 = vpop.f32.mrf.mxu0
        %564 = vmatprep.mubr.f32.mxu0 0.0
        %565 = vmatmul.mubr.f32.gmra.mxu0 %v371
        %v566 = vpop.f32.mrf.mxu0
        %v567 = vadd.f32 %v404, %v566
        %v568 = vpop.f32.mrf.mxu0
        %569 = vmatprep.mubr.f32.mxu0 0.0
        %570 = vmatmul.mubr.f32.gmra.mxu0 %v372
        %v571 = vpop.f32.mrf.mxu0
        %v572 = vadd.f32 %v404, %v571
        %v573 = vpop.f32.mrf.mxu0
        %574 = vmatprep.mubr.f32.mxu0 0.0
        %575 = vmatmul.mubr.f32.gmra.mxu0 %v373
        %v576 = vpop.f32.mrf.mxu0
        %v577 = vadd.f32 %v404, %v576
        %v578 = vpop.f32.mrf.mxu0
        %579 = vmatprep.mubr.f32.mxu0 0.0
        %580 = vmatmul.mubr.f32.gmra.mxu0 %v374
        %v581 = vpop.f32.mrf.mxu0
        %v582 = vadd.f32 %v404, %v581
        %v583 = vpop.f32.mrf.mxu0
        %584 = vmatprep.mubr.f32.mxu0 0.0
        %585 = vmatmul.mubr.f32.gmra.mxu0 %v375
        %v586 = vpop.f32.mrf.mxu0
        %v587 = vadd.f32 %v404, %v586
        %v588 = vpop.f32.mrf.mxu0
        %589 = vmatprep.mubr.f32.mxu0 0.0
        %590 = vmatmul.mubr.f32.gmra.mxu0 %v376
        %v591 = vpop.f32.mrf.mxu0
        %v592 = vadd.f32 %v404, %v591
        %v593 = vpop.f32.mrf.mxu0
        %594 = vmatprep.mubr.f32.mxu0 0.0
        %595 = vmatmul.mubr.f32.gmra.mxu0 %v377
        %v596 = vpop.f32.mrf.mxu0
        %v597 = vadd.f32 %v404, %v596
        %v598 = vpop.f32.mrf.mxu0
        %599 = vmatprep.mubr.f32.mxu0 0.0
        %600 = vmatmul.mubr.f32.gmra.mxu0 %v378
        %v601 = vpop.f32.mrf.mxu0
        %v602 = vadd.f32 %v404, %v601
        %v603 = vpop.f32.mrf.mxu0
        %604 = vmatprep.mubr.f32.mxu0 0.0
        %605 = vmatmul.mubr.f32.gmra.mxu0 %v379
        %v606 = vpop.f32.mrf.mxu0
        %v607 = vadd.f32 %v404, %v606
        %v608 = vpop.f32.mrf.mxu0
        %609 = vmatprep.mubr.f32.mxu0 0.0
        %610 = vmatmul.mubr.f32.gmra.mxu0 %v380
        %v611 = vpop.f32.mrf.mxu0
        %v612 = vadd.f32 %v404, %v611
        %v613 = vpop.f32.mrf.mxu0
        %614 = vmatprep.mubr.f32.mxu0 0.0
        %615 = vmatmul.mubr.f32.gmra.mxu0 %v381
        %v616 = vpop.f32.mrf.mxu0
        %v617 = vadd.f32 %v404, %v616
        %v618 = vpop.f32.mrf.mxu0
        %619 = vmatprep.mubr.f32.mxu0 0.0
        %620 = vmatmul.mubr.f32.gmra.mxu0 %v382
        %v621 = vpop.f32.mrf.mxu0
        %v622 = vadd.f32 %v404, %v621
        %v623 = vpop.f32.mrf.mxu0
        %624 = vmatprep.mubr.f32.mxu0 0.0
        %625 = vmatmul.mubr.f32.gmra.mxu0 %v383
        %v626 = vpop.f32.mrf.mxu0
        %v627 = vadd.f32 %v404, %v626
        %v628 = vpop.f32.mrf.mxu0
        %629 = vdwg.mxu0
        %v630 = vld [vmem:[%s301] sm:$0xff]
        %v631 = vld [vmem:[%s301 + $0x8] sm:$0xff]
        %v632 = vld [vmem:[%s301 + $0x10] sm:$0xff]
        %v633 = vld [vmem:[%s301 + $0x18] sm:$0xff]
        %v634 = vld [vmem:[%s301 + $0x20] sm:$0xff]
        %v635 = vld [vmem:[%s301 + $0x28] sm:$0xff]
        %v636 = vld [vmem:[%s301 + $0x30] sm:$0xff]
        %v637 = vld [vmem:[%s301 + $0x38] sm:$0xff]
        %v638 = vld [vmem:[%s301 + $0x40] sm:$0xff]
        %v639 = vld [vmem:[%s301 + $0x48] sm:$0xff]
        %v640 = vld [vmem:[%s301 + $0x50] sm:$0xff]
        %v641 = vld [vmem:[%s301 + $0x58] sm:$0xff]
        %v642 = vld [vmem:[%s301 + $0x60] sm:$0xff]
        %v643 = vld [vmem:[%s301 + $0x68] sm:$0xff]
        %v644 = vld [vmem:[%s301 + $0x70] sm:$0xff]
        %v645 = vld [vmem:[%s301 + $0x78] sm:$0xff]
        %v646 = vld [vmem:[%s301 + $0x80] sm:$0xff]
        %v647 = vld [vmem:[%s301 + $0x88] sm:$0xff]
        %v648 = vld [vmem:[%s301 + $0x90] sm:$0xff]
        %v649 = vld [vmem:[%s301 + $0x98] sm:$0xff]
        %v650 = vld [vmem:[%s301 + $0xa0] sm:$0xff]
        %v651 = vld [vmem:[%s301 + $0xa8] sm:$0xff]
        %v652 = vld [vmem:[%s301 + $0xb0] sm:$0xff]
        %v653 = vld [vmem:[%s301 + $0xb8] sm:$0xff]
        %v654 = vld [vmem:[%s301 + $0xc0] sm:$0xff]
        %v655 = vld [vmem:[%s301 + $0xc8] sm:$0xff]
        %v656 = vld [vmem:[%s301 + $0xd0] sm:$0xff]
        %v657 = vld [vmem:[%s301 + $0xd8] sm:$0xff]
        %v658 = vld [vmem:[%s301 + $0xe0] sm:$0xff]
        %v659 = vld [vmem:[%s301 + $0xe8] sm:$0xff]
        %v660 = vld [vmem:[%s301 + $0xf0] sm:$0xff]
        %v661 = vld [vmem:[%s301 + $0xf8] sm:$0xff]
        %v662 = vld [vmem:[%s3] sm:$0xff]
        %v663 = vld [vmem:[%s3 + $0x8] sm:$0xff]
        %v664 = vld [vmem:[%s3 + $0x10] sm:$0xff]
        %v665 = vld [vmem:[%s3 + $0x18] sm:$0xff]
        %v666 = vld [vmem:[%s3 + $0x20] sm:$0xff]
        %v667 = vld [vmem:[%s3 + $0x28] sm:$0xff]
        %v668 = vld [vmem:[%s3 + $0x30] sm:$0xff]
        %v669 = vld [vmem:[%s3 + $0x38] sm:$0xff]
        %v670 = vld [vmem:[%s3 + $0x40] sm:$0xff]
        %v671 = vld [vmem:[%s3 + $0x48] sm:$0xff]
        %v672 = vld [vmem:[%s3 + $0x50] sm:$0xff]
        %v673 = vld [vmem:[%s3 + $0x58] sm:$0xff]
        %v674 = vld [vmem:[%s3 + $0x60] sm:$0xff]
        %v675 = vld [vmem:[%s3 + $0x68] sm:$0xff]
        %v676 = vld [vmem:[%s3 + $0x70] sm:$0xff]
        %v677 = vld [vmem:[%s3 + $0x78] sm:$0xff]
        %v678 = vld [vmem:[%s4 + $0x1] sm:$0x1]
        %v679 = vlaneseq
        %v680 = vshrl.u32 %v679, 7
        %v681 = vsub.s32 0, %v680
        %v682 = vrot.slane %v678, %v681
        %683 = vmatprep.subr.mxu0 0.0
        %684 = vmatpush1.msra.mxu0 %v677
        %685 = vmatprep.subr.mxu0 0.0
        %686 = vmatpush1.msra.mxu0 %v676
        %687 = vmatprep.subr.mxu0 0.0
        %688 = vmatpush1.msra.mxu0 %v675
        %689 = vmatprep.subr.mxu0 0.0
        %690 = vmatpush1.msra.mxu0 %v674
        %691 = vmatprep.subr.mxu0 0.0
        %692 = vmatpush1.msra.mxu0 %v673
        %693 = vmatprep.subr.mxu0 0.0
        %694 = vmatpush1.msra.mxu0 %v672
        %695 = vmatprep.subr.mxu0 0.0
        %696 = vmatpush1.msra.mxu0 %v671
        %697 = vmatprep.subr.mxu0 0.0
        %698 = vmatpush1.msra.mxu0 %v670
        %699 = vmatprep.subr.mxu0 0.0
        %700 = vmatpush1.msra.mxu0 %v669
        %701 = vmatprep.subr.mxu0 0.0
        %702 = vmatpush1.msra.mxu0 %v668
        %703 = vmatprep.subr.mxu0 0.0
        %704 = vmatpush1.msra.mxu0 %v667
        %705 = vmatprep.subr.mxu0 0.0
        %706 = vmatpush1.msra.mxu0 %v666
        %707 = vmatprep.subr.mxu0 0.0
        %708 = vmatpush1.msra.mxu0 %v665
        %709 = vmatprep.subr.mxu0 0.0
        %710 = vmatpush1.msra.mxu0 %v664
        %711 = vmatprep.subr.mxu0 0.0
        %712 = vmatpush1.msra.mxu0 %v663
        %713 = vmatprep.subr.mxu0 0.0
        %714 = vmatpush1.msra.mxu0 %v662
        %715 = vmatprep.subr.mxu0 0.0
        %716 = vmatpush2.msra.mxu0 0.0
        %717 = vmatprep.subr.mxu0 0.0
        %718 = vmatpush2.msra.mxu0 0.0
        %719 = vmatprep.subr.mxu0 0.0
        %720 = vmatpush2.msra.mxu0 0.0
        %721 = vmatprep.subr.mxu0 0.0
        %722 = vmatpush2.msra.mxu0 0.0
        %723 = vmatprep.subr.mxu0 0.0
        %724 = vmatpush2.msra.mxu0 0.0
        %725 = vmatprep.subr.mxu0 0.0
        %726 = vmatpush2.msra.mxu0 0.0
        %727 = vmatprep.subr.mxu0 0.0
        %728 = vmatpush2.msra.mxu0 0.0
        %729 = vmatprep.subr.mxu0 0.0
        %730 = vmatpush2.msra.mxu0 0.0
        %731 = vmatprep.subr.mxu0 0.0
        %732 = vmatpush2.msra.mxu0 0.0
        %733 = vmatprep.subr.mxu0 0.0
        %734 = vmatpush2.msra.mxu0 0.0
        %735 = vmatprep.subr.mxu0 0.0
        %736 = vmatpush2.msra.mxu0 0.0
        %737 = vmatprep.subr.mxu0 0.0
        %738 = vmatpush2.msra.mxu0 0.0
        %739 = vmatprep.subr.mxu0 0.0
        %740 = vmatpush2.msra.mxu0 0.0
        %741 = vmatprep.subr.mxu0 0.0
        %742 = vmatpush2.msra.mxu0 0.0
        %743 = vmatprep.subr.mxu0 0.0
        %744 = vmatpush2.msra.mxu0 0.0
        %745 = vmatprep.subr.mxu0 0.0
        %746 = vmatpush2.msra.mxu0 0.0
        %747 = vmatprep.mubr.f32.mxu0 0.0
        %748 = vmatmul.mubr.f32.gmra.mxu0 %v630
        %v749 = vpop.f32.mrf.mxu0
        %v750 = vadd.f32 %v682, %v749
        %v751 = vpop.f32.mrf.mxu0
        %752 = vmatprep.mubr.f32.mxu0 0.0
        %753 = vmatmul.mubr.f32.gmra.mxu0 %v631
        %v754 = vpop.f32.mrf.mxu0
        %v755 = vadd.f32 %v682, %v754
        %v756 = vpop.f32.mrf.mxu0
        %757 = vmatprep.mubr.f32.mxu0 0.0
        %758 = vmatmul.mubr.f32.gmra.mxu0 %v632
        %v759 = vpop.f32.mrf.mxu0
        %v760 = vadd.f32 %v682, %v759
        %v761 = vpop.f32.mrf.mxu0
        %762 = vmatprep.mubr.f32.mxu0 0.0
        %763 = vmatmul.mubr.f32.gmra.mxu0 %v633
        %v764 = vpop.f32.mrf.mxu0
        %v765 = vadd.f32 %v682, %v764
        %v766 = vpop.f32.mrf.mxu0
        %767 = vmatprep.mubr.f32.mxu0 0.0
        %768 = vmatmul.mubr.f32.gmra.mxu0 %v634
        %v769 = vpop.f32.mrf.mxu0
        %v770 = vadd.f32 %v682, %v769
        %v771 = vpop.f32.mrf.mxu0
        %772 = vmatprep.mubr.f32.mxu0 0.0
        %773 = vmatmul.mubr.f32.gmra.mxu0 %v635
        %v774 = vpop.f32.mrf.mxu0
        %v775 = vadd.f32 %v682, %v774
        %v776 = vpop.f32.mrf.mxu0
        %777 = vmatprep.mubr.f32.mxu0 0.0
        %778 = vmatmul.mubr.f32.gmra.mxu0 %v636
        %v779 = vpop.f32.mrf.mxu0
        %v780 = vadd.f32 %v682, %v779
        %v781 = vpop.f32.mrf.mxu0
        %782 = vmatprep.mubr.f32.mxu0 0.0
        %783 = vmatmul.mubr.f32.gmra.mxu0 %v637
        %v784 = vpop.f32.mrf.mxu0
        %v785 = vadd.f32 %v682, %v784
        %v786 = vpop.f32.mrf.mxu0
        %787 = vmatprep.mubr.f32.mxu0 0.0
        %788 = vmatmul.mubr.f32.gmra.mxu0 %v638
        %v789 = vpop.f32.mrf.mxu0
        %v790 = vadd.f32 %v682, %v789
        %v791 = vpop.f32.mrf.mxu0
        %792 = vmatprep.mubr.f32.mxu0 0.0
        %793 = vmatmul.mubr.f32.gmra.mxu0 %v639
        %v794 = vpop.f32.mrf.mxu0
        %v795 = vadd.f32 %v682, %v794
        %v796 = vpop.f32.mrf.mxu0
        %797 = vmatprep.mubr.f32.mxu0 0.0
        %798 = vmatmul.mubr.f32.gmra.mxu0 %v640
        %v799 = vpop.f32.mrf.mxu0
        %v800 = vadd.f32 %v682, %v799
        %v801 = vpop.f32.mrf.mxu0
        %802 = vmatprep.mubr.f32.mxu0 0.0
        %803 = vmatmul.mubr.f32.gmra.mxu0 %v641
        %v804 = vpop.f32.mrf.mxu0
        %v805 = vadd.f32 %v682, %v804
        %v806 = vpop.f32.mrf.mxu0
        %807 = vmatprep.mubr.f32.mxu0 0.0
        %808 = vmatmul.mubr.f32.gmra.mxu0 %v642
        %v809 = vpop.f32.mrf.mxu0
        %v810 = vadd.f32 %v682, %v809
        %v811 = vpop.f32.mrf.mxu0
        %812 = vmatprep.mubr.f32.mxu0 0.0
        %813 = vmatmul.mubr.f32.gmra.mxu0 %v643
        %v814 = vpop.f32.mrf.mxu0
        %v815 = vadd.f32 %v682, %v814
        %v816 = vpop.f32.mrf.mxu0
        %817 = vmatprep.mubr.f32.mxu0 0.0
        %818 = vmatmul.mubr.f32.gmra.mxu0 %v644
        %v819 = vpop.f32.mrf.mxu0
        %v820 = vadd.f32 %v682, %v819
        %v821 = vpop.f32.mrf.mxu0
        %822 = vmatprep.mubr.f32.mxu0 0.0
        %823 = vmatmul.mubr.f32.gmra.mxu0 %v645
        %v824 = vpop.f32.mrf.mxu0
        %v825 = vadd.f32 %v682, %v824
        %v826 = vpop.f32.mrf.mxu0
        %827 = vmatprep.mubr.f32.mxu0 0.0
        %828 = vmatmul.mubr.f32.gmra.mxu0 %v646
        %v829 = vpop.f32.mrf.mxu0
        %v830 = vadd.f32 %v682, %v829
        %v831 = vpop.f32.mrf.mxu0
        %832 = vmatprep.mubr.f32.mxu0 0.0
        %833 = vmatmul.mubr.f32.gmra.mxu0 %v647
        %v834 = vpop.f32.mrf.mxu0
        %v835 = vadd.f32 %v682, %v834
        %v836 = vpop.f32.mrf.mxu0
        %837 = vmatprep.mubr.f32.mxu0 0.0
        %838 = vmatmul.mubr.f32.gmra.mxu0 %v648
        %v839 = vpop.f32.mrf.mxu0
        %v840 = vadd.f32 %v682, %v839
        %v841 = vpop.f32.mrf.mxu0
        %842 = vmatprep.mubr.f32.mxu0 0.0
        %843 = vmatmul.mubr.f32.gmra.mxu0 %v649
        %v844 = vpop.f32.mrf.mxu0
        %v845 = vadd.f32 %v682, %v844
        %v846 = vpop.f32.mrf.mxu0
        %847 = vmatprep.mubr.f32.mxu0 0.0
        %848 = vmatmul.mubr.f32.gmra.mxu0 %v650
        %v849 = vpop.f32.mrf.mxu0
        %v850 = vadd.f32 %v682, %v849
        %v851 = vpop.f32.mrf.mxu0
        %852 = vmatprep.mubr.f32.mxu0 0.0
        %853 = vmatmul.mubr.f32.gmra.mxu0 %v651
        %v854 = vpop.f32.mrf.mxu0
        %v855 = vadd.f32 %v682, %v854
        %v856 = vpop.f32.mrf.mxu0
        %857 = vmatprep.mubr.f32.mxu0 0.0
        %858 = vmatmul.mubr.f32.gmra.mxu0 %v652
        %v859 = vpop.f32.mrf.mxu0
        %v860 = vadd.f32 %v682, %v859
        %v861 = vpop.f32.mrf.mxu0
        %862 = vmatprep.mubr.f32.mxu0 0.0
        %863 = vmatmul.mubr.f32.gmra.mxu0 %v653
        %v864 = vpop.f32.mrf.mxu0
        %v865 = vadd.f32 %v682, %v864
        %v866 = vpop.f32.mrf.mxu0
        %867 = vmatprep.mubr.f32.mxu0 0.0
        %868 = vmatmul.mubr.f32.gmra.mxu0 %v654
        %v869 = vpop.f32.mrf.mxu0
        %v870 = vadd.f32 %v682, %v869
        %v871 = vpop.f32.mrf.mxu0
        %872 = vmatprep.mubr.f32.mxu0 0.0
        %873 = vmatmul.mubr.f32.gmra.mxu0 %v655
        %v874 = vpop.f32.mrf.mxu0
        %v875 = vadd.f32 %v682, %v874
        %v876 = vpop.f32.mrf.mxu0
        %877 = vmatprep.mubr.f32.mxu0 0.0
        %878 = vmatmul.mubr.f32.gmra.mxu0 %v656
        %v879 = vpop.f32.mrf.mxu0
        %v880 = vadd.f32 %v682, %v879
        %v881 = vpop.f32.mrf.mxu0
        %882 = vmatprep.mubr.f32.mxu0 0.0
        %883 = vmatmul.mubr.f32.gmra.mxu0 %v657
        %v884 = vpop.f32.mrf.mxu0
        %v885 = vadd.f32 %v682, %v884
        %v886 = vpop.f32.mrf.mxu0
        %887 = vmatprep.mubr.f32.mxu0 0.0
        %888 = vmatmul.mubr.f32.gmra.mxu0 %v658
        %v889 = vpop.f32.mrf.mxu0
        %v890 = vadd.f32 %v682, %v889
        %v891 = vpop.f32.mrf.mxu0
        %892 = vmatprep.mubr.f32.mxu0 0.0
        %893 = vmatmul.mubr.f32.gmra.mxu0 %v659
        %v894 = vpop.f32.mrf.mxu0
        %v895 = vadd.f32 %v682, %v894
        %v896 = vpop.f32.mrf.mxu0
        %897 = vmatprep.mubr.f32.mxu0 0.0
        %898 = vmatmul.mubr.f32.gmra.mxu0 %v660
        %v899 = vpop.f32.mrf.mxu0
        %v900 = vadd.f32 %v682, %v899
        %v901 = vpop.f32.mrf.mxu0
        %902 = vmatprep.mubr.f32.mxu0 0.0
        %903 = vmatmul.mubr.f32.gmra.mxu0 %v661
        %v904 = vpop.f32.mrf.mxu0
        %v905 = vadd.f32 %v682, %v904
        %v906 = vpop.f32.mrf.mxu0
        %907 = vdwg.mxu0
        %v908 = vld [vmem:[%s5] sm:$0x1]
        %v909 = vld [vmem:[%s5 + $0x1] sm:$0x1]
        %vm910 = vcmask 261120
        %v911 = vsel %vm910, %v472, 0.0
        %912 = vadd.xlane.f32.xlu0 %v911
        %v913 = vpop.xlane.xlu0 %912
        %v914 = vsel %vm910, %v477, 0.0
        %915 = vadd.xlane.f32.xlu0 %v914
        %v916 = vpop.xlane.xlu0 %915
        %v917 = vsel %vm910, %v482, 0.0
        %918 = vadd.xlane.f32.xlu0 %v917
        %v919 = vpop.xlane.xlu0 %918
        %v920 = vsel %vm910, %v487, 0.0
        %921 = vadd.xlane.f32.xlu0 %v920
        %v922 = vpop.xlane.xlu0 %921
        %v923 = vsel %vm910, %v492, 0.0
        %924 = vadd.xlane.f32.xlu0 %v923
        %v925 = vpop.xlane.xlu0 %924
        %v926 = vsel %vm910, %v497, 0.0
        %927 = vadd.xlane.f32.xlu0 %v926
        %v928 = vpop.xlane.xlu0 %927
        %v929 = vsel %vm910, %v502, 0.0
        %930 = vadd.xlane.f32.xlu0 %v929
        %v931 = vpop.xlane.xlu0 %930
        %v932 = vsel %vm910, %v507, 0.0
        %933 = vadd.xlane.f32.xlu0 %v932
        %v934 = vpop.xlane.xlu0 %933
        %v935 = vsel %vm910, %v512, 0.0
        %936 = vadd.xlane.f32.xlu0 %v935
        %v937 = vpop.xlane.xlu0 %936
        %v938 = vsel %vm910, %v517, 0.0
        %939 = vadd.xlane.f32.xlu0 %v938
        %v940 = vpop.xlane.xlu0 %939
        %v941 = vsel %vm910, %v522, 0.0
        %942 = vadd.xlane.f32.xlu0 %v941
        %v943 = vpop.xlane.xlu0 %942
        %v944 = vsel %vm910, %v527, 0.0
        %945 = vadd.xlane.f32.xlu0 %v944
        %v946 = vpop.xlane.xlu0 %945
        %v947 = vsel %vm910, %v532, 0.0
        %948 = vadd.xlane.f32.xlu0 %v947
        %v949 = vpop.xlane.xlu0 %948
        %v950 = vsel %vm910, %v537, 0.0
        %951 = vadd.xlane.f32.xlu0 %v950
        %v952 = vpop.xlane.xlu0 %951
        %v953 = vsel %vm910, %v542, 0.0
        %954 = vadd.xlane.f32.xlu0 %v953
        %v955 = vpop.xlane.xlu0 %954
        %v956 = vsel %vm910, %v547, 0.0
        %957 = vadd.xlane.f32.xlu0 %v956
        %v958 = vpop.xlane.xlu0 %957
        %v959 = vsel %vm910, %v552, 0.0
        %960 = vadd.xlane.f32.xlu0 %v959
        %v961 = vpop.xlane.xlu0 %960
        %v962 = vsel %vm910, %v557, 0.0
        %963 = vadd.xlane.f32.xlu0 %v962
        %v964 = vpop.xlane.xlu0 %963
        %v965 = vsel %vm910, %v562, 0.0
        %966 = vadd.xlane.f32.xlu0 %v965
        %v967 = vpop.xlane.xlu0 %966
        %v968 = vsel %vm910, %v567, 0.0
        %969 = vadd.xlane.f32.xlu0 %v968
        %v970 = vpop.xlane.xlu0 %969
        %v971 = vsel %vm910, %v572, 0.0
        %972 = vadd.xlane.f32.xlu0 %v971
        %v973 = vpop.xlane.xlu0 %972
        %v974 = vsel %vm910, %v577, 0.0
        %975 = vadd.xlane.f32.xlu0 %v974
        %v976 = vpop.xlane.xlu0 %975
        %v977 = vsel %vm910, %v582, 0.0
        %978 = vadd.xlane.f32.xlu0 %v977
        %v979 = vpop.xlane.xlu0 %978
        %v980 = vsel %vm910, %v587, 0.0
        %981 = vadd.xlane.f32.xlu0 %v980
        %v982 = vpop.xlane.xlu0 %981
        %v983 = vsel %vm910, %v592, 0.0
        %984 = vadd.xlane.f32.xlu0 %v983
        %v985 = vpop.xlane.xlu0 %984
        %v986 = vsel %vm910, %v597, 0.0
        %987 = vadd.xlane.f32.xlu0 %v986
        %v988 = vpop.xlane.xlu0 %987
        %v989 = vsel %vm910, %v602, 0.0
        %990 = vadd.xlane.f32.xlu0 %v989
        %v991 = vpop.xlane.xlu0 %990
        %v992 = vsel %vm910, %v607, 0.0
        %993 = vadd.xlane.f32.xlu0 %v992
        %v994 = vpop.xlane.xlu0 %993
        %v995 = vsel %vm910, %v612, 0.0
        %996 = vadd.xlane.f32.xlu0 %v995
        %v997 = vpop.xlane.xlu0 %996
        %v998 = vsel %vm910, %v617, 0.0
        %999 = vadd.xlane.f32.xlu0 %v998
        %v1000 = vpop.xlane.xlu0 %999
        %v1001 = vsel %vm910, %v622, 0.0
        %1002 = vadd.xlane.f32.xlu0 %v1001
        %v1003 = vpop.xlane.xlu0 %1002
        %v1004 = vsel %vm910, %v627, 0.0
        %1005 = vadd.xlane.f32.xlu0 %v1004
        %v1006 = vpop.xlane.xlu0 %1005
        %v1007 = vrcp.pop 32.0
        %v1008 = vmul.f32 %v913, %v1007
        %v1009 = vmul.f32 %v916, %v1007
        %v1010 = vmul.f32 %v919, %v1007
        %v1011 = vmul.f32 %v922, %v1007
        %v1012 = vmul.f32 %v925, %v1007
        %v1013 = vmul.f32 %v928, %v1007
        %v1014 = vmul.f32 %v931, %v1007
        %v1015 = vmul.f32 %v934, %v1007
        %v1016 = vmul.f32 %v937, %v1007
        %v1017 = vmul.f32 %v940, %v1007
        %v1018 = vmul.f32 %v943, %v1007
        %v1019 = vmul.f32 %v946, %v1007
        %v1020 = vmul.f32 %v949, %v1007
        %v1021 = vmul.f32 %v952, %v1007
        %v1022 = vmul.f32 %v955, %v1007
        %v1023 = vmul.f32 %v958, %v1007
        %v1024 = vmul.f32 %v961, %v1007
        %v1025 = vmul.f32 %v964, %v1007
        %v1026 = vmul.f32 %v967, %v1007
        %v1027 = vmul.f32 %v970, %v1007
        %v1028 = vmul.f32 %v973, %v1007
        %v1029 = vmul.f32 %v976, %v1007
        %v1030 = vmul.f32 %v979, %v1007
        %v1031 = vmul.f32 %v982, %v1007
        %v1032 = vmul.f32 %v985, %v1007
        %v1033 = vmul.f32 %v988, %v1007
        %v1034 = vmul.f32 %v991, %v1007
        %v1035 = vmul.f32 %v994, %v1007
        %v1036 = vmul.f32 %v997, %v1007
        %v1037 = vmul.f32 %v1000, %v1007
        %v1038 = vmul.f32 %v1003, %v1007
        %v1039 = vmul.f32 %v1006, %v1007
        %v1040 = vsub.f32 %v472, %v1008
        %v1041 = vsub.f32 %v477, %v1009
        %v1042 = vsub.f32 %v482, %v1010
        %v1043 = vsub.f32 %v487, %v1011
        %v1044 = vsub.f32 %v492, %v1012
        %v1045 = vsub.f32 %v497, %v1013
        %v1046 = vsub.f32 %v502, %v1014
        %v1047 = vsub.f32 %v507, %v1015
        %v1048 = vsub.f32 %v512, %v1016
        %v1049 = vsub.f32 %v517, %v1017
        %v1050 = vsub.f32 %v522, %v1018
        %v1051 = vsub.f32 %v527, %v1019
        %v1052 = vsub.f32 %v532, %v1020
        %v1053 = vsub.f32 %v537, %v1021
        %v1054 = vsub.f32 %v542, %v1022
        %v1055 = vsub.f32 %v547, %v1023
        %v1056 = vsub.f32 %v552, %v1024
        %v1057 = vsub.f32 %v557, %v1025
        %v1058 = vsub.f32 %v562, %v1026
        %v1059 = vsub.f32 %v567, %v1027
        %v1060 = vsub.f32 %v572, %v1028
        %v1061 = vsub.f32 %v577, %v1029
        %v1062 = vsub.f32 %v582, %v1030
        %v1063 = vsub.f32 %v587, %v1031
        %v1064 = vsub.f32 %v592, %v1032
        %v1065 = vsub.f32 %v597, %v1033
        %v1066 = vsub.f32 %v602, %v1034
        %v1067 = vsub.f32 %v607, %v1035
        %v1068 = vsub.f32 %v612, %v1036
        %v1069 = vsub.f32 %v617, %v1037
        %v1070 = vsub.f32 %v622, %v1038
        %v1071 = vsub.f32 %v627, %v1039
        %v1072 = vmul.f32 %v1040, %v1040
        %v1073 = vmul.f32 %v1041, %v1041
        %v1074 = vmul.f32 %v1042, %v1042
        %v1075 = vmul.f32 %v1043, %v1043
        %v1076 = vmul.f32 %v1044, %v1044
        %v1077 = vmul.f32 %v1045, %v1045
        %v1078 = vmul.f32 %v1046, %v1046
        %v1079 = vmul.f32 %v1047, %v1047
        %v1080 = vmul.f32 %v1048, %v1048
        %v1081 = vmul.f32 %v1049, %v1049
        %v1082 = vmul.f32 %v1050, %v1050
        %v1083 = vmul.f32 %v1051, %v1051
        %v1084 = vmul.f32 %v1052, %v1052
        %v1085 = vmul.f32 %v1053, %v1053
        %v1086 = vmul.f32 %v1054, %v1054
        %v1087 = vmul.f32 %v1055, %v1055
        %v1088 = vmul.f32 %v1056, %v1056
        %v1089 = vmul.f32 %v1057, %v1057
        %v1090 = vmul.f32 %v1058, %v1058
        %v1091 = vmul.f32 %v1059, %v1059
        %v1092 = vmul.f32 %v1060, %v1060
        %v1093 = vmul.f32 %v1061, %v1061
        %v1094 = vmul.f32 %v1062, %v1062
        %v1095 = vmul.f32 %v1063, %v1063
        %v1096 = vmul.f32 %v1064, %v1064
        %v1097 = vmul.f32 %v1065, %v1065
        %v1098 = vmul.f32 %v1066, %v1066
        %v1099 = vmul.f32 %v1067, %v1067
        %v1100 = vmul.f32 %v1068, %v1068
        %v1101 = vmul.f32 %v1069, %v1069
        %v1102 = vmul.f32 %v1070, %v1070
        %v1103 = vmul.f32 %v1071, %v1071
        %v1104 = vsel %vm910, %v1072, 0.0
        %1105 = vadd.xlane.f32.xlu0 %v1104
        %v1106 = vpop.xlane.xlu0 %1105
        %v1107 = vsel %vm910, %v1073, 0.0
        %1108 = vadd.xlane.f32.xlu0 %v1107
        %v1109 = vpop.xlane.xlu0 %1108
        %v1110 = vsel %vm910, %v1074, 0.0
        %1111 = vadd.xlane.f32.xlu0 %v1110
        %v1112 = vpop.xlane.xlu0 %1111
        %v1113 = vsel %vm910, %v1075, 0.0
        %1114 = vadd.xlane.f32.xlu0 %v1113
        %v1115 = vpop.xlane.xlu0 %1114
        %v1116 = vsel %vm910, %v1076, 0.0
        %1117 = vadd.xlane.f32.xlu0 %v1116
        %v1118 = vpop.xlane.xlu0 %1117
        %v1119 = vsel %vm910, %v1077, 0.0
        %1120 = vadd.xlane.f32.xlu0 %v1119
        %v1121 = vpop.xlane.xlu0 %1120
        %v1122 = vsel %vm910, %v1078, 0.0
        %1123 = vadd.xlane.f32.xlu0 %v1122
        %v1124 = vpop.xlane.xlu0 %1123
        %v1125 = vsel %vm910, %v1079, 0.0
        %1126 = vadd.xlane.f32.xlu0 %v1125
        %v1127 = vpop.xlane.xlu0 %1126
        %v1128 = vsel %vm910, %v1080, 0.0
        %1129 = vadd.xlane.f32.xlu0 %v1128
        %v1130 = vpop.xlane.xlu0 %1129
        %v1131 = vsel %vm910, %v1081, 0.0
        %1132 = vadd.xlane.f32.xlu0 %v1131
        %v1133 = vpop.xlane.xlu0 %1132
        %v1134 = vsel %vm910, %v1082, 0.0
        %1135 = vadd.xlane.f32.xlu0 %v1134
        %v1136 = vpop.xlane.xlu0 %1135
        %v1137 = vsel %vm910, %v1083, 0.0
        %1138 = vadd.xlane.f32.xlu0 %v1137
        %v1139 = vpop.xlane.xlu0 %1138
        %v1140 = vsel %vm910, %v1084, 0.0
        %1141 = vadd.xlane.f32.xlu0 %v1140
        %v1142 = vpop.xlane.xlu0 %1141
        %v1143 = vsel %vm910, %v1085, 0.0
        %1144 = vadd.xlane.f32.xlu0 %v1143
        %v1145 = vpop.xlane.xlu0 %1144
        %v1146 = vsel %vm910, %v1086, 0.0
        %1147 = vadd.xlane.f32.xlu0 %v1146
        %v1148 = vpop.xlane.xlu0 %1147
        %v1149 = vsel %vm910, %v1087, 0.0
        %1150 = vadd.xlane.f32.xlu0 %v1149
        %v1151 = vpop.xlane.xlu0 %1150
        %v1152 = vsel %vm910, %v1088, 0.0
        %1153 = vadd.xlane.f32.xlu0 %v1152
        %v1154 = vpop.xlane.xlu0 %1153
        %v1155 = vsel %vm910, %v1089, 0.0
        %1156 = vadd.xlane.f32.xlu0 %v1155
        %v1157 = vpop.xlane.xlu0 %1156
        %v1158 = vsel %vm910, %v1090, 0.0
        %1159 = vadd.xlane.f32.xlu0 %v1158
        %v1160 = vpop.xlane.xlu0 %1159
        %v1161 = vsel %vm910, %v1091, 0.0
        %1162 = vadd.xlane.f32.xlu0 %v1161
        %v1163 = vpop.xlane.xlu0 %1162
        %v1164 = vsel %vm910, %v1092, 0.0
        %1165 = vadd.xlane.f32.xlu0 %v1164
        %v1166 = vpop.xlane.xlu0 %1165
        %v1167 = vsel %vm910, %v1093, 0.0
        %1168 = vadd.xlane.f32.xlu0 %v1167
        %v1169 = vpop.xlane.xlu0 %1168
        %v1170 = vsel %vm910, %v1094, 0.0
        %1171 = vadd.xlane.f32.xlu0 %v1170
        %v1172 = vpop.xlane.xlu0 %1171
        %v1173 = vsel %vm910, %v1095, 0.0
        %1174 = vadd.xlane.f32.xlu0 %v1173
        %v1175 = vpop.xlane.xlu0 %1174
        %v1176 = vsel %vm910, %v1096, 0.0
        %1177 = vadd.xlane.f32.xlu0 %v1176
        %v1178 = vpop.xlane.xlu0 %1177
        %v1179 = vsel %vm910, %v1097, 0.0
        %1180 = vadd.xlane.f32.xlu0 %v1179
        %v1181 = vpop.xlane.xlu0 %1180
        %v1182 = vsel %vm910, %v1098, 0.0
        %1183 = vadd.xlane.f32.xlu0 %v1182
        %v1184 = vpop.xlane.xlu0 %1183
        %v1185 = vsel %vm910, %v1099, 0.0
        %1186 = vadd.xlane.f32.xlu0 %v1185
        %v1187 = vpop.xlane.xlu0 %1186
        %v1188 = vsel %vm910, %v1100, 0.0
        %1189 = vadd.xlane.f32.xlu0 %v1188
        %v1190 = vpop.xlane.xlu0 %1189
        %v1191 = vsel %vm910, %v1101, 0.0
        %1192 = vadd.xlane.f32.xlu0 %v1191
        %v1193 = vpop.xlane.xlu0 %1192
        %v1194 = vsel %vm910, %v1102, 0.0
        %1195 = vadd.xlane.f32.xlu0 %v1194
        %v1196 = vpop.xlane.xlu0 %1195
        %v1197 = vsel %vm910, %v1103, 0.0
        %1198 = vadd.xlane.f32.xlu0 %v1197
        %v1199 = vpop.xlane.xlu0 %1198
        %v1200 = vmul.f32 %v1106, %v1007
        %v1201 = vmul.f32 %v1109, %v1007
        %v1202 = vmul.f32 %v1112, %v1007
        %v1203 = vmul.f32 %v1115, %v1007
        %v1204 = vmul.f32 %v1118, %v1007
        %v1205 = vmul.f32 %v1121, %v1007
        %v1206 = vmul.f32 %v1124, %v1007
        %v1207 = vmul.f32 %v1127, %v1007
        %v1208 = vmul.f32 %v1130, %v1007
        %v1209 = vmul.f32 %v1133, %v1007
        %v1210 = vmul.f32 %v1136, %v1007
        %v1211 = vmul.f32 %v1139, %v1007
        %v1212 = vmul.f32 %v1142, %v1007
        %v1213 = vmul.f32 %v1145, %v1007
        %v1214 = vmul.f32 %v1148, %v1007
        %v1215 = vmul.f32 %v1151, %v1007
        %v1216 = vmul.f32 %v1154, %v1007
        %v1217 = vmul.f32 %v1157, %v1007
        %v1218 = vmul.f32 %v1160, %v1007
        %v1219 = vmul.f32 %v1163, %v1007
        %v1220 = vmul.f32 %v1166, %v1007
        %v1221 = vmul.f32 %v1169, %v1007
        %v1222 = vmul.f32 %v1172, %v1007
        %v1223 = vmul.f32 %v1175, %v1007
        %v1224 = vmul.f32 %v1178, %v1007
        %v1225 = vmul.f32 %v1181, %v1007
        %v1226 = vmul.f32 %v1184, %v1007
        %v1227 = vmul.f32 %v1187, %v1007
        %v1228 = vmul.f32 %v1190, %v1007
        %v1229 = vmul.f32 %v1193, %v1007
        %v1230 = vmul.f32 %v1196, %v1007
        %v1231 = vmul.f32 %v1199, %v1007
        %v1232 = vadd.f32 %v1200, 1e-05
        %v1233 = vadd.f32 %v1201, 1e-05
        %v1234 = vadd.f32 %v1202, 1e-05
        %v1235 = vadd.f32 %v1203, 1e-05
        %v1236 = vadd.f32 %v1204, 1e-05
        %v1237 = vadd.f32 %v1205, 1e-05
        %v1238 = vadd.f32 %v1206, 1e-05
        %v1239 = vadd.f32 %v1207, 1e-05
        %v1240 = vadd.f32 %v1208, 1e-05
        %v1241 = vadd.f32 %v1209, 1e-05
        %v1242 = vadd.f32 %v1210, 1e-05
        %v1243 = vadd.f32 %v1211, 1e-05
        %v1244 = vadd.f32 %v1212, 1e-05
        %v1245 = vadd.f32 %v1213, 1e-05
        %v1246 = vadd.f32 %v1214, 1e-05
        %v1247 = vadd.f32 %v1215, 1e-05
        %v1248 = vadd.f32 %v1216, 1e-05
        %v1249 = vadd.f32 %v1217, 1e-05
        %v1250 = vadd.f32 %v1218, 1e-05
        %v1251 = vadd.f32 %v1219, 1e-05
        %v1252 = vadd.f32 %v1220, 1e-05
        %v1253 = vadd.f32 %v1221, 1e-05
        %v1254 = vadd.f32 %v1222, 1e-05
        %v1255 = vadd.f32 %v1223, 1e-05
        %v1256 = vadd.f32 %v1224, 1e-05
        %v1257 = vadd.f32 %v1225, 1e-05
        %v1258 = vadd.f32 %v1226, 1e-05
        %v1259 = vadd.f32 %v1227, 1e-05
        %v1260 = vadd.f32 %v1228, 1e-05
        %v1261 = vadd.f32 %v1229, 1e-05
        %v1262 = vadd.f32 %v1230, 1e-05
        %v1263 = vadd.f32 %v1231, 1e-05
        %v1264 = vrsqrt.pop %v1232
        %v1265 = vrsqrt.pop %v1233
        %v1266 = vrsqrt.pop %v1234
        %v1267 = vrsqrt.pop %v1235
        %v1268 = vrsqrt.pop %v1236
        %v1269 = vrsqrt.pop %v1237
        %v1270 = vrsqrt.pop %v1238
        %v1271 = vrsqrt.pop %v1239
        %v1272 = vrsqrt.pop %v1240
        %v1273 = vrsqrt.pop %v1241
        %v1274 = vrsqrt.pop %v1242
        %v1275 = vrsqrt.pop %v1243
        %v1276 = vrsqrt.pop %v1244
        %v1277 = vrsqrt.pop %v1245
        %v1278 = vrsqrt.pop %v1246
        %v1279 = vrsqrt.pop %v1247
        %v1280 = vrsqrt.pop %v1248
        %v1281 = vrsqrt.pop %v1249
        %v1282 = vrsqrt.pop %v1250
        %v1283 = vrsqrt.pop %v1251
        %v1284 = vrsqrt.pop %v1252
        %v1285 = vrsqrt.pop %v1253
        %v1286 = vrsqrt.pop %v1254
        %v1287 = vrsqrt.pop %v1255
        %v1288 = vrsqrt.pop %v1256
        %v1289 = vrsqrt.pop %v1257
        %v1290 = vrsqrt.pop %v1258
        %v1291 = vrsqrt.pop %v1259
        %v1292 = vrsqrt.pop %v1260
        %v1293 = vrsqrt.pop %v1261
        %v1294 = vrsqrt.pop %v1262
        %v1295 = vrsqrt.pop %v1263
        %v1296 = vmul.f32 %v1040, %v1264
        %v1297 = vmul.f32 %v1041, %v1265
        %v1298 = vmul.f32 %v1042, %v1266
        %v1299 = vmul.f32 %v1043, %v1267
        %v1300 = vmul.f32 %v1044, %v1268
        %v1301 = vmul.f32 %v1045, %v1269
        %v1302 = vmul.f32 %v1046, %v1270
        %v1303 = vmul.f32 %v1047, %v1271
        %v1304 = vmul.f32 %v1048, %v1272
        %v1305 = vmul.f32 %v1049, %v1273
        %v1306 = vmul.f32 %v1050, %v1274
        %v1307 = vmul.f32 %v1051, %v1275
        %v1308 = vmul.f32 %v1052, %v1276
        %v1309 = vmul.f32 %v1053, %v1277
        %v1310 = vmul.f32 %v1054, %v1278
        %v1311 = vmul.f32 %v1055, %v1279
        %v1312 = vmul.f32 %v1056, %v1280
        %v1313 = vmul.f32 %v1057, %v1281
        %v1314 = vmul.f32 %v1058, %v1282
        %v1315 = vmul.f32 %v1059, %v1283
        %v1316 = vmul.f32 %v1060, %v1284
        %v1317 = vmul.f32 %v1061, %v1285
        %v1318 = vmul.f32 %v1062, %v1286
        %v1319 = vmul.f32 %v1063, %v1287
        %v1320 = vmul.f32 %v1064, %v1288
        %v1321 = vmul.f32 %v1065, %v1289
        %v1322 = vmul.f32 %v1066, %v1290
        %v1323 = vmul.f32 %v1067, %v1291
        %v1324 = vmul.f32 %v1068, %v1292
        %v1325 = vmul.f32 %v1069, %v1293
        %v1326 = vmul.f32 %v1070, %v1294
        %v1327 = vmul.f32 %v1071, %v1295
        %v1328 = vlaneseq
        %v1329 = vshrl.u32 %v1328, 7
        %v1330 = vsub.s32 0, %v1329
        %v1331 = vrot.slane %v908, %v1330
        %v1332 = vmul.f32 %v1296, %v1331
        %v1333 = vmul.f32 %v1297, %v1331
        %v1334 = vmul.f32 %v1298, %v1331
        %v1335 = vmul.f32 %v1299, %v1331
        %v1336 = vmul.f32 %v1300, %v1331
        %v1337 = vmul.f32 %v1301, %v1331
        %v1338 = vmul.f32 %v1302, %v1331
        %v1339 = vmul.f32 %v1303, %v1331
        %v1340 = vmul.f32 %v1304, %v1331
        %v1341 = vmul.f32 %v1305, %v1331
        %v1342 = vmul.f32 %v1306, %v1331
        %v1343 = vmul.f32 %v1307, %v1331
        %v1344 = vmul.f32 %v1308, %v1331
        %v1345 = vmul.f32 %v1309, %v1331
        %v1346 = vmul.f32 %v1310, %v1331
        %v1347 = vmul.f32 %v1311, %v1331
        %v1348 = vmul.f32 %v1312, %v1331
        %v1349 = vmul.f32 %v1313, %v1331
        %v1350 = vmul.f32 %v1314, %v1331
        %v1351 = vmul.f32 %v1315, %v1331
        %v1352 = vmul.f32 %v1316, %v1331
        %v1353 = vmul.f32 %v1317, %v1331
        %v1354 = vmul.f32 %v1318, %v1331
        %v1355 = vmul.f32 %v1319, %v1331
        %v1356 = vmul.f32 %v1320, %v1331
        %v1357 = vmul.f32 %v1321, %v1331
        %v1358 = vmul.f32 %v1322, %v1331
        %v1359 = vmul.f32 %v1323, %v1331
        %v1360 = vmul.f32 %v1324, %v1331
        %v1361 = vmul.f32 %v1325, %v1331
        %v1362 = vmul.f32 %v1326, %v1331
        %v1363 = vmul.f32 %v1327, %v1331
        %v1364 = vlaneseq
        %v1365 = vshrl.u32 %v1364, 7
        %v1366 = vsub.s32 0, %v1365
        %v1367 = vrot.slane %v909, %v1366
        %v1368 = vadd.f32 %v1332, %v1367
        %v1369 = vadd.f32 %v1333, %v1367
        %v1370 = vadd.f32 %v1334, %v1367
        %v1371 = vadd.f32 %v1335, %v1367
        %v1372 = vadd.f32 %v1336, %v1367
        %v1373 = vadd.f32 %v1337, %v1367
        %v1374 = vadd.f32 %v1338, %v1367
        %v1375 = vadd.f32 %v1339, %v1367
        %v1376 = vadd.f32 %v1340, %v1367
        %v1377 = vadd.f32 %v1341, %v1367
        %v1378 = vadd.f32 %v1342, %v1367
        %v1379 = vadd.f32 %v1343, %v1367
        %v1380 = vadd.f32 %v1344, %v1367
        %v1381 = vadd.f32 %v1345, %v1367
        %v1382 = vadd.f32 %v1346, %v1367
        %v1383 = vadd.f32 %v1347, %v1367
        %v1384 = vadd.f32 %v1348, %v1367
        %v1385 = vadd.f32 %v1349, %v1367
        %v1386 = vadd.f32 %v1350, %v1367
        %v1387 = vadd.f32 %v1351, %v1367
        %v1388 = vadd.f32 %v1352, %v1367
        %v1389 = vadd.f32 %v1353, %v1367
        %v1390 = vadd.f32 %v1354, %v1367
        %v1391 = vadd.f32 %v1355, %v1367
        %v1392 = vadd.f32 %v1356, %v1367
        %v1393 = vadd.f32 %v1357, %v1367
        %v1394 = vadd.f32 %v1358, %v1367
        %v1395 = vadd.f32 %v1359, %v1367
        %v1396 = vadd.f32 %v1360, %v1367
        %v1397 = vadd.f32 %v1361, %v1367
        %v1398 = vadd.f32 %v1362, %v1367
        %v1399 = vadd.f32 %v1363, %v1367
        %v1400 = vmax.f32 %v1368, 0.0
        %v1401 = vmax.f32 %v1369, 0.0
        %v1402 = vmax.f32 %v1370, 0.0
        %v1403 = vmax.f32 %v1371, 0.0
        %v1404 = vmax.f32 %v1372, 0.0
        %v1405 = vmax.f32 %v1373, 0.0
        %v1406 = vmax.f32 %v1374, 0.0
        %v1407 = vmax.f32 %v1375, 0.0
        %v1408 = vmax.f32 %v1376, 0.0
        %v1409 = vmax.f32 %v1377, 0.0
        %v1410 = vmax.f32 %v1378, 0.0
        %v1411 = vmax.f32 %v1379, 0.0
        %v1412 = vmax.f32 %v1380, 0.0
        %v1413 = vmax.f32 %v1381, 0.0
        %v1414 = vmax.f32 %v1382, 0.0
        %v1415 = vmax.f32 %v1383, 0.0
        %v1416 = vmax.f32 %v1384, 0.0
        %v1417 = vmax.f32 %v1385, 0.0
        %v1418 = vmax.f32 %v1386, 0.0
        %v1419 = vmax.f32 %v1387, 0.0
        %v1420 = vmax.f32 %v1388, 0.0
        %v1421 = vmax.f32 %v1389, 0.0
        %v1422 = vmax.f32 %v1390, 0.0
        %v1423 = vmax.f32 %v1391, 0.0
        %v1424 = vmax.f32 %v1392, 0.0
        %v1425 = vmax.f32 %v1393, 0.0
        %v1426 = vmax.f32 %v1394, 0.0
        %v1427 = vmax.f32 %v1395, 0.0
        %v1428 = vmax.f32 %v1396, 0.0
        %v1429 = vmax.f32 %v1397, 0.0
        %v1430 = vmax.f32 %v1398, 0.0
        %v1431 = vmax.f32 %v1399, 0.0
        %v1432 = vld [vmem:[%s5 + $0x2] sm:$0x1]
        %v1433 = vld [vmem:[%s5 + $0x3] sm:$0x1]
        %v1434 = vsel %vm910, %v750, 0.0
        %1435 = vadd.xlane.f32.xlu0 %v1434
        %v1436 = vpop.xlane.xlu0 %1435
        %v1437 = vsel %vm910, %v755, 0.0
        %1438 = vadd.xlane.f32.xlu0 %v1437
        %v1439 = vpop.xlane.xlu0 %1438
        %v1440 = vsel %vm910, %v760, 0.0
        %1441 = vadd.xlane.f32.xlu0 %v1440
        %v1442 = vpop.xlane.xlu0 %1441
        %v1443 = vsel %vm910, %v765, 0.0
        %1444 = vadd.xlane.f32.xlu0 %v1443
        %v1445 = vpop.xlane.xlu0 %1444
        %v1446 = vsel %vm910, %v770, 0.0
        %1447 = vadd.xlane.f32.xlu0 %v1446
        %v1448 = vpop.xlane.xlu0 %1447
        %v1449 = vsel %vm910, %v775, 0.0
        %1450 = vadd.xlane.f32.xlu0 %v1449
        %v1451 = vpop.xlane.xlu0 %1450
        %v1452 = vsel %vm910, %v780, 0.0
        %1453 = vadd.xlane.f32.xlu0 %v1452
        %v1454 = vpop.xlane.xlu0 %1453
        %v1455 = vsel %vm910, %v785, 0.0
        %1456 = vadd.xlane.f32.xlu0 %v1455
        %v1457 = vpop.xlane.xlu0 %1456
        %v1458 = vsel %vm910, %v790, 0.0
        %1459 = vadd.xlane.f32.xlu0 %v1458
        %v1460 = vpop.xlane.xlu0 %1459
        %v1461 = vsel %vm910, %v795, 0.0
        %1462 = vadd.xlane.f32.xlu0 %v1461
        %v1463 = vpop.xlane.xlu0 %1462
        %v1464 = vsel %vm910, %v800, 0.0
        %1465 = vadd.xlane.f32.xlu0 %v1464
        %v1466 = vpop.xlane.xlu0 %1465
        %v1467 = vsel %vm910, %v805, 0.0
        %1468 = vadd.xlane.f32.xlu0 %v1467
        %v1469 = vpop.xlane.xlu0 %1468
        %v1470 = vsel %vm910, %v810, 0.0
        %1471 = vadd.xlane.f32.xlu0 %v1470
        %v1472 = vpop.xlane.xlu0 %1471
        %v1473 = vsel %vm910, %v815, 0.0
        %1474 = vadd.xlane.f32.xlu0 %v1473
        %v1475 = vpop.xlane.xlu0 %1474
        %v1476 = vsel %vm910, %v820, 0.0
        %1477 = vadd.xlane.f32.xlu0 %v1476
        %v1478 = vpop.xlane.xlu0 %1477
        %v1479 = vsel %vm910, %v825, 0.0
        %1480 = vadd.xlane.f32.xlu0 %v1479
        %v1481 = vpop.xlane.xlu0 %1480
        %v1482 = vsel %vm910, %v830, 0.0
        %1483 = vadd.xlane.f32.xlu0 %v1482
        %v1484 = vpop.xlane.xlu0 %1483
        %v1485 = vsel %vm910, %v835, 0.0
        %1486 = vadd.xlane.f32.xlu0 %v1485
        %v1487 = vpop.xlane.xlu0 %1486
        %v1488 = vsel %vm910, %v840, 0.0
        %1489 = vadd.xlane.f32.xlu0 %v1488
        %v1490 = vpop.xlane.xlu0 %1489
        %v1491 = vsel %vm910, %v845, 0.0
        %1492 = vadd.xlane.f32.xlu0 %v1491
        %v1493 = vpop.xlane.xlu0 %1492
        %v1494 = vsel %vm910, %v850, 0.0
        %1495 = vadd.xlane.f32.xlu0 %v1494
        %v1496 = vpop.xlane.xlu0 %1495
        %v1497 = vsel %vm910, %v855, 0.0
        %1498 = vadd.xlane.f32.xlu0 %v1497
        %v1499 = vpop.xlane.xlu0 %1498
        %v1500 = vsel %vm910, %v860, 0.0
        %1501 = vadd.xlane.f32.xlu0 %v1500
        %v1502 = vpop.xlane.xlu0 %1501
        %v1503 = vsel %vm910, %v865, 0.0
        %1504 = vadd.xlane.f32.xlu0 %v1503
        %v1505 = vpop.xlane.xlu0 %1504
        %v1506 = vsel %vm910, %v870, 0.0
        %1507 = vadd.xlane.f32.xlu0 %v1506
        %v1508 = vpop.xlane.xlu0 %1507
        %v1509 = vsel %vm910, %v875, 0.0
        %1510 = vadd.xlane.f32.xlu0 %v1509
        %v1511 = vpop.xlane.xlu0 %1510
        %v1512 = vsel %vm910, %v880, 0.0
        %1513 = vadd.xlane.f32.xlu0 %v1512
        %v1514 = vpop.xlane.xlu0 %1513
        %v1515 = vsel %vm910, %v885, 0.0
        %1516 = vadd.xlane.f32.xlu0 %v1515
        %v1517 = vpop.xlane.xlu0 %1516
        %v1518 = vsel %vm910, %v890, 0.0
        %1519 = vadd.xlane.f32.xlu0 %v1518
        %v1520 = vpop.xlane.xlu0 %1519
        %v1521 = vsel %vm910, %v895, 0.0
        %1522 = vadd.xlane.f32.xlu0 %v1521
        %v1523 = vpop.xlane.xlu0 %1522
        %v1524 = vsel %vm910, %v900, 0.0
        %1525 = vadd.xlane.f32.xlu0 %v1524
        %v1526 = vpop.xlane.xlu0 %1525
        %v1527 = vsel %vm910, %v905, 0.0
        %1528 = vadd.xlane.f32.xlu0 %v1527
        %v1529 = vpop.xlane.xlu0 %1528
        %v1530 = vmul.f32 %v1436, %v1007
        %v1531 = vmul.f32 %v1439, %v1007
        %v1532 = vmul.f32 %v1442, %v1007
        %v1533 = vmul.f32 %v1445, %v1007
        %v1534 = vmul.f32 %v1448, %v1007
        %v1535 = vmul.f32 %v1451, %v1007
        %v1536 = vmul.f32 %v1454, %v1007
        %v1537 = vmul.f32 %v1457, %v1007
        %v1538 = vmul.f32 %v1460, %v1007
        %v1539 = vmul.f32 %v1463, %v1007
        %v1540 = vmul.f32 %v1466, %v1007
        %v1541 = vmul.f32 %v1469, %v1007
        %v1542 = vmul.f32 %v1472, %v1007
        %v1543 = vmul.f32 %v1475, %v1007
        %v1544 = vmul.f32 %v1478, %v1007
        %v1545 = vmul.f32 %v1481, %v1007
        %v1546 = vmul.f32 %v1484, %v1007
        %v1547 = vmul.f32 %v1487, %v1007
        %v1548 = vmul.f32 %v1490, %v1007
        %v1549 = vmul.f32 %v1493, %v1007
        %v1550 = vmul.f32 %v1496, %v1007
        %v1551 = vmul.f32 %v1499, %v1007
        %v1552 = vmul.f32 %v1502, %v1007
        %v1553 = vmul.f32 %v1505, %v1007
        %v1554 = vmul.f32 %v1508, %v1007
        %v1555 = vmul.f32 %v1511, %v1007
        %v1556 = vmul.f32 %v1514, %v1007
        %v1557 = vmul.f32 %v1517, %v1007
        %v1558 = vmul.f32 %v1520, %v1007
        %v1559 = vmul.f32 %v1523, %v1007
        %v1560 = vmul.f32 %v1526, %v1007
        %v1561 = vmul.f32 %v1529, %v1007
        %v1562 = vsub.f32 %v750, %v1530
        %v1563 = vsub.f32 %v755, %v1531
        %v1564 = vsub.f32 %v760, %v1532
        %v1565 = vsub.f32 %v765, %v1533
        %v1566 = vsub.f32 %v770, %v1534
        %v1567 = vsub.f32 %v775, %v1535
        %v1568 = vsub.f32 %v780, %v1536
        %v1569 = vsub.f32 %v785, %v1537
        %v1570 = vsub.f32 %v790, %v1538
        %v1571 = vsub.f32 %v795, %v1539
        %v1572 = vsub.f32 %v800, %v1540
        %v1573 = vsub.f32 %v805, %v1541
        %v1574 = vsub.f32 %v810, %v1542
        %v1575 = vsub.f32 %v815, %v1543
        %v1576 = vsub.f32 %v820, %v1544
        %v1577 = vsub.f32 %v825, %v1545
        %v1578 = vsub.f32 %v830, %v1546
        %v1579 = vsub.f32 %v835, %v1547
        %v1580 = vsub.f32 %v840, %v1548
        %v1581 = vsub.f32 %v845, %v1549
        %v1582 = vsub.f32 %v850, %v1550
        %v1583 = vsub.f32 %v855, %v1551
        %v1584 = vsub.f32 %v860, %v1552
        %v1585 = vsub.f32 %v865, %v1553
        %v1586 = vsub.f32 %v870, %v1554
        %v1587 = vsub.f32 %v875, %v1555
        %v1588 = vsub.f32 %v880, %v1556
        %v1589 = vsub.f32 %v885, %v1557
        %v1590 = vsub.f32 %v890, %v1558
        %v1591 = vsub.f32 %v895, %v1559
        %v1592 = vsub.f32 %v900, %v1560
        %v1593 = vsub.f32 %v905, %v1561
        %v1594 = vmul.f32 %v1562, %v1562
        %v1595 = vmul.f32 %v1563, %v1563
        %v1596 = vmul.f32 %v1564, %v1564
        %v1597 = vmul.f32 %v1565, %v1565
        %v1598 = vmul.f32 %v1566, %v1566
        %v1599 = vmul.f32 %v1567, %v1567
        %v1600 = vmul.f32 %v1568, %v1568
        %v1601 = vmul.f32 %v1569, %v1569
        %v1602 = vmul.f32 %v1570, %v1570
        %v1603 = vmul.f32 %v1571, %v1571
        %v1604 = vmul.f32 %v1572, %v1572
        %v1605 = vmul.f32 %v1573, %v1573
        %v1606 = vmul.f32 %v1574, %v1574
        %v1607 = vmul.f32 %v1575, %v1575
        %v1608 = vmul.f32 %v1576, %v1576
        %v1609 = vmul.f32 %v1577, %v1577
        %v1610 = vmul.f32 %v1578, %v1578
        %v1611 = vmul.f32 %v1579, %v1579
        %v1612 = vmul.f32 %v1580, %v1580
        %v1613 = vmul.f32 %v1581, %v1581
        %v1614 = vmul.f32 %v1582, %v1582
        %v1615 = vmul.f32 %v1583, %v1583
        %v1616 = vmul.f32 %v1584, %v1584
        %v1617 = vmul.f32 %v1585, %v1585
        %v1618 = vmul.f32 %v1586, %v1586
        %v1619 = vmul.f32 %v1587, %v1587
        %v1620 = vmul.f32 %v1588, %v1588
        %v1621 = vmul.f32 %v1589, %v1589
        %v1622 = vmul.f32 %v1590, %v1590
        %v1623 = vmul.f32 %v1591, %v1591
        %v1624 = vmul.f32 %v1592, %v1592
        %v1625 = vmul.f32 %v1593, %v1593
        %v1626 = vsel %vm910, %v1594, 0.0
        %1627 = vadd.xlane.f32.xlu0 %v1626
        %v1628 = vpop.xlane.xlu0 %1627
        %v1629 = vsel %vm910, %v1595, 0.0
        %1630 = vadd.xlane.f32.xlu0 %v1629
        %v1631 = vpop.xlane.xlu0 %1630
        %v1632 = vsel %vm910, %v1596, 0.0
        %1633 = vadd.xlane.f32.xlu0 %v1632
        %v1634 = vpop.xlane.xlu0 %1633
        %v1635 = vsel %vm910, %v1597, 0.0
        %1636 = vadd.xlane.f32.xlu0 %v1635
        %v1637 = vpop.xlane.xlu0 %1636
        %v1638 = vsel %vm910, %v1598, 0.0
        %1639 = vadd.xlane.f32.xlu0 %v1638
        %v1640 = vpop.xlane.xlu0 %1639
        %v1641 = vsel %vm910, %v1599, 0.0
        %1642 = vadd.xlane.f32.xlu0 %v1641
        %v1643 = vpop.xlane.xlu0 %1642
        %v1644 = vsel %vm910, %v1600, 0.0
        %1645 = vadd.xlane.f32.xlu0 %v1644
        %v1646 = vpop.xlane.xlu0 %1645
        %v1647 = vsel %vm910, %v1601, 0.0
        %1648 = vadd.xlane.f32.xlu0 %v1647
        %v1649 = vpop.xlane.xlu0 %1648
        %v1650 = vsel %vm910, %v1602, 0.0
        %1651 = vadd.xlane.f32.xlu0 %v1650
        %v1652 = vpop.xlane.xlu0 %1651
        %v1653 = vsel %vm910, %v1603, 0.0
        %1654 = vadd.xlane.f32.xlu0 %v1653
        %v1655 = vpop.xlane.xlu0 %1654
        %v1656 = vsel %vm910, %v1604, 0.0
        %1657 = vadd.xlane.f32.xlu0 %v1656
        %v1658 = vpop.xlane.xlu0 %1657
        %v1659 = vsel %vm910, %v1605, 0.0
        %1660 = vadd.xlane.f32.xlu0 %v1659
        %v1661 = vpop.xlane.xlu0 %1660
        %v1662 = vsel %vm910, %v1606, 0.0
        %1663 = vadd.xlane.f32.xlu0 %v1662
        %v1664 = vpop.xlane.xlu0 %1663
        %v1665 = vsel %vm910, %v1607, 0.0
        %1666 = vadd.xlane.f32.xlu0 %v1665
        %v1667 = vpop.xlane.xlu0 %1666
        %v1668 = vsel %vm910, %v1608, 0.0
        %1669 = vadd.xlane.f32.xlu0 %v1668
        %v1670 = vpop.xlane.xlu0 %1669
        %v1671 = vsel %vm910, %v1609, 0.0
        %1672 = vadd.xlane.f32.xlu0 %v1671
        %v1673 = vpop.xlane.xlu0 %1672
        %v1674 = vsel %vm910, %v1610, 0.0
        %1675 = vadd.xlane.f32.xlu0 %v1674
        %v1676 = vpop.xlane.xlu0 %1675
        %v1677 = vsel %vm910, %v1611, 0.0
        %1678 = vadd.xlane.f32.xlu0 %v1677
        %v1679 = vpop.xlane.xlu0 %1678
        %v1680 = vsel %vm910, %v1612, 0.0
        %1681 = vadd.xlane.f32.xlu0 %v1680
        %v1682 = vpop.xlane.xlu0 %1681
        %v1683 = vsel %vm910, %v1613, 0.0
        %1684 = vadd.xlane.f32.xlu0 %v1683
        %v1685 = vpop.xlane.xlu0 %1684
        %v1686 = vsel %vm910, %v1614, 0.0
        %1687 = vadd.xlane.f32.xlu0 %v1686
        %v1688 = vpop.xlane.xlu0 %1687
        %v1689 = vsel %vm910, %v1615, 0.0
        %1690 = vadd.xlane.f32.xlu0 %v1689
        %v1691 = vpop.xlane.xlu0 %1690
        %v1692 = vsel %vm910, %v1616, 0.0
        %1693 = vadd.xlane.f32.xlu0 %v1692
        %v1694 = vpop.xlane.xlu0 %1693
        %v1695 = vsel %vm910, %v1617, 0.0
        %1696 = vadd.xlane.f32.xlu0 %v1695
        %v1697 = vpop.xlane.xlu0 %1696
        %v1698 = vsel %vm910, %v1618, 0.0
        %1699 = vadd.xlane.f32.xlu0 %v1698
        %v1700 = vpop.xlane.xlu0 %1699
        %v1701 = vsel %vm910, %v1619, 0.0
        %1702 = vadd.xlane.f32.xlu0 %v1701
        %v1703 = vpop.xlane.xlu0 %1702
        %v1704 = vsel %vm910, %v1620, 0.0
        %1705 = vadd.xlane.f32.xlu0 %v1704
        %v1706 = vpop.xlane.xlu0 %1705
        %v1707 = vsel %vm910, %v1621, 0.0
        %1708 = vadd.xlane.f32.xlu0 %v1707
        %v1709 = vpop.xlane.xlu0 %1708
        %v1710 = vsel %vm910, %v1622, 0.0
        %1711 = vadd.xlane.f32.xlu0 %v1710
        %v1712 = vpop.xlane.xlu0 %1711
        %v1713 = vsel %vm910, %v1623, 0.0
        %1714 = vadd.xlane.f32.xlu0 %v1713
        %v1715 = vpop.xlane.xlu0 %1714
        %v1716 = vsel %vm910, %v1624, 0.0
        %1717 = vadd.xlane.f32.xlu0 %v1716
        %v1718 = vpop.xlane.xlu0 %1717
        %v1719 = vsel %vm910, %v1625, 0.0
        %1720 = vadd.xlane.f32.xlu0 %v1719
        %v1721 = vpop.xlane.xlu0 %1720
        %v1722 = vmul.f32 %v1628, %v1007
        %v1723 = vmul.f32 %v1631, %v1007
        %v1724 = vmul.f32 %v1634, %v1007
        %v1725 = vmul.f32 %v1637, %v1007
        %v1726 = vmul.f32 %v1640, %v1007
        %v1727 = vmul.f32 %v1643, %v1007
        %v1728 = vmul.f32 %v1646, %v1007
        %v1729 = vmul.f32 %v1649, %v1007
        %v1730 = vmul.f32 %v1652, %v1007
        %v1731 = vmul.f32 %v1655, %v1007
        %v1732 = vmul.f32 %v1658, %v1007
        %v1733 = vmul.f32 %v1661, %v1007
        %v1734 = vmul.f32 %v1664, %v1007
        %v1735 = vmul.f32 %v1667, %v1007
        %v1736 = vmul.f32 %v1670, %v1007
        %v1737 = vmul.f32 %v1673, %v1007
        %v1738 = vmul.f32 %v1676, %v1007
        %v1739 = vmul.f32 %v1679, %v1007
        %v1740 = vmul.f32 %v1682, %v1007
        %v1741 = vmul.f32 %v1685, %v1007
        %v1742 = vmul.f32 %v1688, %v1007
        %v1743 = vmul.f32 %v1691, %v1007
        %v1744 = vmul.f32 %v1694, %v1007
        %v1745 = vmul.f32 %v1697, %v1007
        %v1746 = vmul.f32 %v1700, %v1007
        %v1747 = vmul.f32 %v1703, %v1007
        %v1748 = vmul.f32 %v1706, %v1007
        %v1749 = vmul.f32 %v1709, %v1007
        %v1750 = vmul.f32 %v1712, %v1007
        %v1751 = vmul.f32 %v1715, %v1007
        %v1752 = vmul.f32 %v1718, %v1007
        %v1753 = vmul.f32 %v1721, %v1007
        %v1754 = vadd.f32 %v1722, 1e-05
        %v1755 = vadd.f32 %v1723, 1e-05
        %v1756 = vadd.f32 %v1724, 1e-05
        %v1757 = vadd.f32 %v1725, 1e-05
        %v1758 = vadd.f32 %v1726, 1e-05
        %v1759 = vadd.f32 %v1727, 1e-05
        %v1760 = vadd.f32 %v1728, 1e-05
        %v1761 = vadd.f32 %v1729, 1e-05
        %v1762 = vadd.f32 %v1730, 1e-05
        %v1763 = vadd.f32 %v1731, 1e-05
        %v1764 = vadd.f32 %v1732, 1e-05
        %v1765 = vadd.f32 %v1733, 1e-05
        %v1766 = vadd.f32 %v1734, 1e-05
        %v1767 = vadd.f32 %v1735, 1e-05
        %v1768 = vadd.f32 %v1736, 1e-05
        %v1769 = vadd.f32 %v1737, 1e-05
        %v1770 = vadd.f32 %v1738, 1e-05
        %v1771 = vadd.f32 %v1739, 1e-05
        %v1772 = vadd.f32 %v1740, 1e-05
        %v1773 = vadd.f32 %v1741, 1e-05
        %v1774 = vadd.f32 %v1742, 1e-05
        %v1775 = vadd.f32 %v1743, 1e-05
        %v1776 = vadd.f32 %v1744, 1e-05
        %v1777 = vadd.f32 %v1745, 1e-05
        %v1778 = vadd.f32 %v1746, 1e-05
        %v1779 = vadd.f32 %v1747, 1e-05
        %v1780 = vadd.f32 %v1748, 1e-05
        %v1781 = vadd.f32 %v1749, 1e-05
        %v1782 = vadd.f32 %v1750, 1e-05
        %v1783 = vadd.f32 %v1751, 1e-05
        %v1784 = vadd.f32 %v1752, 1e-05
        %v1785 = vadd.f32 %v1753, 1e-05
        %v1786 = vrsqrt.pop %v1754
        %v1787 = vrsqrt.pop %v1755
        %v1788 = vrsqrt.pop %v1756
        %v1789 = vrsqrt.pop %v1757
        %v1790 = vrsqrt.pop %v1758
        %v1791 = vrsqrt.pop %v1759
        %v1792 = vrsqrt.pop %v1760
        %v1793 = vrsqrt.pop %v1761
        %v1794 = vrsqrt.pop %v1762
        %v1795 = vrsqrt.pop %v1763
        %v1796 = vrsqrt.pop %v1764
        %v1797 = vrsqrt.pop %v1765
        %v1798 = vrsqrt.pop %v1766
        %v1799 = vrsqrt.pop %v1767
        %v1800 = vrsqrt.pop %v1768
        %v1801 = vrsqrt.pop %v1769
        %v1802 = vrsqrt.pop %v1770
        %v1803 = vrsqrt.pop %v1771
        %v1804 = vrsqrt.pop %v1772
        %v1805 = vrsqrt.pop %v1773
        %v1806 = vrsqrt.pop %v1774
        %v1807 = vrsqrt.pop %v1775
        %v1808 = vrsqrt.pop %v1776
        %v1809 = vrsqrt.pop %v1777
        %v1810 = vrsqrt.pop %v1778
        %v1811 = vrsqrt.pop %v1779
        %v1812 = vrsqrt.pop %v1780
        %v1813 = vrsqrt.pop %v1781
        %v1814 = vrsqrt.pop %v1782
        %v1815 = vrsqrt.pop %v1783
        %v1816 = vrsqrt.pop %v1784
        %v1817 = vrsqrt.pop %v1785
        %v1818 = vmul.f32 %v1562, %v1786
        %v1819 = vmul.f32 %v1563, %v1787
        %v1820 = vmul.f32 %v1564, %v1788
        %v1821 = vmul.f32 %v1565, %v1789
        %v1822 = vmul.f32 %v1566, %v1790
        %v1823 = vmul.f32 %v1567, %v1791
        %v1824 = vmul.f32 %v1568, %v1792
        %v1825 = vmul.f32 %v1569, %v1793
        %v1826 = vmul.f32 %v1570, %v1794
        %v1827 = vmul.f32 %v1571, %v1795
        %v1828 = vmul.f32 %v1572, %v1796
        %v1829 = vmul.f32 %v1573, %v1797
        %v1830 = vmul.f32 %v1574, %v1798
        %v1831 = vmul.f32 %v1575, %v1799
        %v1832 = vmul.f32 %v1576, %v1800
        %v1833 = vmul.f32 %v1577, %v1801
        %v1834 = vmul.f32 %v1578, %v1802
        %v1835 = vmul.f32 %v1579, %v1803
        %v1836 = vmul.f32 %v1580, %v1804
        %v1837 = vmul.f32 %v1581, %v1805
        %v1838 = vmul.f32 %v1582, %v1806
        %v1839 = vmul.f32 %v1583, %v1807
        %v1840 = vmul.f32 %v1584, %v1808
        %v1841 = vmul.f32 %v1585, %v1809
        %v1842 = vmul.f32 %v1586, %v1810
        %v1843 = vmul.f32 %v1587, %v1811
        %v1844 = vmul.f32 %v1588, %v1812
        %v1845 = vmul.f32 %v1589, %v1813
        %v1846 = vmul.f32 %v1590, %v1814
        %v1847 = vmul.f32 %v1591, %v1815
        %v1848 = vmul.f32 %v1592, %v1816
        %v1849 = vmul.f32 %v1593, %v1817
        %v1850 = vlaneseq
        %v1851 = vshrl.u32 %v1850, 7
        %v1852 = vsub.s32 0, %v1851
        %v1853 = vrot.slane %v1432, %v1852
        %v1854 = vmul.f32 %v1818, %v1853
        %v1855 = vmul.f32 %v1819, %v1853
        %v1856 = vmul.f32 %v1820, %v1853
        %v1857 = vmul.f32 %v1821, %v1853
        %v1858 = vmul.f32 %v1822, %v1853
        %v1859 = vmul.f32 %v1823, %v1853
        %v1860 = vmul.f32 %v1824, %v1853
        %v1861 = vmul.f32 %v1825, %v1853
        %v1862 = vmul.f32 %v1826, %v1853
        %v1863 = vmul.f32 %v1827, %v1853
        %v1864 = vmul.f32 %v1828, %v1853
        %v1865 = vmul.f32 %v1829, %v1853
        %v1866 = vmul.f32 %v1830, %v1853
        %v1867 = vmul.f32 %v1831, %v1853
        %v1868 = vmul.f32 %v1832, %v1853
        %v1869 = vmul.f32 %v1833, %v1853
        %v1870 = vmul.f32 %v1834, %v1853
        %v1871 = vmul.f32 %v1835, %v1853
        %v1872 = vmul.f32 %v1836, %v1853
        %v1873 = vmul.f32 %v1837, %v1853
        %v1874 = vmul.f32 %v1838, %v1853
        %v1875 = vmul.f32 %v1839, %v1853
        %v1876 = vmul.f32 %v1840, %v1853
        %v1877 = vmul.f32 %v1841, %v1853
        %v1878 = vmul.f32 %v1842, %v1853
        %v1879 = vmul.f32 %v1843, %v1853
        %v1880 = vmul.f32 %v1844, %v1853
        %v1881 = vmul.f32 %v1845, %v1853
        %v1882 = vmul.f32 %v1846, %v1853
        %v1883 = vmul.f32 %v1847, %v1853
        %v1884 = vmul.f32 %v1848, %v1853
        %v1885 = vmul.f32 %v1849, %v1853
        %v1886 = vlaneseq
        %v1887 = vshrl.u32 %v1886, 7
        %v1888 = vsub.s32 0, %v1887
        %v1889 = vrot.slane %v1433, %v1888
        %v1890 = vadd.f32 %v1854, %v1889
        %v1891 = vadd.f32 %v1855, %v1889
        %v1892 = vadd.f32 %v1856, %v1889
        %v1893 = vadd.f32 %v1857, %v1889
        %v1894 = vadd.f32 %v1858, %v1889
        %v1895 = vadd.f32 %v1859, %v1889
        %v1896 = vadd.f32 %v1860, %v1889
        %v1897 = vadd.f32 %v1861, %v1889
        %v1898 = vadd.f32 %v1862, %v1889
        %v1899 = vadd.f32 %v1863, %v1889
        %v1900 = vadd.f32 %v1864, %v1889
        %v1901 = vadd.f32 %v1865, %v1889
        %v1902 = vadd.f32 %v1866, %v1889
        %v1903 = vadd.f32 %v1867, %v1889
        %v1904 = vadd.f32 %v1868, %v1889
        %v1905 = vadd.f32 %v1869, %v1889
        %v1906 = vadd.f32 %v1870, %v1889
        %v1907 = vadd.f32 %v1871, %v1889
        %v1908 = vadd.f32 %v1872, %v1889
        %v1909 = vadd.f32 %v1873, %v1889
        %v1910 = vadd.f32 %v1874, %v1889
        %v1911 = vadd.f32 %v1875, %v1889
        %v1912 = vadd.f32 %v1876, %v1889
        %v1913 = vadd.f32 %v1877, %v1889
        %v1914 = vadd.f32 %v1878, %v1889
        %v1915 = vadd.f32 %v1879, %v1889
        %v1916 = vadd.f32 %v1880, %v1889
        %v1917 = vadd.f32 %v1881, %v1889
        %v1918 = vadd.f32 %v1882, %v1889
        %v1919 = vadd.f32 %v1883, %v1889
        %v1920 = vadd.f32 %v1884, %v1889
        %v1921 = vadd.f32 %v1885, %v1889
        %v1922 = vmax.f32 %v1890, 0.0
        %v1923 = vmax.f32 %v1891, 0.0
        %v1924 = vmax.f32 %v1892, 0.0
        %v1925 = vmax.f32 %v1893, 0.0
        %v1926 = vmax.f32 %v1894, 0.0
        %v1927 = vmax.f32 %v1895, 0.0
        %v1928 = vmax.f32 %v1896, 0.0
        %v1929 = vmax.f32 %v1897, 0.0
        %v1930 = vmax.f32 %v1898, 0.0
        %v1931 = vmax.f32 %v1899, 0.0
        %v1932 = vmax.f32 %v1900, 0.0
        %v1933 = vmax.f32 %v1901, 0.0
        %v1934 = vmax.f32 %v1902, 0.0
        %v1935 = vmax.f32 %v1903, 0.0
        %v1936 = vmax.f32 %v1904, 0.0
        %v1937 = vmax.f32 %v1905, 0.0
        %v1938 = vmax.f32 %v1906, 0.0
        %v1939 = vmax.f32 %v1907, 0.0
        %v1940 = vmax.f32 %v1908, 0.0
        %v1941 = vmax.f32 %v1909, 0.0
        %v1942 = vmax.f32 %v1910, 0.0
        %v1943 = vmax.f32 %v1911, 0.0
        %v1944 = vmax.f32 %v1912, 0.0
        %v1945 = vmax.f32 %v1913, 0.0
        %v1946 = vmax.f32 %v1914, 0.0
        %v1947 = vmax.f32 %v1915, 0.0
        %v1948 = vmax.f32 %v1916, 0.0
        %v1949 = vmax.f32 %v1917, 0.0
        %v1950 = vmax.f32 %v1918, 0.0
        %v1951 = vmax.f32 %v1919, 0.0
        %v1952 = vmax.f32 %v1920, 0.0
        %v1953 = vmax.f32 %v1921, 0.0
        %v1954 = vmul.f32 %v1400, 0.17677669
        %v1955 = vmul.f32 %v1401, 0.17677669
        %v1956 = vmul.f32 %v1402, 0.17677669
        %v1957 = vmul.f32 %v1403, 0.17677669
        %v1958 = vmul.f32 %v1404, 0.17677669
        %v1959 = vmul.f32 %v1405, 0.17677669
        %v1960 = vmul.f32 %v1406, 0.17677669
        %v1961 = vmul.f32 %v1407, 0.17677669
        %v1962 = vmul.f32 %v1408, 0.17677669
        %v1963 = vmul.f32 %v1409, 0.17677669
        %v1964 = vmul.f32 %v1410, 0.17677669
        %v1965 = vmul.f32 %v1411, 0.17677669
        %v1966 = vmul.f32 %v1412, 0.17677669
        %v1967 = vmul.f32 %v1413, 0.17677669
        %v1968 = vmul.f32 %v1414, 0.17677669
        %v1969 = vmul.f32 %v1415, 0.17677669
        %v1970 = vmul.f32 %v1416, 0.17677669
        %v1971 = vmul.f32 %v1417, 0.17677669
        %v1972 = vmul.f32 %v1418, 0.17677669
        %v1973 = vmul.f32 %v1419, 0.17677669
        %v1974 = vmul.f32 %v1420, 0.17677669
        %v1975 = vmul.f32 %v1421, 0.17677669
        %v1976 = vmul.f32 %v1422, 0.17677669
        %v1977 = vmul.f32 %v1423, 0.17677669
        %v1978 = vmul.f32 %v1424, 0.17677669
        %v1979 = vmul.f32 %v1425, 0.17677669
        %v1980 = vmul.f32 %v1426, 0.17677669
        %v1981 = vmul.f32 %v1427, 0.17677669
        %v1982 = vmul.f32 %v1428, 0.17677669
        %v1983 = vmul.f32 %v1429, 0.17677669
        %v1984 = vmul.f32 %v1430, 0.17677669
        %v1985 = vmul.f32 %v1431, 0.17677669
        %v1987 = vsel %vm910, %v1954, 0
        %v1990 = vsel %vm910, %v1955, 0
        %v1993 = vsel %vm910, %v1956, 0
        %v1996 = vsel %vm910, %v1957, 0
        %v1999 = vsel %vm910, %v1958, 0
        %v2002 = vsel %vm910, %v1959, 0
        %v2005 = vsel %vm910, %v1960, 0
        %v2008 = vsel %vm910, %v1961, 0
        %v2011 = vsel %vm910, %v1962, 0
        %v2014 = vsel %vm910, %v1963, 0
        %v2017 = vsel %vm910, %v1964, 0
        %v2020 = vsel %vm910, %v1965, 0
        %v2023 = vsel %vm910, %v1966, 0
        %v2026 = vsel %vm910, %v1967, 0
        %v2029 = vsel %vm910, %v1968, 0
        %v2032 = vsel %vm910, %v1969, 0
        %v2035 = vsel %vm910, %v1970, 0
        %v2038 = vsel %vm910, %v1971, 0
        %v2041 = vsel %vm910, %v1972, 0
        %v2044 = vsel %vm910, %v1973, 0
        %v2047 = vsel %vm910, %v1974, 0
        %v2050 = vsel %vm910, %v1975, 0
        %v2053 = vsel %vm910, %v1976, 0
        %v2056 = vsel %vm910, %v1977, 0
        %v2059 = vsel %vm910, %v1978, 0
        %v2062 = vsel %vm910, %v1979, 0
        %v2065 = vsel %vm910, %v1980, 0
        %v2068 = vsel %vm910, %v1981, 0
        %v2071 = vsel %vm910, %v1982, 0
        %v2074 = vsel %vm910, %v1983, 0
        %v2077 = vsel %vm910, %v1984, 0
        %v2080 = vsel %vm910, %v1985, 0
        %v2083 = vsel %vm910, %v1400, 0
        %v2086 = vsel %vm910, %v1401, 0
        %v2089 = vsel %vm910, %v1402, 0
        %v2092 = vsel %vm910, %v1403, 0
        %v2095 = vsel %vm910, %v1404, 0
        %v2098 = vsel %vm910, %v1405, 0
        %v2101 = vsel %vm910, %v1406, 0
        %v2104 = vsel %vm910, %v1407, 0
        %v2107 = vsel %vm910, %v1408, 0
        %v2110 = vsel %vm910, %v1409, 0
        %v2113 = vsel %vm910, %v1410, 0
        %v2116 = vsel %vm910, %v1411, 0
        %v2119 = vsel %vm910, %v1412, 0
        %v2122 = vsel %vm910, %v1413, 0
        %v2125 = vsel %vm910, %v1414, 0
        %v2128 = vsel %vm910, %v1415, 0
        %v2131 = vsel %vm910, %v1416, 0
        %v2134 = vsel %vm910, %v1417, 0
        %v2137 = vsel %vm910, %v1418, 0
        %v2140 = vsel %vm910, %v1419, 0
        %v2143 = vsel %vm910, %v1420, 0
        %v2146 = vsel %vm910, %v1421, 0
        %v2149 = vsel %vm910, %v1422, 0
        %v2152 = vsel %vm910, %v1423, 0
        %v2155 = vsel %vm910, %v1424, 0
        %v2158 = vsel %vm910, %v1425, 0
        %v2161 = vsel %vm910, %v1426, 0
        %v2164 = vsel %vm910, %v1427, 0
        %v2167 = vsel %vm910, %v1428, 0
        %v2170 = vsel %vm910, %v1429, 0
        %v2173 = vsel %vm910, %v1430, 0
        %v2176 = vsel %vm910, %v1431, 0
        %2178 = vmatprep.subr.mxu0 0.0
        %2179 = vmatpush1.xpose.msra.mxu0 %v2128
        %2180 = vmatprep.subr.mxu0 0.0
        %2181 = vmatpush1.xpose.msra.mxu0 %v2125
        %2182 = vmatprep.subr.mxu0 0.0
        %2183 = vmatpush1.xpose.msra.mxu0 %v2122
        %2184 = vmatprep.subr.mxu0 0.0
        %2185 = vmatpush1.xpose.msra.mxu0 %v2119
        %2186 = vmatprep.subr.mxu0 0.0
        %2187 = vmatpush1.xpose.msra.mxu0 %v2116
        %2188 = vmatprep.subr.mxu0 0.0
        %2189 = vmatpush1.xpose.msra.mxu0 %v2113
        %2190 = vmatprep.subr.mxu0 0.0
        %2191 = vmatpush1.xpose.msra.mxu0 %v2110
        %2192 = vmatprep.subr.mxu0 0.0
        %2193 = vmatpush1.xpose.msra.mxu0 %v2107
        %2194 = vmatprep.subr.mxu0 0.0
        %2195 = vmatpush1.xpose.msra.mxu0 %v2104
        %2196 = vmatprep.subr.mxu0 0.0
        %2197 = vmatpush1.xpose.msra.mxu0 %v2101
        %2198 = vmatprep.subr.mxu0 0.0
        %2199 = vmatpush1.xpose.msra.mxu0 %v2098
        %2200 = vmatprep.subr.mxu0 0.0
        %2201 = vmatpush1.xpose.msra.mxu0 %v2095
        %2202 = vmatprep.subr.mxu0 0.0
        %2203 = vmatpush1.xpose.msra.mxu0 %v2092
        %2204 = vmatprep.subr.mxu0 0.0
        %2205 = vmatpush1.xpose.msra.mxu0 %v2089
        %2206 = vmatprep.subr.mxu0 0.0
        %2207 = vmatpush1.xpose.msra.mxu0 %v2086
        %2208 = vmatprep.subr.mxu0 0.0
        %2209 = vmatpush1.xpose.msra.mxu0 %v2083
        %2210 = vmatprep.subr.mxu0 0.0
        %2211 = vmatpush2.xpose.msra.mxu0 %v2176
        %2212 = vmatprep.subr.mxu0 0.0
        %2213 = vmatpush2.xpose.msra.mxu0 %v2173
        %2214 = vmatprep.subr.mxu0 0.0
        %2215 = vmatpush2.xpose.msra.mxu0 %v2170
        %2216 = vmatprep.subr.mxu0 0.0
        %2217 = vmatpush2.xpose.msra.mxu0 %v2167
        %2218 = vmatprep.subr.mxu0 0.0
        %2219 = vmatpush2.xpose.msra.mxu0 %v2164
        %2220 = vmatprep.subr.mxu0 0.0
        %2221 = vmatpush2.xpose.msra.mxu0 %v2161
        %2222 = vmatprep.subr.mxu0 0.0
        %2223 = vmatpush2.xpose.msra.mxu0 %v2158
        %2224 = vmatprep.subr.mxu0 0.0
        %2225 = vmatpush2.xpose.msra.mxu0 %v2155
        %2226 = vmatprep.subr.mxu0 0.0
        %2227 = vmatpush2.xpose.msra.mxu0 %v2152
        %2228 = vmatprep.subr.mxu0 0.0
        %2229 = vmatpush2.xpose.msra.mxu0 %v2149
        %2230 = vmatprep.subr.mxu0 0.0
        %2231 = vmatpush2.xpose.msra.mxu0 %v2146
        %2232 = vmatprep.subr.mxu0 0.0
        %2233 = vmatpush2.xpose.msra.mxu0 %v2143
        %2234 = vmatprep.subr.mxu0 0.0
        %2235 = vmatpush2.xpose.msra.mxu0 %v2140
        %2236 = vmatprep.subr.mxu0 0.0
        %2237 = vmatpush2.xpose.msra.mxu0 %v2137
        %2238 = vmatprep.subr.mxu0 0.0
        %2239 = vmatpush2.xpose.msra.mxu0 %v2134
        %2240 = vmatprep.subr.mxu0 0.0
        %2241 = vmatpush2.xpose.msra.mxu0 %v2131
        %2242 = vmatprep.mubr.f32.mxu0 0.0
        %2243 = vmatmul.mubr.f32.gmra.mxu0 %v1987
        %v2244 = vpop.f32.mrf.mxu0
        %v2245 = vadd.f32 0.0, %v2244
        %v2246 = vpop.f32.mrf.mxu0
        %v2247 = vadd.f32 0.0, %v2246
        %2248 = vmatprep.mubr.f32.mxu0 0.0
        %2249 = vmatmul.mubr.f32.gmra.mxu0 %v1990
        %v2250 = vpop.f32.mrf.mxu0
        %v2251 = vadd.f32 0.0, %v2250
        %v2252 = vpop.f32.mrf.mxu0
        %v2253 = vadd.f32 0.0, %v2252
        %2254 = vmatprep.mubr.f32.mxu0 0.0
        %2255 = vmatmul.mubr.f32.gmra.mxu0 %v1993
        %v2256 = vpop.f32.mrf.mxu0
        %v2257 = vadd.f32 0.0, %v2256
        %v2258 = vpop.f32.mrf.mxu0
        %v2259 = vadd.f32 0.0, %v2258
        %2260 = vmatprep.mubr.f32.mxu0 0.0
        %2261 = vmatmul.mubr.f32.gmra.mxu0 %v1996
        %v2262 = vpop.f32.mrf.mxu0
        %v2263 = vadd.f32 0.0, %v2262
        %v2264 = vpop.f32.mrf.mxu0
        %v2265 = vadd.f32 0.0, %v2264
        %2266 = vmatprep.mubr.f32.mxu0 0.0
        %2267 = vmatmul.mubr.f32.gmra.mxu0 %v1999
        %v2268 = vpop.f32.mrf.mxu0
        %v2269 = vadd.f32 0.0, %v2268
        %v2270 = vpop.f32.mrf.mxu0
        %v2271 = vadd.f32 0.0, %v2270
        %2272 = vmatprep.mubr.f32.mxu0 0.0
        %2273 = vmatmul.mubr.f32.gmra.mxu0 %v2002
        %v2274 = vpop.f32.mrf.mxu0
        %v2275 = vadd.f32 0.0, %v2274
        %v2276 = vpop.f32.mrf.mxu0
        %v2277 = vadd.f32 0.0, %v2276
        %2278 = vmatprep.mubr.f32.mxu0 0.0
        %2279 = vmatmul.mubr.f32.gmra.mxu0 %v2005
        %v2280 = vpop.f32.mrf.mxu0
        %v2281 = vadd.f32 0.0, %v2280
        %v2282 = vpop.f32.mrf.mxu0
        %v2283 = vadd.f32 0.0, %v2282
        %2284 = vmatprep.mubr.f32.mxu0 0.0
        %2285 = vmatmul.mubr.f32.gmra.mxu0 %v2008
        %v2286 = vpop.f32.mrf.mxu0
        %v2287 = vadd.f32 0.0, %v2286
        %v2288 = vpop.f32.mrf.mxu0
        %v2289 = vadd.f32 0.0, %v2288
        %2290 = vmatprep.mubr.f32.mxu0 0.0
        %2291 = vmatmul.mubr.f32.gmra.mxu0 %v2011
        %v2292 = vpop.f32.mrf.mxu0
        %v2293 = vadd.f32 0.0, %v2292
        %v2294 = vpop.f32.mrf.mxu0
        %v2295 = vadd.f32 0.0, %v2294
        %2296 = vmatprep.mubr.f32.mxu0 0.0
        %2297 = vmatmul.mubr.f32.gmra.mxu0 %v2014
        %v2298 = vpop.f32.mrf.mxu0
        %v2299 = vadd.f32 0.0, %v2298
        %v2300 = vpop.f32.mrf.mxu0
        %v2301 = vadd.f32 0.0, %v2300
        %2302 = vmatprep.mubr.f32.mxu0 0.0
        %2303 = vmatmul.mubr.f32.gmra.mxu0 %v2017
        %v2304 = vpop.f32.mrf.mxu0
        %v2305 = vadd.f32 0.0, %v2304
        %v2306 = vpop.f32.mrf.mxu0
        %v2307 = vadd.f32 0.0, %v2306
        %2308 = vmatprep.mubr.f32.mxu0 0.0
        %2309 = vmatmul.mubr.f32.gmra.mxu0 %v2020
        %v2310 = vpop.f32.mrf.mxu0
        %v2311 = vadd.f32 0.0, %v2310
        %v2312 = vpop.f32.mrf.mxu0
        %v2313 = vadd.f32 0.0, %v2312
        %2314 = vmatprep.mubr.f32.mxu0 0.0
        %2315 = vmatmul.mubr.f32.gmra.mxu0 %v2023
        %v2316 = vpop.f32.mrf.mxu0
        %v2317 = vadd.f32 0.0, %v2316
        %v2318 = vpop.f32.mrf.mxu0
        %v2319 = vadd.f32 0.0, %v2318
        %2320 = vmatprep.mubr.f32.mxu0 0.0
        %2321 = vmatmul.mubr.f32.gmra.mxu0 %v2026
        %v2322 = vpop.f32.mrf.mxu0
        %v2323 = vadd.f32 0.0, %v2322
        %v2324 = vpop.f32.mrf.mxu0
        %v2325 = vadd.f32 0.0, %v2324
        %2326 = vmatprep.mubr.f32.mxu0 0.0
        %2327 = vmatmul.mubr.f32.gmra.mxu0 %v2029
        %v2328 = vpop.f32.mrf.mxu0
        %v2329 = vadd.f32 0.0, %v2328
        %v2330 = vpop.f32.mrf.mxu0
        %v2331 = vadd.f32 0.0, %v2330
        %2332 = vmatprep.mubr.f32.mxu0 0.0
        %2333 = vmatmul.mubr.f32.gmra.mxu0 %v2032
        %v2334 = vpop.f32.mrf.mxu0
        %v2335 = vadd.f32 0.0, %v2334
        %v2336 = vpop.f32.mrf.mxu0
        %v2337 = vadd.f32 0.0, %v2336
        %2338 = vmatprep.mubr.f32.mxu0 0.0
        %2339 = vmatmul.mubr.f32.gmra.mxu0 %v2035
        %v2340 = vpop.f32.mrf.mxu0
        %v2341 = vadd.f32 0.0, %v2340
        %v2342 = vpop.f32.mrf.mxu0
        %v2343 = vadd.f32 0.0, %v2342
        %2344 = vmatprep.mubr.f32.mxu0 0.0
        %2345 = vmatmul.mubr.f32.gmra.mxu0 %v2038
        %v2346 = vpop.f32.mrf.mxu0
        %v2347 = vadd.f32 0.0, %v2346
        %v2348 = vpop.f32.mrf.mxu0
        %v2349 = vadd.f32 0.0, %v2348
        %2350 = vmatprep.mubr.f32.mxu0 0.0
        %2351 = vmatmul.mubr.f32.gmra.mxu0 %v2041
        %v2352 = vpop.f32.mrf.mxu0
        %v2353 = vadd.f32 0.0, %v2352
        %v2354 = vpop.f32.mrf.mxu0
        %v2355 = vadd.f32 0.0, %v2354
        %2356 = vmatprep.mubr.f32.mxu0 0.0
        %2357 = vmatmul.mubr.f32.gmra.mxu0 %v2044
        %v2358 = vpop.f32.mrf.mxu0
        %v2359 = vadd.f32 0.0, %v2358
        %v2360 = vpop.f32.mrf.mxu0
        %v2361 = vadd.f32 0.0, %v2360
        %2362 = vmatprep.mubr.f32.mxu0 0.0
        %2363 = vmatmul.mubr.f32.gmra.mxu0 %v2047
        %v2364 = vpop.f32.mrf.mxu0
        %v2365 = vadd.f32 0.0, %v2364
        %v2366 = vpop.f32.mrf.mxu0
        %v2367 = vadd.f32 0.0, %v2366
        %2368 = vmatprep.mubr.f32.mxu0 0.0
        %2369 = vmatmul.mubr.f32.gmra.mxu0 %v2050
        %v2370 = vpop.f32.mrf.mxu0
        %v2371 = vadd.f32 0.0, %v2370
        %v2372 = vpop.f32.mrf.mxu0
        %v2373 = vadd.f32 0.0, %v2372
        %2374 = vmatprep.mubr.f32.mxu0 0.0
        %2375 = vmatmul.mubr.f32.gmra.mxu0 %v2053
        %v2376 = vpop.f32.mrf.mxu0
        %v2377 = vadd.f32 0.0, %v2376
        %v2378 = vpop.f32.mrf.mxu0
        %v2379 = vadd.f32 0.0, %v2378
        %2380 = vmatprep.mubr.f32.mxu0 0.0
        %2381 = vmatmul.mubr.f32.gmra.mxu0 %v2056
        %v2382 = vpop.f32.mrf.mxu0
        %v2383 = vadd.f32 0.0, %v2382
        %v2384 = vpop.f32.mrf.mxu0
        %v2385 = vadd.f32 0.0, %v2384
        %2386 = vmatprep.mubr.f32.mxu0 0.0
        %2387 = vmatmul.mubr.f32.gmra.mxu0 %v2059
        %v2388 = vpop.f32.mrf.mxu0
        %v2389 = vadd.f32 0.0, %v2388
        %v2390 = vpop.f32.mrf.mxu0
        %v2391 = vadd.f32 0.0, %v2390
        %2392 = vmatprep.mubr.f32.mxu0 0.0
        %2393 = vmatmul.mubr.f32.gmra.mxu0 %v2062
        %v2394 = vpop.f32.mrf.mxu0
        %v2395 = vadd.f32 0.0, %v2394
        %v2396 = vpop.f32.mrf.mxu0
        %v2397 = vadd.f32 0.0, %v2396
        %2398 = vmatprep.mubr.f32.mxu0 0.0
        %2399 = vmatmul.mubr.f32.gmra.mxu0 %v2065
        %v2400 = vpop.f32.mrf.mxu0
        %v2401 = vadd.f32 0.0, %v2400
        %v2402 = vpop.f32.mrf.mxu0
        %v2403 = vadd.f32 0.0, %v2402
        %2404 = vmatprep.mubr.f32.mxu0 0.0
        %2405 = vmatmul.mubr.f32.gmra.mxu0 %v2068
        %v2406 = vpop.f32.mrf.mxu0
        %v2407 = vadd.f32 0.0, %v2406
        %v2408 = vpop.f32.mrf.mxu0
        %v2409 = vadd.f32 0.0, %v2408
        %2410 = vmatprep.mubr.f32.mxu0 0.0
        %2411 = vmatmul.mubr.f32.gmra.mxu0 %v2071
        %v2412 = vpop.f32.mrf.mxu0
        %v2413 = vadd.f32 0.0, %v2412
        %v2414 = vpop.f32.mrf.mxu0
        %v2415 = vadd.f32 0.0, %v2414
        %2416 = vmatprep.mubr.f32.mxu0 0.0
        %2417 = vmatmul.mubr.f32.gmra.mxu0 %v2074
        %v2418 = vpop.f32.mrf.mxu0
        %v2419 = vadd.f32 0.0, %v2418
        %v2420 = vpop.f32.mrf.mxu0
        %v2421 = vadd.f32 0.0, %v2420
        %2422 = vmatprep.mubr.f32.mxu0 0.0
        %2423 = vmatmul.mubr.f32.gmra.mxu0 %v2077
        %v2424 = vpop.f32.mrf.mxu0
        %v2425 = vadd.f32 0.0, %v2424
        %v2426 = vpop.f32.mrf.mxu0
        %v2427 = vadd.f32 0.0, %v2426
        %2428 = vmatprep.mubr.f32.mxu0 0.0
        %2429 = vmatmul.mubr.f32.gmra.mxu0 %v2080
        %v2430 = vpop.f32.mrf.mxu0
        %v2431 = vadd.f32 0.0, %v2430
        %v2432 = vpop.f32.mrf.mxu0
        %v2433 = vadd.f32 0.0, %v2432
        %2434 = vdwg.mxu0
        %v2435 = vmax.f32 %v2245, %v2247
        %2436 = vmax.xlane.f32.xlu0 %v2435
        %v2437 = vpop.xlane.xlu0 %2436
        %v2438 = vmax.f32 %v2251, %v2253
        %2439 = vmax.xlane.f32.xlu0 %v2438
        %v2440 = vpop.xlane.xlu0 %2439
        %v2441 = vmax.f32 %v2257, %v2259
        %2442 = vmax.xlane.f32.xlu0 %v2441
        %v2443 = vpop.xlane.xlu0 %2442
        %v2444 = vmax.f32 %v2263, %v2265
        %2445 = vmax.xlane.f32.xlu0 %v2444
        %v2446 = vpop.xlane.xlu0 %2445
        %v2447 = vmax.f32 %v2269, %v2271
        %2448 = vmax.xlane.f32.xlu0 %v2447
        %v2449 = vpop.xlane.xlu0 %2448
        %v2450 = vmax.f32 %v2275, %v2277
        %2451 = vmax.xlane.f32.xlu0 %v2450
        %v2452 = vpop.xlane.xlu0 %2451
        %v2453 = vmax.f32 %v2281, %v2283
        %2454 = vmax.xlane.f32.xlu0 %v2453
        %v2455 = vpop.xlane.xlu0 %2454
        %v2456 = vmax.f32 %v2287, %v2289
        %2457 = vmax.xlane.f32.xlu0 %v2456
        %v2458 = vpop.xlane.xlu0 %2457
        %v2459 = vmax.f32 %v2293, %v2295
        %2460 = vmax.xlane.f32.xlu0 %v2459
        %v2461 = vpop.xlane.xlu0 %2460
        %v2462 = vmax.f32 %v2299, %v2301
        %2463 = vmax.xlane.f32.xlu0 %v2462
        %v2464 = vpop.xlane.xlu0 %2463
        %v2465 = vmax.f32 %v2305, %v2307
        %2466 = vmax.xlane.f32.xlu0 %v2465
        %v2467 = vpop.xlane.xlu0 %2466
        %v2468 = vmax.f32 %v2311, %v2313
        %2469 = vmax.xlane.f32.xlu0 %v2468
        %v2470 = vpop.xlane.xlu0 %2469
        %v2471 = vmax.f32 %v2317, %v2319
        %2472 = vmax.xlane.f32.xlu0 %v2471
        %v2473 = vpop.xlane.xlu0 %2472
        %v2474 = vmax.f32 %v2323, %v2325
        %2475 = vmax.xlane.f32.xlu0 %v2474
        %v2476 = vpop.xlane.xlu0 %2475
        %v2477 = vmax.f32 %v2329, %v2331
        %2478 = vmax.xlane.f32.xlu0 %v2477
        %v2479 = vpop.xlane.xlu0 %2478
        %v2480 = vmax.f32 %v2335, %v2337
        %2481 = vmax.xlane.f32.xlu0 %v2480
        %v2482 = vpop.xlane.xlu0 %2481
        %v2483 = vmax.f32 %v2341, %v2343
        %2484 = vmax.xlane.f32.xlu0 %v2483
        %v2485 = vpop.xlane.xlu0 %2484
        %v2486 = vmax.f32 %v2347, %v2349
        %2487 = vmax.xlane.f32.xlu0 %v2486
        %v2488 = vpop.xlane.xlu0 %2487
        %v2489 = vmax.f32 %v2353, %v2355
        %2490 = vmax.xlane.f32.xlu0 %v2489
        %v2491 = vpop.xlane.xlu0 %2490
        %v2492 = vmax.f32 %v2359, %v2361
        %2493 = vmax.xlane.f32.xlu0 %v2492
        %v2494 = vpop.xlane.xlu0 %2493
        %v2495 = vmax.f32 %v2365, %v2367
        %2496 = vmax.xlane.f32.xlu0 %v2495
        %v2497 = vpop.xlane.xlu0 %2496
        %v2498 = vmax.f32 %v2371, %v2373
        %2499 = vmax.xlane.f32.xlu0 %v2498
        %v2500 = vpop.xlane.xlu0 %2499
        %v2501 = vmax.f32 %v2377, %v2379
        %2502 = vmax.xlane.f32.xlu0 %v2501
        %v2503 = vpop.xlane.xlu0 %2502
        %v2504 = vmax.f32 %v2383, %v2385
        %2505 = vmax.xlane.f32.xlu0 %v2504
        %v2506 = vpop.xlane.xlu0 %2505
        %v2507 = vmax.f32 %v2389, %v2391
        %2508 = vmax.xlane.f32.xlu0 %v2507
        %v2509 = vpop.xlane.xlu0 %2508
        %v2510 = vmax.f32 %v2395, %v2397
        %2511 = vmax.xlane.f32.xlu0 %v2510
        %v2512 = vpop.xlane.xlu0 %2511
        %v2513 = vmax.f32 %v2401, %v2403
        %2514 = vmax.xlane.f32.xlu0 %v2513
        %v2515 = vpop.xlane.xlu0 %2514
        %v2516 = vmax.f32 %v2407, %v2409
        %2517 = vmax.xlane.f32.xlu0 %v2516
        %v2518 = vpop.xlane.xlu0 %2517
        %v2519 = vmax.f32 %v2413, %v2415
        %2520 = vmax.xlane.f32.xlu0 %v2519
        %v2521 = vpop.xlane.xlu0 %2520
        %v2522 = vmax.f32 %v2419, %v2421
        %2523 = vmax.xlane.f32.xlu0 %v2522
        %v2524 = vpop.xlane.xlu0 %2523
        %v2525 = vmax.f32 %v2425, %v2427
        %2526 = vmax.xlane.f32.xlu0 %v2525
        %v2527 = vpop.xlane.xlu0 %2526
        %v2528 = vmax.f32 %v2431, %v2433
        %2529 = vmax.xlane.f32.xlu0 %v2528
        %v2530 = vpop.xlane.xlu0 %2529
        %v2531 = vsub.f32 %v2245, %v2437
        %v2532 = vsub.f32 %v2247, %v2437
        %v2533 = vsub.f32 %v2251, %v2440
        %v2534 = vsub.f32 %v2253, %v2440
        %v2535 = vsub.f32 %v2257, %v2443
        %v2536 = vsub.f32 %v2259, %v2443
        %v2537 = vsub.f32 %v2263, %v2446
        %v2538 = vsub.f32 %v2265, %v2446
        %v2539 = vsub.f32 %v2269, %v2449
        %v2540 = vsub.f32 %v2271, %v2449
        %v2541 = vsub.f32 %v2275, %v2452
        %v2542 = vsub.f32 %v2277, %v2452
        %v2543 = vsub.f32 %v2281, %v2455
        %v2544 = vsub.f32 %v2283, %v2455
        %v2545 = vsub.f32 %v2287, %v2458
        %v2546 = vsub.f32 %v2289, %v2458
        %v2547 = vsub.f32 %v2293, %v2461
        %v2548 = vsub.f32 %v2295, %v2461
        %v2549 = vsub.f32 %v2299, %v2464
        %v2550 = vsub.f32 %v2301, %v2464
        %v2551 = vsub.f32 %v2305, %v2467
        %v2552 = vsub.f32 %v2307, %v2467
        %v2553 = vsub.f32 %v2311, %v2470
        %v2554 = vsub.f32 %v2313, %v2470
        %v2555 = vsub.f32 %v2317, %v2473
        %v2556 = vsub.f32 %v2319, %v2473
        %v2557 = vsub.f32 %v2323, %v2476
        %v2558 = vsub.f32 %v2325, %v2476
        %v2559 = vsub.f32 %v2329, %v2479
        %v2560 = vsub.f32 %v2331, %v2479
        %v2561 = vsub.f32 %v2335, %v2482
        %v2562 = vsub.f32 %v2337, %v2482
        %v2563 = vsub.f32 %v2341, %v2485
        %v2564 = vsub.f32 %v2343, %v2485
        %v2565 = vsub.f32 %v2347, %v2488
        %v2566 = vsub.f32 %v2349, %v2488
        %v2567 = vsub.f32 %v2353, %v2491
        %v2568 = vsub.f32 %v2355, %v2491
        %v2569 = vsub.f32 %v2359, %v2494
        %v2570 = vsub.f32 %v2361, %v2494
        %v2571 = vsub.f32 %v2365, %v2497
        %v2572 = vsub.f32 %v2367, %v2497
        %v2573 = vsub.f32 %v2371, %v2500
        %v2574 = vsub.f32 %v2373, %v2500
        %v2575 = vsub.f32 %v2377, %v2503
        %v2576 = vsub.f32 %v2379, %v2503
        %v2577 = vsub.f32 %v2383, %v2506
        %v2578 = vsub.f32 %v2385, %v2506
        %v2579 = vsub.f32 %v2389, %v2509
        %v2580 = vsub.f32 %v2391, %v2509
        %v2581 = vsub.f32 %v2395, %v2512
        %v2582 = vsub.f32 %v2397, %v2512
        %v2583 = vsub.f32 %v2401, %v2515
        %v2584 = vsub.f32 %v2403, %v2515
        %v2585 = vsub.f32 %v2407, %v2518
        %v2586 = vsub.f32 %v2409, %v2518
        %v2587 = vsub.f32 %v2413, %v2521
        %v2588 = vsub.f32 %v2415, %v2521
        %v2589 = vsub.f32 %v2419, %v2524
        %v2590 = vsub.f32 %v2421, %v2524
        %v2591 = vsub.f32 %v2425, %v2527
        %v2592 = vsub.f32 %v2427, %v2527
        %v2593 = vsub.f32 %v2431, %v2530
        %v2594 = vsub.f32 %v2433, %v2530
        %v2595 = vmul.f32 %v2531, 1.442695
        %v2596 = vpow.pop %v2595
        %v2597 = vmul.f32 %v2532, 1.442695
        %v2598 = vpow.pop %v2597
        %v2599 = vmul.f32 %v2533, 1.442695
        %v2600 = vpow.pop %v2599
        %v2601 = vmul.f32 %v2534, 1.442695
        %v2602 = vpow.pop %v2601
        %v2603 = vmul.f32 %v2535, 1.442695
        %v2604 = vpow.pop %v2603
        %v2605 = vmul.f32 %v2536, 1.442695
        %v2606 = vpow.pop %v2605
        %v2607 = vmul.f32 %v2537, 1.442695
        %v2608 = vpow.pop %v2607
        %v2609 = vmul.f32 %v2538, 1.442695
        %v2610 = vpow.pop %v2609
        %v2611 = vmul.f32 %v2539, 1.442695
        %v2612 = vpow.pop %v2611
        %v2613 = vmul.f32 %v2540, 1.442695
        %v2614 = vpow.pop %v2613
        %v2615 = vmul.f32 %v2541, 1.442695
        %v2616 = vpow.pop %v2615
        %v2617 = vmul.f32 %v2542, 1.442695
        %v2618 = vpow.pop %v2617
        %v2619 = vmul.f32 %v2543, 1.442695
        %v2620 = vpow.pop %v2619
        %v2621 = vmul.f32 %v2544, 1.442695
        %v2622 = vpow.pop %v2621
        %v2623 = vmul.f32 %v2545, 1.442695
        %v2624 = vpow.pop %v2623
        %v2625 = vmul.f32 %v2546, 1.442695
        %v2626 = vpow.pop %v2625
        %v2627 = vmul.f32 %v2547, 1.442695
        %v2628 = vpow.pop %v2627
        %v2629 = vmul.f32 %v2548, 1.442695
        %v2630 = vpow.pop %v2629
        %v2631 = vmul.f32 %v2549, 1.442695
        %v2632 = vpow.pop %v2631
        %v2633 = vmul.f32 %v2550, 1.442695
        %v2634 = vpow.pop %v2633
        %v2635 = vmul.f32 %v2551, 1.442695
        %v2636 = vpow.pop %v2635
        %v2637 = vmul.f32 %v2552, 1.442695
        %v2638 = vpow.pop %v2637
        %v2639 = vmul.f32 %v2553, 1.442695
        %v2640 = vpow.pop %v2639
        %v2641 = vmul.f32 %v2554, 1.442695
        %v2642 = vpow.pop %v2641
        %v2643 = vmul.f32 %v2555, 1.442695
        %v2644 = vpow.pop %v2643
        %v2645 = vmul.f32 %v2556, 1.442695
        %v2646 = vpow.pop %v2645
        %v2647 = vmul.f32 %v2557, 1.442695
        %v2648 = vpow.pop %v2647
        %v2649 = vmul.f32 %v2558, 1.442695
        %v2650 = vpow.pop %v2649
        %v2651 = vmul.f32 %v2559, 1.442695
        %v2652 = vpow.pop %v2651
        %v2653 = vmul.f32 %v2560, 1.442695
        %v2654 = vpow.pop %v2653
        %v2655 = vmul.f32 %v2561, 1.442695
        %v2656 = vpow.pop %v2655
        %v2657 = vmul.f32 %v2562, 1.442695
        %v2658 = vpow.pop %v2657
        %v2659 = vmul.f32 %v2563, 1.442695
        %v2660 = vpow.pop %v2659
        %v2661 = vmul.f32 %v2564, 1.442695
        %v2662 = vpow.pop %v2661
        %v2663 = vmul.f32 %v2565, 1.442695
        %v2664 = vpow.pop %v2663
        %v2665 = vmul.f32 %v2566, 1.442695
        %v2666 = vpow.pop %v2665
        %v2667 = vmul.f32 %v2567, 1.442695
        %v2668 = vpow.pop %v2667
        %v2669 = vmul.f32 %v2568, 1.442695
        %v2670 = vpow.pop %v2669
        %v2671 = vmul.f32 %v2569, 1.442695
        %v2672 = vpow.pop %v2671
        %v2673 = vmul.f32 %v2570, 1.442695
        %v2674 = vpow.pop %v2673
        %v2675 = vmul.f32 %v2571, 1.442695
        %v2676 = vpow.pop %v2675
        %v2677 = vmul.f32 %v2572, 1.442695
        %v2678 = vpow.pop %v2677
        %v2679 = vmul.f32 %v2573, 1.442695
        %v2680 = vpow.pop %v2679
        %v2681 = vmul.f32 %v2574, 1.442695
        %v2682 = vpow.pop %v2681
        %v2683 = vmul.f32 %v2575, 1.442695
        %v2684 = vpow.pop %v2683
        %v2685 = vmul.f32 %v2576, 1.442695
        %v2686 = vpow.pop %v2685
        %v2687 = vmul.f32 %v2577, 1.442695
        %v2688 = vpow.pop %v2687
        %v2689 = vmul.f32 %v2578, 1.442695
        %v2690 = vpow.pop %v2689
        %v2691 = vmul.f32 %v2579, 1.442695
        %v2692 = vpow.pop %v2691
        %v2693 = vmul.f32 %v2580, 1.442695
        %v2694 = vpow.pop %v2693
        %v2695 = vmul.f32 %v2581, 1.442695
        %v2696 = vpow.pop %v2695
        %v2697 = vmul.f32 %v2582, 1.442695
        %v2698 = vpow.pop %v2697
        %v2699 = vmul.f32 %v2583, 1.442695
        %v2700 = vpow.pop %v2699
        %v2701 = vmul.f32 %v2584, 1.442695
        %v2702 = vpow.pop %v2701
        %v2703 = vmul.f32 %v2585, 1.442695
        %v2704 = vpow.pop %v2703
        %v2705 = vmul.f32 %v2586, 1.442695
        %v2706 = vpow.pop %v2705
        %v2707 = vmul.f32 %v2587, 1.442695
        %v2708 = vpow.pop %v2707
        %v2709 = vmul.f32 %v2588, 1.442695
        %v2710 = vpow.pop %v2709
        %v2711 = vmul.f32 %v2589, 1.442695
        %v2712 = vpow.pop %v2711
        %v2713 = vmul.f32 %v2590, 1.442695
        %v2714 = vpow.pop %v2713
        %v2715 = vmul.f32 %v2591, 1.442695
        %v2716 = vpow.pop %v2715
        %v2717 = vmul.f32 %v2592, 1.442695
        %v2718 = vpow.pop %v2717
        %v2719 = vmul.f32 %v2593, 1.442695
        %v2720 = vpow.pop %v2719
        %v2721 = vmul.f32 %v2594, 1.442695
        %v2722 = vpow.pop %v2721
        %v2723 = vadd.f32 %v2596, %v2598
        %2724 = vadd.xlane.f32.xlu0 %v2723
        %v2725 = vpop.xlane.xlu0 %2724
        %v2726 = vadd.f32 %v2600, %v2602
        %2727 = vadd.xlane.f32.xlu0 %v2726
        %v2728 = vpop.xlane.xlu0 %2727
        %v2729 = vadd.f32 %v2604, %v2606
        %2730 = vadd.xlane.f32.xlu0 %v2729
        %v2731 = vpop.xlane.xlu0 %2730
        %v2732 = vadd.f32 %v2608, %v2610
        %2733 = vadd.xlane.f32.xlu0 %v2732
        %v2734 = vpop.xlane.xlu0 %2733
        %v2735 = vadd.f32 %v2612, %v2614
        %2736 = vadd.xlane.f32.xlu0 %v2735
        %v2737 = vpop.xlane.xlu0 %2736
        %v2738 = vadd.f32 %v2616, %v2618
        %2739 = vadd.xlane.f32.xlu0 %v2738
        %v2740 = vpop.xlane.xlu0 %2739
        %v2741 = vadd.f32 %v2620, %v2622
        %2742 = vadd.xlane.f32.xlu0 %v2741
        %v2743 = vpop.xlane.xlu0 %2742
        %v2744 = vadd.f32 %v2624, %v2626
        %2745 = vadd.xlane.f32.xlu0 %v2744
        %v2746 = vpop.xlane.xlu0 %2745
        %v2747 = vadd.f32 %v2628, %v2630
        %2748 = vadd.xlane.f32.xlu0 %v2747
        %v2749 = vpop.xlane.xlu0 %2748
        %v2750 = vadd.f32 %v2632, %v2634
        %2751 = vadd.xlane.f32.xlu0 %v2750
        %v2752 = vpop.xlane.xlu0 %2751
        %v2753 = vadd.f32 %v2636, %v2638
        %2754 = vadd.xlane.f32.xlu0 %v2753
        %v2755 = vpop.xlane.xlu0 %2754
        %v2756 = vadd.f32 %v2640, %v2642
        %2757 = vadd.xlane.f32.xlu0 %v2756
        %v2758 = vpop.xlane.xlu0 %2757
        %v2759 = vadd.f32 %v2644, %v2646
        %2760 = vadd.xlane.f32.xlu0 %v2759
        %v2761 = vpop.xlane.xlu0 %2760
        %v2762 = vadd.f32 %v2648, %v2650
        %2763 = vadd.xlane.f32.xlu0 %v2762
        %v2764 = vpop.xlane.xlu0 %2763
        %v2765 = vadd.f32 %v2652, %v2654
        %2766 = vadd.xlane.f32.xlu0 %v2765
        %v2767 = vpop.xlane.xlu0 %2766
        %v2768 = vadd.f32 %v2656, %v2658
        %2769 = vadd.xlane.f32.xlu0 %v2768
        %v2770 = vpop.xlane.xlu0 %2769
        %v2771 = vadd.f32 %v2660, %v2662
        %2772 = vadd.xlane.f32.xlu0 %v2771
        %v2773 = vpop.xlane.xlu0 %2772
        %v2774 = vadd.f32 %v2664, %v2666
        %2775 = vadd.xlane.f32.xlu0 %v2774
        %v2776 = vpop.xlane.xlu0 %2775
        %v2777 = vadd.f32 %v2668, %v2670
        %2778 = vadd.xlane.f32.xlu0 %v2777
        %v2779 = vpop.xlane.xlu0 %2778
        %v2780 = vadd.f32 %v2672, %v2674
        %2781 = vadd.xlane.f32.xlu0 %v2780
        %v2782 = vpop.xlane.xlu0 %2781
        %v2783 = vadd.f32 %v2676, %v2678
        %2784 = vadd.xlane.f32.xlu0 %v2783
        %v2785 = vpop.xlane.xlu0 %2784
        %v2786 = vadd.f32 %v2680, %v2682
        %2787 = vadd.xlane.f32.xlu0 %v2786
        %v2788 = vpop.xlane.xlu0 %2787
        %v2789 = vadd.f32 %v2684, %v2686
        %2790 = vadd.xlane.f32.xlu0 %v2789
        %v2791 = vpop.xlane.xlu0 %2790
        %v2792 = vadd.f32 %v2688, %v2690
        %2793 = vadd.xlane.f32.xlu0 %v2792
        %v2794 = vpop.xlane.xlu0 %2793
        %v2795 = vadd.f32 %v2692, %v2694
        %2796 = vadd.xlane.f32.xlu0 %v2795
        %v2797 = vpop.xlane.xlu0 %2796
        %v2798 = vadd.f32 %v2696, %v2698
        %2799 = vadd.xlane.f32.xlu0 %v2798
        %v2800 = vpop.xlane.xlu0 %2799
        %v2801 = vadd.f32 %v2700, %v2702
        %2802 = vadd.xlane.f32.xlu0 %v2801
        %v2803 = vpop.xlane.xlu0 %2802
        %v2804 = vadd.f32 %v2704, %v2706
        %2805 = vadd.xlane.f32.xlu0 %v2804
        %v2806 = vpop.xlane.xlu0 %2805
        %v2807 = vadd.f32 %v2708, %v2710
        %2808 = vadd.xlane.f32.xlu0 %v2807
        %v2809 = vpop.xlane.xlu0 %2808
        %v2810 = vadd.f32 %v2712, %v2714
        %2811 = vadd.xlane.f32.xlu0 %v2810
        %v2812 = vpop.xlane.xlu0 %2811
        %v2813 = vadd.f32 %v2716, %v2718
        %2814 = vadd.xlane.f32.xlu0 %v2813
        %v2815 = vpop.xlane.xlu0 %2814
        %v2816 = vadd.f32 %v2720, %v2722
        %2817 = vadd.xlane.f32.xlu0 %v2816
        %v2818 = vpop.xlane.xlu0 %2817
        %v2819 = vmul.f32 %v1922, 0.17677669
        %v2820 = vmul.f32 %v1923, 0.17677669
        %v2821 = vmul.f32 %v1924, 0.17677669
        %v2822 = vmul.f32 %v1925, 0.17677669
        %v2823 = vmul.f32 %v1926, 0.17677669
        %v2824 = vmul.f32 %v1927, 0.17677669
        %v2825 = vmul.f32 %v1928, 0.17677669
        %v2826 = vmul.f32 %v1929, 0.17677669
        %v2827 = vmul.f32 %v1930, 0.17677669
        %v2828 = vmul.f32 %v1931, 0.17677669
        %v2829 = vmul.f32 %v1932, 0.17677669
        %v2830 = vmul.f32 %v1933, 0.17677669
        %v2831 = vmul.f32 %v1934, 0.17677669
        %v2832 = vmul.f32 %v1935, 0.17677669
        %v2833 = vmul.f32 %v1936, 0.17677669
        %v2834 = vmul.f32 %v1937, 0.17677669
        %v2835 = vmul.f32 %v1938, 0.17677669
        %v2836 = vmul.f32 %v1939, 0.17677669
        %v2837 = vmul.f32 %v1940, 0.17677669
        %v2838 = vmul.f32 %v1941, 0.17677669
        %v2839 = vmul.f32 %v1942, 0.17677669
        %v2840 = vmul.f32 %v1943, 0.17677669
        %v2841 = vmul.f32 %v1944, 0.17677669
        %v2842 = vmul.f32 %v1945, 0.17677669
        %v2843 = vmul.f32 %v1946, 0.17677669
        %v2844 = vmul.f32 %v1947, 0.17677669
        %v2845 = vmul.f32 %v1948, 0.17677669
        %v2846 = vmul.f32 %v1949, 0.17677669
        %v2847 = vmul.f32 %v1950, 0.17677669
        %v2848 = vmul.f32 %v1951, 0.17677669
        %v2849 = vmul.f32 %v1952, 0.17677669
        %v2850 = vmul.f32 %v1953, 0.17677669
        %v2852 = vsel %vm910, %v2819, 0
        %v2855 = vsel %vm910, %v2820, 0
        %v2858 = vsel %vm910, %v2821, 0
        %v2861 = vsel %vm910, %v2822, 0
        %v2864 = vsel %vm910, %v2823, 0
        %v2867 = vsel %vm910, %v2824, 0
        %v2870 = vsel %vm910, %v2825, 0
        %v2873 = vsel %vm910, %v2826, 0
        %v2876 = vsel %vm910, %v2827, 0
        %v2879 = vsel %vm910, %v2828, 0
        %v2882 = vsel %vm910, %v2829, 0
        %v2885 = vsel %vm910, %v2830, 0
        %v2888 = vsel %vm910, %v2831, 0
        %v2891 = vsel %vm910, %v2832, 0
        %v2894 = vsel %vm910, %v2833, 0
        %v2897 = vsel %vm910, %v2834, 0
        %v2900 = vsel %vm910, %v2835, 0
        %v2903 = vsel %vm910, %v2836, 0
        %v2906 = vsel %vm910, %v2837, 0
        %v2909 = vsel %vm910, %v2838, 0
        %v2912 = vsel %vm910, %v2839, 0
        %v2915 = vsel %vm910, %v2840, 0
        %v2918 = vsel %vm910, %v2841, 0
        %v2921 = vsel %vm910, %v2842, 0
        %v2924 = vsel %vm910, %v2843, 0
        %v2927 = vsel %vm910, %v2844, 0
        %v2930 = vsel %vm910, %v2845, 0
        %v2933 = vsel %vm910, %v2846, 0
        %v2936 = vsel %vm910, %v2847, 0
        %v2939 = vsel %vm910, %v2848, 0
        %v2942 = vsel %vm910, %v2849, 0
        %v2945 = vsel %vm910, %v2850, 0
        %v2948 = vsel %vm910, %v1922, 0
        %v2951 = vsel %vm910, %v1923, 0
        %v2954 = vsel %vm910, %v1924, 0
        %v2957 = vsel %vm910, %v1925, 0
        %v2960 = vsel %vm910, %v1926, 0
        %v2963 = vsel %vm910, %v1927, 0
        %v2966 = vsel %vm910, %v1928, 0
        %v2969 = vsel %vm910, %v1929, 0
        %v2972 = vsel %vm910, %v1930, 0
        %v2975 = vsel %vm910, %v1931, 0
        %v2978 = vsel %vm910, %v1932, 0
        %v2981 = vsel %vm910, %v1933, 0
        %v2984 = vsel %vm910, %v1934, 0
        %v2987 = vsel %vm910, %v1935, 0
        %v2990 = vsel %vm910, %v1936, 0
        %v2993 = vsel %vm910, %v1937, 0
        %v2996 = vsel %vm910, %v1938, 0
        %v2999 = vsel %vm910, %v1939, 0
        %v3002 = vsel %vm910, %v1940, 0
        %v3005 = vsel %vm910, %v1941, 0
        %v3008 = vsel %vm910, %v1942, 0
        %v3011 = vsel %vm910, %v1943, 0
        %v3014 = vsel %vm910, %v1944, 0
        %v3017 = vsel %vm910, %v1945, 0
        %v3020 = vsel %vm910, %v1946, 0
        %v3023 = vsel %vm910, %v1947, 0
        %v3026 = vsel %vm910, %v1948, 0
        %v3029 = vsel %vm910, %v1949, 0
        %v3032 = vsel %vm910, %v1950, 0
        %v3035 = vsel %vm910, %v1951, 0
        %v3038 = vsel %vm910, %v1952, 0
        %v3041 = vsel %vm910, %v1953, 0
        %3043 = vmatprep.subr.mxu0 0.0
        %3044 = vmatpush1.xpose.msra.mxu0 %v2993
        %3045 = vmatprep.subr.mxu0 0.0
        %3046 = vmatpush1.xpose.msra.mxu0 %v2990
        %3047 = vmatprep.subr.mxu0 0.0
        %3048 = vmatpush1.xpose.msra.mxu0 %v2987
        %3049 = vmatprep.subr.mxu0 0.0
        %3050 = vmatpush1.xpose.msra.mxu0 %v2984
        %3051 = vmatprep.subr.mxu0 0.0
        %3052 = vmatpush1.xpose.msra.mxu0 %v2981
        %3053 = vmatprep.subr.mxu0 0.0
        %3054 = vmatpush1.xpose.msra.mxu0 %v2978
        %3055 = vmatprep.subr.mxu0 0.0
        %3056 = vmatpush1.xpose.msra.mxu0 %v2975
        %3057 = vmatprep.subr.mxu0 0.0
        %3058 = vmatpush1.xpose.msra.mxu0 %v2972
        %3059 = vmatprep.subr.mxu0 0.0
        %3060 = vmatpush1.xpose.msra.mxu0 %v2969
        %3061 = vmatprep.subr.mxu0 0.0
        %3062 = vmatpush1.xpose.msra.mxu0 %v2966
        %3063 = vmatprep.subr.mxu0 0.0
        %3064 = vmatpush1.xpose.msra.mxu0 %v2963
        %3065 = vmatprep.subr.mxu0 0.0
        %3066 = vmatpush1.xpose.msra.mxu0 %v2960
        %3067 = vmatprep.subr.mxu0 0.0
        %3068 = vmatpush1.xpose.msra.mxu0 %v2957
        %3069 = vmatprep.subr.mxu0 0.0
        %3070 = vmatpush1.xpose.msra.mxu0 %v2954
        %3071 = vmatprep.subr.mxu0 0.0
        %3072 = vmatpush1.xpose.msra.mxu0 %v2951
        %3073 = vmatprep.subr.mxu0 0.0
        %3074 = vmatpush1.xpose.msra.mxu0 %v2948
        %3075 = vmatprep.subr.mxu0 0.0
        %3076 = vmatpush2.xpose.msra.mxu0 %v3041
        %3077 = vmatprep.subr.mxu0 0.0
        %3078 = vmatpush2.xpose.msra.mxu0 %v3038
        %3079 = vmatprep.subr.mxu0 0.0
        %3080 = vmatpush2.xpose.msra.mxu0 %v3035
        %3081 = vmatprep.subr.mxu0 0.0
        %3082 = vmatpush2.xpose.msra.mxu0 %v3032
        %3083 = vmatprep.subr.mxu0 0.0
        %3084 = vmatpush2.xpose.msra.mxu0 %v3029
        %3085 = vmatprep.subr.mxu0 0.0
        %3086 = vmatpush2.xpose.msra.mxu0 %v3026
        %3087 = vmatprep.subr.mxu0 0.0
        %3088 = vmatpush2.xpose.msra.mxu0 %v3023
        %3089 = vmatprep.subr.mxu0 0.0
        %3090 = vmatpush2.xpose.msra.mxu0 %v3020
        %3091 = vmatprep.subr.mxu0 0.0
        %3092 = vmatpush2.xpose.msra.mxu0 %v3017
        %3093 = vmatprep.subr.mxu0 0.0
        %3094 = vmatpush2.xpose.msra.mxu0 %v3014
        %3095 = vmatprep.subr.mxu0 0.0
        %3096 = vmatpush2.xpose.msra.mxu0 %v3011
        %3097 = vmatprep.subr.mxu0 0.0
        %3098 = vmatpush2.xpose.msra.mxu0 %v3008
        %3099 = vmatprep.subr.mxu0 0.0
        %3100 = vmatpush2.xpose.msra.mxu0 %v3005
        %3101 = vmatprep.subr.mxu0 0.0
        %3102 = vmatpush2.xpose.msra.mxu0 %v3002
        %3103 = vmatprep.subr.mxu0 0.0
        %3104 = vmatpush2.xpose.msra.mxu0 %v2999
        %3105 = vmatprep.subr.mxu0 0.0
        %3106 = vmatpush2.xpose.msra.mxu0 %v2996
        %3107 = vmatprep.mubr.f32.mxu0 0.0
        %3108 = vmatmul.mubr.f32.gmra.mxu0 %v2852
        %v3109 = vpop.f32.mrf.mxu0
        %v3110 = vadd.f32 0.0, %v3109
        %v3111 = vpop.f32.mrf.mxu0
        %v3112 = vadd.f32 0.0, %v3111
        %3113 = vmatprep.mubr.f32.mxu0 0.0
        %3114 = vmatmul.mubr.f32.gmra.mxu0 %v2855
        %v3115 = vpop.f32.mrf.mxu0
        %v3116 = vadd.f32 0.0, %v3115
        %v3117 = vpop.f32.mrf.mxu0
        %v3118 = vadd.f32 0.0, %v3117
        %3119 = vmatprep.mubr.f32.mxu0 0.0
        %3120 = vmatmul.mubr.f32.gmra.mxu0 %v2858
        %v3121 = vpop.f32.mrf.mxu0
        %v3122 = vadd.f32 0.0, %v3121
        %v3123 = vpop.f32.mrf.mxu0
        %v3124 = vadd.f32 0.0, %v3123
        %3125 = vmatprep.mubr.f32.mxu0 0.0
        %3126 = vmatmul.mubr.f32.gmra.mxu0 %v2861
        %v3127 = vpop.f32.mrf.mxu0
        %v3128 = vadd.f32 0.0, %v3127
        %v3129 = vpop.f32.mrf.mxu0
        %v3130 = vadd.f32 0.0, %v3129
        %3131 = vmatprep.mubr.f32.mxu0 0.0
        %3132 = vmatmul.mubr.f32.gmra.mxu0 %v2864
        %v3133 = vpop.f32.mrf.mxu0
        %v3134 = vadd.f32 0.0, %v3133
        %v3135 = vpop.f32.mrf.mxu0
        %v3136 = vadd.f32 0.0, %v3135
        %3137 = vmatprep.mubr.f32.mxu0 0.0
        %3138 = vmatmul.mubr.f32.gmra.mxu0 %v2867
        %v3139 = vpop.f32.mrf.mxu0
        %v3140 = vadd.f32 0.0, %v3139
        %v3141 = vpop.f32.mrf.mxu0
        %v3142 = vadd.f32 0.0, %v3141
        %3143 = vmatprep.mubr.f32.mxu0 0.0
        %3144 = vmatmul.mubr.f32.gmra.mxu0 %v2870
        %v3145 = vpop.f32.mrf.mxu0
        %v3146 = vadd.f32 0.0, %v3145
        %v3147 = vpop.f32.mrf.mxu0
        %v3148 = vadd.f32 0.0, %v3147
        %3149 = vmatprep.mubr.f32.mxu0 0.0
        %3150 = vmatmul.mubr.f32.gmra.mxu0 %v2873
        %v3151 = vpop.f32.mrf.mxu0
        %v3152 = vadd.f32 0.0, %v3151
        %v3153 = vpop.f32.mrf.mxu0
        %v3154 = vadd.f32 0.0, %v3153
        %3155 = vmatprep.mubr.f32.mxu0 0.0
        %3156 = vmatmul.mubr.f32.gmra.mxu0 %v2876
        %v3157 = vpop.f32.mrf.mxu0
        %v3158 = vadd.f32 0.0, %v3157
        %v3159 = vpop.f32.mrf.mxu0
        %v3160 = vadd.f32 0.0, %v3159
        %3161 = vmatprep.mubr.f32.mxu0 0.0
        %3162 = vmatmul.mubr.f32.gmra.mxu0 %v2879
        %v3163 = vpop.f32.mrf.mxu0
        %v3164 = vadd.f32 0.0, %v3163
        %v3165 = vpop.f32.mrf.mxu0
        %v3166 = vadd.f32 0.0, %v3165
        %3167 = vmatprep.mubr.f32.mxu0 0.0
        %3168 = vmatmul.mubr.f32.gmra.mxu0 %v2882
        %v3169 = vpop.f32.mrf.mxu0
        %v3170 = vadd.f32 0.0, %v3169
        %v3171 = vpop.f32.mrf.mxu0
        %v3172 = vadd.f32 0.0, %v3171
        %3173 = vmatprep.mubr.f32.mxu0 0.0
        %3174 = vmatmul.mubr.f32.gmra.mxu0 %v2885
        %v3175 = vpop.f32.mrf.mxu0
        %v3176 = vadd.f32 0.0, %v3175
        %v3177 = vpop.f32.mrf.mxu0
        %v3178 = vadd.f32 0.0, %v3177
        %3179 = vmatprep.mubr.f32.mxu0 0.0
        %3180 = vmatmul.mubr.f32.gmra.mxu0 %v2888
        %v3181 = vpop.f32.mrf.mxu0
        %v3182 = vadd.f32 0.0, %v3181
        %v3183 = vpop.f32.mrf.mxu0
        %v3184 = vadd.f32 0.0, %v3183
        %3185 = vmatprep.mubr.f32.mxu0 0.0
        %3186 = vmatmul.mubr.f32.gmra.mxu0 %v2891
        %v3187 = vpop.f32.mrf.mxu0
        %v3188 = vadd.f32 0.0, %v3187
        %v3189 = vpop.f32.mrf.mxu0
        %v3190 = vadd.f32 0.0, %v3189
        %3191 = vmatprep.mubr.f32.mxu0 0.0
        %3192 = vmatmul.mubr.f32.gmra.mxu0 %v2894
        %v3193 = vpop.f32.mrf.mxu0
        %v3194 = vadd.f32 0.0, %v3193
        %v3195 = vpop.f32.mrf.mxu0
        %v3196 = vadd.f32 0.0, %v3195
        %3197 = vmatprep.mubr.f32.mxu0 0.0
        %3198 = vmatmul.mubr.f32.gmra.mxu0 %v2897
        %v3199 = vpop.f32.mrf.mxu0
        %v3200 = vadd.f32 0.0, %v3199
        %v3201 = vpop.f32.mrf.mxu0
        %v3202 = vadd.f32 0.0, %v3201
        %3203 = vmatprep.mubr.f32.mxu0 0.0
        %3204 = vmatmul.mubr.f32.gmra.mxu0 %v2900
        %v3205 = vpop.f32.mrf.mxu0
        %v3206 = vadd.f32 0.0, %v3205
        %v3207 = vpop.f32.mrf.mxu0
        %v3208 = vadd.f32 0.0, %v3207
        %3209 = vmatprep.mubr.f32.mxu0 0.0
        %3210 = vmatmul.mubr.f32.gmra.mxu0 %v2903
        %v3211 = vpop.f32.mrf.mxu0
        %v3212 = vadd.f32 0.0, %v3211
        %v3213 = vpop.f32.mrf.mxu0
        %v3214 = vadd.f32 0.0, %v3213
        %3215 = vmatprep.mubr.f32.mxu0 0.0
        %3216 = vmatmul.mubr.f32.gmra.mxu0 %v2906
        %v3217 = vpop.f32.mrf.mxu0
        %v3218 = vadd.f32 0.0, %v3217
        %v3219 = vpop.f32.mrf.mxu0
        %v3220 = vadd.f32 0.0, %v3219
        %3221 = vmatprep.mubr.f32.mxu0 0.0
        %3222 = vmatmul.mubr.f32.gmra.mxu0 %v2909
        %v3223 = vpop.f32.mrf.mxu0
        %v3224 = vadd.f32 0.0, %v3223
        %v3225 = vpop.f32.mrf.mxu0
        %v3226 = vadd.f32 0.0, %v3225
        %3227 = vmatprep.mubr.f32.mxu0 0.0
        %3228 = vmatmul.mubr.f32.gmra.mxu0 %v2912
        %v3229 = vpop.f32.mrf.mxu0
        %v3230 = vadd.f32 0.0, %v3229
        %v3231 = vpop.f32.mrf.mxu0
        %v3232 = vadd.f32 0.0, %v3231
        %3233 = vmatprep.mubr.f32.mxu0 0.0
        %3234 = vmatmul.mubr.f32.gmra.mxu0 %v2915
        %v3235 = vpop.f32.mrf.mxu0
        %v3236 = vadd.f32 0.0, %v3235
        %v3237 = vpop.f32.mrf.mxu0
        %v3238 = vadd.f32 0.0, %v3237
        %3239 = vmatprep.mubr.f32.mxu0 0.0
        %3240 = vmatmul.mubr.f32.gmra.mxu0 %v2918
        %v3241 = vpop.f32.mrf.mxu0
        %v3242 = vadd.f32 0.0, %v3241
        %v3243 = vpop.f32.mrf.mxu0
        %v3244 = vadd.f32 0.0, %v3243
        %3245 = vmatprep.mubr.f32.mxu0 0.0
        %3246 = vmatmul.mubr.f32.gmra.mxu0 %v2921
        %v3247 = vpop.f32.mrf.mxu0
        %v3248 = vadd.f32 0.0, %v3247
        %v3249 = vpop.f32.mrf.mxu0
        %v3250 = vadd.f32 0.0, %v3249
        %3251 = vmatprep.mubr.f32.mxu0 0.0
        %3252 = vmatmul.mubr.f32.gmra.mxu0 %v2924
        %v3253 = vpop.f32.mrf.mxu0
        %v3254 = vadd.f32 0.0, %v3253
        %v3255 = vpop.f32.mrf.mxu0
        %v3256 = vadd.f32 0.0, %v3255
        %3257 = vmatprep.mubr.f32.mxu0 0.0
        %3258 = vmatmul.mubr.f32.gmra.mxu0 %v2927
        %v3259 = vpop.f32.mrf.mxu0
        %v3260 = vadd.f32 0.0, %v3259
        %v3261 = vpop.f32.mrf.mxu0
        %v3262 = vadd.f32 0.0, %v3261
        %3263 = vmatprep.mubr.f32.mxu0 0.0
        %3264 = vmatmul.mubr.f32.gmra.mxu0 %v2930
        %v3265 = vpop.f32.mrf.mxu0
        %v3266 = vadd.f32 0.0, %v3265
        %v3267 = vpop.f32.mrf.mxu0
        %v3268 = vadd.f32 0.0, %v3267
        %3269 = vmatprep.mubr.f32.mxu0 0.0
        %3270 = vmatmul.mubr.f32.gmra.mxu0 %v2933
        %v3271 = vpop.f32.mrf.mxu0
        %v3272 = vadd.f32 0.0, %v3271
        %v3273 = vpop.f32.mrf.mxu0
        %v3274 = vadd.f32 0.0, %v3273
        %3275 = vmatprep.mubr.f32.mxu0 0.0
        %3276 = vmatmul.mubr.f32.gmra.mxu0 %v2936
        %v3277 = vpop.f32.mrf.mxu0
        %v3278 = vadd.f32 0.0, %v3277
        %v3279 = vpop.f32.mrf.mxu0
        %v3280 = vadd.f32 0.0, %v3279
        %3281 = vmatprep.mubr.f32.mxu0 0.0
        %3282 = vmatmul.mubr.f32.gmra.mxu0 %v2939
        %v3283 = vpop.f32.mrf.mxu0
        %v3284 = vadd.f32 0.0, %v3283
        %v3285 = vpop.f32.mrf.mxu0
        %v3286 = vadd.f32 0.0, %v3285
        %3287 = vmatprep.mubr.f32.mxu0 0.0
        %3288 = vmatmul.mubr.f32.gmra.mxu0 %v2942
        %v3289 = vpop.f32.mrf.mxu0
        %v3290 = vadd.f32 0.0, %v3289
        %v3291 = vpop.f32.mrf.mxu0
        %v3292 = vadd.f32 0.0, %v3291
        %3293 = vmatprep.mubr.f32.mxu0 0.0
        %3294 = vmatmul.mubr.f32.gmra.mxu0 %v2945
        %v3295 = vpop.f32.mrf.mxu0
        %v3296 = vadd.f32 0.0, %v3295
        %v3297 = vpop.f32.mrf.mxu0
        %v3298 = vadd.f32 0.0, %v3297
        %3299 = vdwg.mxu0
        %v3300 = vmax.f32 %v3110, %v3112
        %3301 = vmax.xlane.f32.xlu0 %v3300
        %v3302 = vpop.xlane.xlu0 %3301
        %v3303 = vmax.f32 %v3116, %v3118
        %3304 = vmax.xlane.f32.xlu0 %v3303
        %v3305 = vpop.xlane.xlu0 %3304
        %v3306 = vmax.f32 %v3122, %v3124
        %3307 = vmax.xlane.f32.xlu0 %v3306
        %v3308 = vpop.xlane.xlu0 %3307
        %v3309 = vmax.f32 %v3128, %v3130
        %3310 = vmax.xlane.f32.xlu0 %v3309
        %v3311 = vpop.xlane.xlu0 %3310
        %v3312 = vmax.f32 %v3134, %v3136
        %3313 = vmax.xlane.f32.xlu0 %v3312
        %v3314 = vpop.xlane.xlu0 %3313
        %v3315 = vmax.f32 %v3140, %v3142
        %3316 = vmax.xlane.f32.xlu0 %v3315
        %v3317 = vpop.xlane.xlu0 %3316
        %v3318 = vmax.f32 %v3146, %v3148
        %3319 = vmax.xlane.f32.xlu0 %v3318
        %v3320 = vpop.xlane.xlu0 %3319
        %v3321 = vmax.f32 %v3152, %v3154
        %3322 = vmax.xlane.f32.xlu0 %v3321
        %v3323 = vpop.xlane.xlu0 %3322
        %v3324 = vmax.f32 %v3158, %v3160
        %3325 = vmax.xlane.f32.xlu0 %v3324
        %v3326 = vpop.xlane.xlu0 %3325
        %v3327 = vmax.f32 %v3164, %v3166
        %3328 = vmax.xlane.f32.xlu0 %v3327
        %v3329 = vpop.xlane.xlu0 %3328
        %v3330 = vmax.f32 %v3170, %v3172
        %3331 = vmax.xlane.f32.xlu0 %v3330
        %v3332 = vpop.xlane.xlu0 %3331
        %v3333 = vmax.f32 %v3176, %v3178
        %3334 = vmax.xlane.f32.xlu0 %v3333
        %v3335 = vpop.xlane.xlu0 %3334
        %v3336 = vmax.f32 %v3182, %v3184
        %3337 = vmax.xlane.f32.xlu0 %v3336
        %v3338 = vpop.xlane.xlu0 %3337
        %v3339 = vmax.f32 %v3188, %v3190
        %3340 = vmax.xlane.f32.xlu0 %v3339
        %v3341 = vpop.xlane.xlu0 %3340
        %v3342 = vmax.f32 %v3194, %v3196
        %3343 = vmax.xlane.f32.xlu0 %v3342
        %v3344 = vpop.xlane.xlu0 %3343
        %v3345 = vmax.f32 %v3200, %v3202
        %3346 = vmax.xlane.f32.xlu0 %v3345
        %v3347 = vpop.xlane.xlu0 %3346
        %v3348 = vmax.f32 %v3206, %v3208
        %3349 = vmax.xlane.f32.xlu0 %v3348
        %v3350 = vpop.xlane.xlu0 %3349
        %v3351 = vmax.f32 %v3212, %v3214
        %3352 = vmax.xlane.f32.xlu0 %v3351
        %v3353 = vpop.xlane.xlu0 %3352
        %v3354 = vmax.f32 %v3218, %v3220
        %3355 = vmax.xlane.f32.xlu0 %v3354
        %v3356 = vpop.xlane.xlu0 %3355
        %v3357 = vmax.f32 %v3224, %v3226
        %3358 = vmax.xlane.f32.xlu0 %v3357
        %v3359 = vpop.xlane.xlu0 %3358
        %v3360 = vmax.f32 %v3230, %v3232
        %3361 = vmax.xlane.f32.xlu0 %v3360
        %v3362 = vpop.xlane.xlu0 %3361
        %v3363 = vmax.f32 %v3236, %v3238
        %3364 = vmax.xlane.f32.xlu0 %v3363
        %v3365 = vpop.xlane.xlu0 %3364
        %v3366 = vmax.f32 %v3242, %v3244
        %3367 = vmax.xlane.f32.xlu0 %v3366
        %v3368 = vpop.xlane.xlu0 %3367
        %v3369 = vmax.f32 %v3248, %v3250
        %3370 = vmax.xlane.f32.xlu0 %v3369
        %v3371 = vpop.xlane.xlu0 %3370
        %v3372 = vmax.f32 %v3254, %v3256
        %3373 = vmax.xlane.f32.xlu0 %v3372
        %v3374 = vpop.xlane.xlu0 %3373
        %v3375 = vmax.f32 %v3260, %v3262
        %3376 = vmax.xlane.f32.xlu0 %v3375
        %v3377 = vpop.xlane.xlu0 %3376
        %v3378 = vmax.f32 %v3266, %v3268
        %3379 = vmax.xlane.f32.xlu0 %v3378
        %v3380 = vpop.xlane.xlu0 %3379
        %v3381 = vmax.f32 %v3272, %v3274
        %3382 = vmax.xlane.f32.xlu0 %v3381
        %v3383 = vpop.xlane.xlu0 %3382
        %v3384 = vmax.f32 %v3278, %v3280
        %3385 = vmax.xlane.f32.xlu0 %v3384
        %v3386 = vpop.xlane.xlu0 %3385
        %v3387 = vmax.f32 %v3284, %v3286
        %3388 = vmax.xlane.f32.xlu0 %v3387
        %v3389 = vpop.xlane.xlu0 %3388
        %v3390 = vmax.f32 %v3290, %v3292
        %3391 = vmax.xlane.f32.xlu0 %v3390
        %v3392 = vpop.xlane.xlu0 %3391
        %v3393 = vmax.f32 %v3296, %v3298
        %3394 = vmax.xlane.f32.xlu0 %v3393
        %v3395 = vpop.xlane.xlu0 %3394
        %v3396 = vsub.f32 %v3110, %v3302
        %v3397 = vsub.f32 %v3112, %v3302
        %v3398 = vsub.f32 %v3116, %v3305
        %v3399 = vsub.f32 %v3118, %v3305
        %v3400 = vsub.f32 %v3122, %v3308
        %v3401 = vsub.f32 %v3124, %v3308
        %v3402 = vsub.f32 %v3128, %v3311
        %v3403 = vsub.f32 %v3130, %v3311
        %v3404 = vsub.f32 %v3134, %v3314
        %v3405 = vsub.f32 %v3136, %v3314
        %v3406 = vsub.f32 %v3140, %v3317
        %v3407 = vsub.f32 %v3142, %v3317
        %v3408 = vsub.f32 %v3146, %v3320
        %v3409 = vsub.f32 %v3148, %v3320
        %v3410 = vsub.f32 %v3152, %v3323
        %v3411 = vsub.f32 %v3154, %v3323
        %v3412 = vsub.f32 %v3158, %v3326
        %v3413 = vsub.f32 %v3160, %v3326
        %v3414 = vsub.f32 %v3164, %v3329
        %v3415 = vsub.f32 %v3166, %v3329
        %v3416 = vsub.f32 %v3170, %v3332
        %v3417 = vsub.f32 %v3172, %v3332
        %v3418 = vsub.f32 %v3176, %v3335
        %v3419 = vsub.f32 %v3178, %v3335
        %v3420 = vsub.f32 %v3182, %v3338
        %v3421 = vsub.f32 %v3184, %v3338
        %v3422 = vsub.f32 %v3188, %v3341
        %v3423 = vsub.f32 %v3190, %v3341
        %v3424 = vsub.f32 %v3194, %v3344
        %v3425 = vsub.f32 %v3196, %v3344
        %v3426 = vsub.f32 %v3200, %v3347
        %v3427 = vsub.f32 %v3202, %v3347
        %v3428 = vsub.f32 %v3206, %v3350
        %v3429 = vsub.f32 %v3208, %v3350
        %v3430 = vsub.f32 %v3212, %v3353
        %v3431 = vsub.f32 %v3214, %v3353
        %v3432 = vsub.f32 %v3218, %v3356
        %v3433 = vsub.f32 %v3220, %v3356
        %v3434 = vsub.f32 %v3224, %v3359
        %v3435 = vsub.f32 %v3226, %v3359
        %v3436 = vsub.f32 %v3230, %v3362
        %v3437 = vsub.f32 %v3232, %v3362
        %v3438 = vsub.f32 %v3236, %v3365
        %v3439 = vsub.f32 %v3238, %v3365
        %v3440 = vsub.f32 %v3242, %v3368
        %v3441 = vsub.f32 %v3244, %v3368
        %v3442 = vsub.f32 %v3248, %v3371
        %v3443 = vsub.f32 %v3250, %v3371
        %v3444 = vsub.f32 %v3254, %v3374
        %v3445 = vsub.f32 %v3256, %v3374
        %v3446 = vsub.f32 %v3260, %v3377
        %v3447 = vsub.f32 %v3262, %v3377
        %v3448 = vsub.f32 %v3266, %v3380
        %v3449 = vsub.f32 %v3268, %v3380
        %v3450 = vsub.f32 %v3272, %v3383
        %v3451 = vsub.f32 %v3274, %v3383
        %v3452 = vsub.f32 %v3278, %v3386
        %v3453 = vsub.f32 %v3280, %v3386
        %v3454 = vsub.f32 %v3284, %v3389
        %v3455 = vsub.f32 %v3286, %v3389
        %v3456 = vsub.f32 %v3290, %v3392
        %v3457 = vsub.f32 %v3292, %v3392
        %v3458 = vsub.f32 %v3296, %v3395
        %v3459 = vsub.f32 %v3298, %v3395
        %v3460 = vmul.f32 %v3396, 1.442695
        %v3461 = vpow.pop %v3460
        %v3462 = vmul.f32 %v3397, 1.442695
        %v3463 = vpow.pop %v3462
        %v3464 = vmul.f32 %v3398, 1.442695
        %v3465 = vpow.pop %v3464
        %v3466 = vmul.f32 %v3399, 1.442695
        %v3467 = vpow.pop %v3466
        %v3468 = vmul.f32 %v3400, 1.442695
        %v3469 = vpow.pop %v3468
        %v3470 = vmul.f32 %v3401, 1.442695
        %v3471 = vpow.pop %v3470
        %v3472 = vmul.f32 %v3402, 1.442695
        %v3473 = vpow.pop %v3472
        %v3474 = vmul.f32 %v3403, 1.442695
        %v3475 = vpow.pop %v3474
        %v3476 = vmul.f32 %v3404, 1.442695
        %v3477 = vpow.pop %v3476
        %v3478 = vmul.f32 %v3405, 1.442695
        %v3479 = vpow.pop %v3478
        %v3480 = vmul.f32 %v3406, 1.442695
        %v3481 = vpow.pop %v3480
        %v3482 = vmul.f32 %v3407, 1.442695
        %v3483 = vpow.pop %v3482
        %v3484 = vmul.f32 %v3408, 1.442695
        %v3485 = vpow.pop %v3484
        %v3486 = vmul.f32 %v3409, 1.442695
        %v3487 = vpow.pop %v3486
        %v3488 = vmul.f32 %v3410, 1.442695
        %v3489 = vpow.pop %v3488
        %v3490 = vmul.f32 %v3411, 1.442695
        %v3491 = vpow.pop %v3490
        %v3492 = vmul.f32 %v3412, 1.442695
        %v3493 = vpow.pop %v3492
        %v3494 = vmul.f32 %v3413, 1.442695
        %v3495 = vpow.pop %v3494
        %v3496 = vmul.f32 %v3414, 1.442695
        %v3497 = vpow.pop %v3496
        %v3498 = vmul.f32 %v3415, 1.442695
        %v3499 = vpow.pop %v3498
        %v3500 = vmul.f32 %v3416, 1.442695
        %v3501 = vpow.pop %v3500
        %v3502 = vmul.f32 %v3417, 1.442695
        %v3503 = vpow.pop %v3502
        %v3504 = vmul.f32 %v3418, 1.442695
        %v3505 = vpow.pop %v3504
        %v3506 = vmul.f32 %v3419, 1.442695
        %v3507 = vpow.pop %v3506
        %v3508 = vmul.f32 %v3420, 1.442695
        %v3509 = vpow.pop %v3508
        %v3510 = vmul.f32 %v3421, 1.442695
        %v3511 = vpow.pop %v3510
        %v3512 = vmul.f32 %v3422, 1.442695
        %v3513 = vpow.pop %v3512
        %v3514 = vmul.f32 %v3423, 1.442695
        %v3515 = vpow.pop %v3514
        %v3516 = vmul.f32 %v3424, 1.442695
        %v3517 = vpow.pop %v3516
        %v3518 = vmul.f32 %v3425, 1.442695
        %v3519 = vpow.pop %v3518
        %v3520 = vmul.f32 %v3426, 1.442695
        %v3521 = vpow.pop %v3520
        %v3522 = vmul.f32 %v3427, 1.442695
        %v3523 = vpow.pop %v3522
        %v3524 = vmul.f32 %v3428, 1.442695
        %v3525 = vpow.pop %v3524
        %v3526 = vmul.f32 %v3429, 1.442695
        %v3527 = vpow.pop %v3526
        %v3528 = vmul.f32 %v3430, 1.442695
        %v3529 = vpow.pop %v3528
        %v3530 = vmul.f32 %v3431, 1.442695
        %v3531 = vpow.pop %v3530
        %v3532 = vmul.f32 %v3432, 1.442695
        %v3533 = vpow.pop %v3532
        %v3534 = vmul.f32 %v3433, 1.442695
        %v3535 = vpow.pop %v3534
        %v3536 = vmul.f32 %v3434, 1.442695
        %v3537 = vpow.pop %v3536
        %v3538 = vmul.f32 %v3435, 1.442695
        %v3539 = vpow.pop %v3538
        %v3540 = vmul.f32 %v3436, 1.442695
        %v3541 = vpow.pop %v3540
        %v3542 = vmul.f32 %v3437, 1.442695
        %v3543 = vpow.pop %v3542
        %v3544 = vmul.f32 %v3438, 1.442695
        %v3545 = vpow.pop %v3544
        %v3546 = vmul.f32 %v3439, 1.442695
        %v3547 = vpow.pop %v3546
        %v3548 = vmul.f32 %v3440, 1.442695
        %v3549 = vpow.pop %v3548
        %v3550 = vmul.f32 %v3441, 1.442695
        %v3551 = vpow.pop %v3550
        %v3552 = vmul.f32 %v3442, 1.442695
        %v3553 = vpow.pop %v3552
        %v3554 = vmul.f32 %v3443, 1.442695
        %v3555 = vpow.pop %v3554
        %v3556 = vmul.f32 %v3444, 1.442695
        %v3557 = vpow.pop %v3556
        %v3558 = vmul.f32 %v3445, 1.442695
        %v3559 = vpow.pop %v3558
        %v3560 = vmul.f32 %v3446, 1.442695
        %v3561 = vpow.pop %v3560
        %v3562 = vmul.f32 %v3447, 1.442695
        %v3563 = vpow.pop %v3562
        %v3564 = vmul.f32 %v3448, 1.442695
        %v3565 = vpow.pop %v3564
        %v3566 = vmul.f32 %v3449, 1.442695
        %v3567 = vpow.pop %v3566
        %v3568 = vmul.f32 %v3450, 1.442695
        %v3569 = vpow.pop %v3568
        %v3570 = vmul.f32 %v3451, 1.442695
        %v3571 = vpow.pop %v3570
        %v3572 = vmul.f32 %v3452, 1.442695
        %v3573 = vpow.pop %v3572
        %v3574 = vmul.f32 %v3453, 1.442695
        %v3575 = vpow.pop %v3574
        %v3576 = vmul.f32 %v3454, 1.442695
        %v3577 = vpow.pop %v3576
        %v3578 = vmul.f32 %v3455, 1.442695
        %v3579 = vpow.pop %v3578
        %v3580 = vmul.f32 %v3456, 1.442695
        %v3581 = vpow.pop %v3580
        %v3582 = vmul.f32 %v3457, 1.442695
        %v3583 = vpow.pop %v3582
        %v3584 = vmul.f32 %v3458, 1.442695
        %v3585 = vpow.pop %v3584
        %v3586 = vmul.f32 %v3459, 1.442695
        %v3587 = vpow.pop %v3586
        %v3588 = vadd.f32 %v3461, %v3463
        %3589 = vadd.xlane.f32.xlu0 %v3588
        %v3590 = vpop.xlane.xlu0 %3589
        %v3591 = vadd.f32 %v3465, %v3467
        %3592 = vadd.xlane.f32.xlu0 %v3591
        %v3593 = vpop.xlane.xlu0 %3592
        %v3594 = vadd.f32 %v3469, %v3471
        %3595 = vadd.xlane.f32.xlu0 %v3594
        %v3596 = vpop.xlane.xlu0 %3595
        %v3597 = vadd.f32 %v3473, %v3475
        %3598 = vadd.xlane.f32.xlu0 %v3597
        %v3599 = vpop.xlane.xlu0 %3598
        %v3600 = vadd.f32 %v3477, %v3479
        %3601 = vadd.xlane.f32.xlu0 %v3600
        %v3602 = vpop.xlane.xlu0 %3601
        %v3603 = vadd.f32 %v3481, %v3483
        %3604 = vadd.xlane.f32.xlu0 %v3603
        %v3605 = vpop.xlane.xlu0 %3604
        %v3606 = vadd.f32 %v3485, %v3487
        %3607 = vadd.xlane.f32.xlu0 %v3606
        %v3608 = vpop.xlane.xlu0 %3607
        %v3609 = vadd.f32 %v3489, %v3491
        %3610 = vadd.xlane.f32.xlu0 %v3609
        %v3611 = vpop.xlane.xlu0 %3610
        %v3612 = vadd.f32 %v3493, %v3495
        %3613 = vadd.xlane.f32.xlu0 %v3612
        %v3614 = vpop.xlane.xlu0 %3613
        %v3615 = vadd.f32 %v3497, %v3499
        %3616 = vadd.xlane.f32.xlu0 %v3615
        %v3617 = vpop.xlane.xlu0 %3616
        %v3618 = vadd.f32 %v3501, %v3503
        %3619 = vadd.xlane.f32.xlu0 %v3618
        %v3620 = vpop.xlane.xlu0 %3619
        %v3621 = vadd.f32 %v3505, %v3507
        %3622 = vadd.xlane.f32.xlu0 %v3621
        %v3623 = vpop.xlane.xlu0 %3622
        %v3624 = vadd.f32 %v3509, %v3511
        %3625 = vadd.xlane.f32.xlu0 %v3624
        %v3626 = vpop.xlane.xlu0 %3625
        %v3627 = vadd.f32 %v3513, %v3515
        %3628 = vadd.xlane.f32.xlu0 %v3627
        %v3629 = vpop.xlane.xlu0 %3628
        %v3630 = vadd.f32 %v3517, %v3519
        %3631 = vadd.xlane.f32.xlu0 %v3630
        %v3632 = vpop.xlane.xlu0 %3631
        %v3633 = vadd.f32 %v3521, %v3523
        %3634 = vadd.xlane.f32.xlu0 %v3633
        %v3635 = vpop.xlane.xlu0 %3634
        %v3636 = vadd.f32 %v3525, %v3527
        %3637 = vadd.xlane.f32.xlu0 %v3636
        %v3638 = vpop.xlane.xlu0 %3637
        %v3639 = vadd.f32 %v3529, %v3531
        %3640 = vadd.xlane.f32.xlu0 %v3639
        %v3641 = vpop.xlane.xlu0 %3640
        %v3642 = vadd.f32 %v3533, %v3535
        %3643 = vadd.xlane.f32.xlu0 %v3642
        %v3644 = vpop.xlane.xlu0 %3643
        %v3645 = vadd.f32 %v3537, %v3539
        %3646 = vadd.xlane.f32.xlu0 %v3645
        %v3647 = vpop.xlane.xlu0 %3646
        %v3648 = vadd.f32 %v3541, %v3543
        %3649 = vadd.xlane.f32.xlu0 %v3648
        %v3650 = vpop.xlane.xlu0 %3649
        %v3651 = vadd.f32 %v3545, %v3547
        %3652 = vadd.xlane.f32.xlu0 %v3651
        %v3653 = vpop.xlane.xlu0 %3652
        %v3654 = vadd.f32 %v3549, %v3551
        %3655 = vadd.xlane.f32.xlu0 %v3654
        %v3656 = vpop.xlane.xlu0 %3655
        %v3657 = vadd.f32 %v3553, %v3555
        %3658 = vadd.xlane.f32.xlu0 %v3657
        %v3659 = vpop.xlane.xlu0 %3658
        %v3660 = vadd.f32 %v3557, %v3559
        %3661 = vadd.xlane.f32.xlu0 %v3660
        %v3662 = vpop.xlane.xlu0 %3661
        %v3663 = vadd.f32 %v3561, %v3563
        %3664 = vadd.xlane.f32.xlu0 %v3663
        %v3665 = vpop.xlane.xlu0 %3664
        %v3666 = vadd.f32 %v3565, %v3567
        %3667 = vadd.xlane.f32.xlu0 %v3666
        %v3668 = vpop.xlane.xlu0 %3667
        %v3669 = vadd.f32 %v3569, %v3571
        %3670 = vadd.xlane.f32.xlu0 %v3669
        %v3671 = vpop.xlane.xlu0 %3670
        %v3672 = vadd.f32 %v3573, %v3575
        %3673 = vadd.xlane.f32.xlu0 %v3672
        %v3674 = vpop.xlane.xlu0 %3673
        %v3675 = vadd.f32 %v3577, %v3579
        %3676 = vadd.xlane.f32.xlu0 %v3675
        %v3677 = vpop.xlane.xlu0 %3676
        %v3678 = vadd.f32 %v3581, %v3583
        %3679 = vadd.xlane.f32.xlu0 %v3678
        %v3680 = vpop.xlane.xlu0 %3679
        %v3681 = vadd.f32 %v3585, %v3587
        %3682 = vadd.xlane.f32.xlu0 %v3681
        %v3683 = vpop.xlane.xlu0 %3682
        %3684 = vmatprep.subr.mxu0 0.0
        %3685 = vmatpush1.msra.mxu0 %v1415
        %3686 = vmatprep.subr.mxu0 0.0
        %3687 = vmatpush1.msra.mxu0 %v1414
        %3688 = vmatprep.subr.mxu0 0.0
        %3689 = vmatpush1.msra.mxu0 %v1413
        %3690 = vmatprep.subr.mxu0 0.0
        %3691 = vmatpush1.msra.mxu0 %v1412
        %3692 = vmatprep.subr.mxu0 0.0
        %3693 = vmatpush1.msra.mxu0 %v1411
        %3694 = vmatprep.subr.mxu0 0.0
        %3695 = vmatpush1.msra.mxu0 %v1410
        %3696 = vmatprep.subr.mxu0 0.0
        %3697 = vmatpush1.msra.mxu0 %v1409
        %3698 = vmatprep.subr.mxu0 0.0
        %3699 = vmatpush1.msra.mxu0 %v1408
        %3700 = vmatprep.subr.mxu0 0.0
        %3701 = vmatpush1.msra.mxu0 %v1407
        %3702 = vmatprep.subr.mxu0 0.0
        %3703 = vmatpush1.msra.mxu0 %v1406
        %3704 = vmatprep.subr.mxu0 0.0
        %3705 = vmatpush1.msra.mxu0 %v1405
        %3706 = vmatprep.subr.mxu0 0.0
        %3707 = vmatpush1.msra.mxu0 %v1404
        %3708 = vmatprep.subr.mxu0 0.0
        %3709 = vmatpush1.msra.mxu0 %v1403
        %3710 = vmatprep.subr.mxu0 0.0
        %3711 = vmatpush1.msra.mxu0 %v1402
        %3712 = vmatprep.subr.mxu0 0.0
        %3713 = vmatpush1.msra.mxu0 %v1401
        %3714 = vmatprep.subr.mxu0 0.0
        %3715 = vmatpush1.msra.mxu0 %v1400
        %3716 = vmatprep.subr.mxu0 0.0
        %3717 = vmatpush2.msra.mxu0 %v1431
        %3718 = vmatprep.subr.mxu0 0.0
        %3719 = vmatpush2.msra.mxu0 %v1430
        %3720 = vmatprep.subr.mxu0 0.0
        %3721 = vmatpush2.msra.mxu0 %v1429
        %3722 = vmatprep.subr.mxu0 0.0
        %3723 = vmatpush2.msra.mxu0 %v1428
        %3724 = vmatprep.subr.mxu0 0.0
        %3725 = vmatpush2.msra.mxu0 %v1427
        %3726 = vmatprep.subr.mxu0 0.0
        %3727 = vmatpush2.msra.mxu0 %v1426
        %3728 = vmatprep.subr.mxu0 0.0
        %3729 = vmatpush2.msra.mxu0 %v1425
        %3730 = vmatprep.subr.mxu0 0.0
        %3731 = vmatpush2.msra.mxu0 %v1424
        %3732 = vmatprep.subr.mxu0 0.0
        %3733 = vmatpush2.msra.mxu0 %v1423
        %3734 = vmatprep.subr.mxu0 0.0
        %3735 = vmatpush2.msra.mxu0 %v1422
        %3736 = vmatprep.subr.mxu0 0.0
        %3737 = vmatpush2.msra.mxu0 %v1421
        %3738 = vmatprep.subr.mxu0 0.0
        %3739 = vmatpush2.msra.mxu0 %v1420
        %3740 = vmatprep.subr.mxu0 0.0
        %3741 = vmatpush2.msra.mxu0 %v1419
        %3742 = vmatprep.subr.mxu0 0.0
        %3743 = vmatpush2.msra.mxu0 %v1418
        %3744 = vmatprep.subr.mxu0 0.0
        %3745 = vmatpush2.msra.mxu0 %v1417
        %3746 = vmatprep.subr.mxu0 0.0
        %3747 = vmatpush2.msra.mxu0 %v1416
        %3748 = vmatprep.mubr.f32.mxu0 %v3463
        %3749 = vmatmul.mubr.f32.gmra.mxu0 %v3461
        %v3750 = vpop.f32.mrf.mxu0
        %v3751 = vadd.f32 0.0, %v3750
        %v3752 = vpop.f32.mrf.mxu0
        %3753 = vmatprep.mubr.f32.mxu0 %v3467
        %3754 = vmatmul.mubr.f32.gmra.mxu0 %v3465
        %v3755 = vpop.f32.mrf.mxu0
        %v3756 = vadd.f32 0.0, %v3755
        %v3757 = vpop.f32.mrf.mxu0
        %3758 = vmatprep.mubr.f32.mxu0 %v3471
        %3759 = vmatmul.mubr.f32.gmra.mxu0 %v3469
        %v3760 = vpop.f32.mrf.mxu0
        %v3761 = vadd.f32 0.0, %v3760
        %v3762 = vpop.f32.mrf.mxu0
        %3763 = vmatprep.mubr.f32.mxu0 %v3475
        %3764 = vmatmul.mubr.f32.gmra.mxu0 %v3473
        %v3765 = vpop.f32.mrf.mxu0
        %v3766 = vadd.f32 0.0, %v3765
        %v3767 = vpop.f32.mrf.mxu0
        %3768 = vmatprep.mubr.f32.mxu0 %v3479
        %3769 = vmatmul.mubr.f32.gmra.mxu0 %v3477
        %v3770 = vpop.f32.mrf.mxu0
        %v3771 = vadd.f32 0.0, %v3770
        %v3772 = vpop.f32.mrf.mxu0
        %3773 = vmatprep.mubr.f32.mxu0 %v3483
        %3774 = vmatmul.mubr.f32.gmra.mxu0 %v3481
        %v3775 = vpop.f32.mrf.mxu0
        %v3776 = vadd.f32 0.0, %v3775
        %v3777 = vpop.f32.mrf.mxu0
        %3778 = vmatprep.mubr.f32.mxu0 %v3487
        %3779 = vmatmul.mubr.f32.gmra.mxu0 %v3485
        %v3780 = vpop.f32.mrf.mxu0
        %v3781 = vadd.f32 0.0, %v3780
        %v3782 = vpop.f32.mrf.mxu0
        %3783 = vmatprep.mubr.f32.mxu0 %v3491
        %3784 = vmatmul.mubr.f32.gmra.mxu0 %v3489
        %v3785 = vpop.f32.mrf.mxu0
        %v3786 = vadd.f32 0.0, %v3785
        %v3787 = vpop.f32.mrf.mxu0
        %3788 = vmatprep.mubr.f32.mxu0 %v3495
        %3789 = vmatmul.mubr.f32.gmra.mxu0 %v3493
        %v3790 = vpop.f32.mrf.mxu0
        %v3791 = vadd.f32 0.0, %v3790
        %v3792 = vpop.f32.mrf.mxu0
        %3793 = vmatprep.mubr.f32.mxu0 %v3499
        %3794 = vmatmul.mubr.f32.gmra.mxu0 %v3497
        %v3795 = vpop.f32.mrf.mxu0
        %v3796 = vadd.f32 0.0, %v3795
        %v3797 = vpop.f32.mrf.mxu0
        %3798 = vmatprep.mubr.f32.mxu0 %v3503
        %3799 = vmatmul.mubr.f32.gmra.mxu0 %v3501
        %v3800 = vpop.f32.mrf.mxu0
        %v3801 = vadd.f32 0.0, %v3800
        %v3802 = vpop.f32.mrf.mxu0
        %3803 = vmatprep.mubr.f32.mxu0 %v3507
        %3804 = vmatmul.mubr.f32.gmra.mxu0 %v3505
        %v3805 = vpop.f32.mrf.mxu0
        %v3806 = vadd.f32 0.0, %v3805
        %v3807 = vpop.f32.mrf.mxu0
        %3808 = vmatprep.mubr.f32.mxu0 %v3511
        %3809 = vmatmul.mubr.f32.gmra.mxu0 %v3509
        %v3810 = vpop.f32.mrf.mxu0
        %v3811 = vadd.f32 0.0, %v3810
        %v3812 = vpop.f32.mrf.mxu0
        %3813 = vmatprep.mubr.f32.mxu0 %v3515
        %3814 = vmatmul.mubr.f32.gmra.mxu0 %v3513
        %v3815 = vpop.f32.mrf.mxu0
        %v3816 = vadd.f32 0.0, %v3815
        %v3817 = vpop.f32.mrf.mxu0
        %3818 = vmatprep.mubr.f32.mxu0 %v3519
        %3819 = vmatmul.mubr.f32.gmra.mxu0 %v3517
        %v3820 = vpop.f32.mrf.mxu0
        %v3821 = vadd.f32 0.0, %v3820
        %v3822 = vpop.f32.mrf.mxu0
        %3823 = vmatprep.mubr.f32.mxu0 %v3523
        %3824 = vmatmul.mubr.f32.gmra.mxu0 %v3521
        %v3825 = vpop.f32.mrf.mxu0
        %v3826 = vadd.f32 0.0, %v3825
        %v3827 = vpop.f32.mrf.mxu0
        %3828 = vmatprep.mubr.f32.mxu0 %v3527
        %3829 = vmatmul.mubr.f32.gmra.mxu0 %v3525
        %v3830 = vpop.f32.mrf.mxu0
        %v3831 = vadd.f32 0.0, %v3830
        %v3832 = vpop.f32.mrf.mxu0
        %3833 = vmatprep.mubr.f32.mxu0 %v3531
        %3834 = vmatmul.mubr.f32.gmra.mxu0 %v3529
        %v3835 = vpop.f32.mrf.mxu0
        %v3836 = vadd.f32 0.0, %v3835
        %v3837 = vpop.f32.mrf.mxu0
        %3838 = vmatprep.mubr.f32.mxu0 %v3535
        %3839 = vmatmul.mubr.f32.gmra.mxu0 %v3533
        %v3840 = vpop.f32.mrf.mxu0
        %v3841 = vadd.f32 0.0, %v3840
        %v3842 = vpop.f32.mrf.mxu0
        %3843 = vmatprep.mubr.f32.mxu0 %v3539
        %3844 = vmatmul.mubr.f32.gmra.mxu0 %v3537
        %v3845 = vpop.f32.mrf.mxu0
        %v3846 = vadd.f32 0.0, %v3845
        %v3847 = vpop.f32.mrf.mxu0
        %3848 = vmatprep.mubr.f32.mxu0 %v3543
        %3849 = vmatmul.mubr.f32.gmra.mxu0 %v3541
        %v3850 = vpop.f32.mrf.mxu0
        %v3851 = vadd.f32 0.0, %v3850
        %v3852 = vpop.f32.mrf.mxu0
        %3853 = vmatprep.mubr.f32.mxu0 %v3547
        %3854 = vmatmul.mubr.f32.gmra.mxu0 %v3545
        %v3855 = vpop.f32.mrf.mxu0
        %v3856 = vadd.f32 0.0, %v3855
        %v3857 = vpop.f32.mrf.mxu0
        %3858 = vmatprep.mubr.f32.mxu0 %v3551
        %3859 = vmatmul.mubr.f32.gmra.mxu0 %v3549
        %v3860 = vpop.f32.mrf.mxu0
        %v3861 = vadd.f32 0.0, %v3860
        %v3862 = vpop.f32.mrf.mxu0
        %3863 = vmatprep.mubr.f32.mxu0 %v3555
        %3864 = vmatmul.mubr.f32.gmra.mxu0 %v3553
        %v3865 = vpop.f32.mrf.mxu0
        %v3866 = vadd.f32 0.0, %v3865
        %v3867 = vpop.f32.mrf.mxu0
        %3868 = vmatprep.mubr.f32.mxu0 %v3559
        %3869 = vmatmul.mubr.f32.gmra.mxu0 %v3557
        %v3870 = vpop.f32.mrf.mxu0
        %v3871 = vadd.f32 0.0, %v3870
        %v3872 = vpop.f32.mrf.mxu0
        %3873 = vmatprep.mubr.f32.mxu0 %v3563
        %3874 = vmatmul.mubr.f32.gmra.mxu0 %v3561
        %v3875 = vpop.f32.mrf.mxu0
        %v3876 = vadd.f32 0.0, %v3875
        %v3877 = vpop.f32.mrf.mxu0
        %3878 = vmatprep.mubr.f32.mxu0 %v3567
        %3879 = vmatmul.mubr.f32.gmra.mxu0 %v3565
        %v3880 = vpop.f32.mrf.mxu0
        %v3881 = vadd.f32 0.0, %v3880
        %v3882 = vpop.f32.mrf.mxu0
        %3883 = vmatprep.mubr.f32.mxu0 %v3571
        %3884 = vmatmul.mubr.f32.gmra.mxu0 %v3569
        %v3885 = vpop.f32.mrf.mxu0
        %v3886 = vadd.f32 0.0, %v3885
        %v3887 = vpop.f32.mrf.mxu0
        %3888 = vmatprep.mubr.f32.mxu0 %v3575
        %3889 = vmatmul.mubr.f32.gmra.mxu0 %v3573
        %v3890 = vpop.f32.mrf.mxu0
        %v3891 = vadd.f32 0.0, %v3890
        %v3892 = vpop.f32.mrf.mxu0
        %3893 = vmatprep.mubr.f32.mxu0 %v3579
        %3894 = vmatmul.mubr.f32.gmra.mxu0 %v3577
        %v3895 = vpop.f32.mrf.mxu0
        %v3896 = vadd.f32 0.0, %v3895
        %v3897 = vpop.f32.mrf.mxu0
        %3898 = vmatprep.mubr.f32.mxu0 %v3583
        %3899 = vmatmul.mubr.f32.gmra.mxu0 %v3581
        %v3900 = vpop.f32.mrf.mxu0
        %v3901 = vadd.f32 0.0, %v3900
        %v3902 = vpop.f32.mrf.mxu0
        %3903 = vmatprep.mubr.f32.mxu0 %v3587
        %3904 = vmatmul.mubr.f32.gmra.mxu0 %v3585
        %v3905 = vpop.f32.mrf.mxu0
        %v3906 = vadd.f32 0.0, %v3905
        %v3907 = vpop.f32.mrf.mxu0
        %3908 = vdwg.mxu0
        %v3909 = vrcp.pop %v3590
        %v3910 = vrcp.pop %v3593
        %v3911 = vrcp.pop %v3596
        %v3912 = vrcp.pop %v3599
        %v3913 = vrcp.pop %v3602
        %v3914 = vrcp.pop %v3605
        %v3915 = vrcp.pop %v3608
        %v3916 = vrcp.pop %v3611
        %v3917 = vrcp.pop %v3614
        %v3918 = vrcp.pop %v3617
        %v3919 = vrcp.pop %v3620
        %v3920 = vrcp.pop %v3623
        %v3921 = vrcp.pop %v3626
        %v3922 = vrcp.pop %v3629
        %v3923 = vrcp.pop %v3632
        %v3924 = vrcp.pop %v3635
        %v3925 = vrcp.pop %v3638
        %v3926 = vrcp.pop %v3641
        %v3927 = vrcp.pop %v3644
        %v3928 = vrcp.pop %v3647
        %v3929 = vrcp.pop %v3650
        %v3930 = vrcp.pop %v3653
        %v3931 = vrcp.pop %v3656
        %v3932 = vrcp.pop %v3659
        %v3933 = vrcp.pop %v3662
        %v3934 = vrcp.pop %v3665
        %v3935 = vrcp.pop %v3668
        %v3936 = vrcp.pop %v3671
        %v3937 = vrcp.pop %v3674
        %v3938 = vrcp.pop %v3677
        %v3939 = vrcp.pop %v3680
        %v3940 = vrcp.pop %v3683
        %v3941 = vmul.f32 %v3751, %v3909
        %v3942 = vmul.f32 %v3756, %v3910
        %v3943 = vmul.f32 %v3761, %v3911
        %v3944 = vmul.f32 %v3766, %v3912
        %v3945 = vmul.f32 %v3771, %v3913
        %v3946 = vmul.f32 %v3776, %v3914
        %v3947 = vmul.f32 %v3781, %v3915
        %v3948 = vmul.f32 %v3786, %v3916
        %v3949 = vmul.f32 %v3791, %v3917
        %v3950 = vmul.f32 %v3796, %v3918
        %v3951 = vmul.f32 %v3801, %v3919
        %v3952 = vmul.f32 %v3806, %v3920
        %v3953 = vmul.f32 %v3811, %v3921
        %v3954 = vmul.f32 %v3816, %v3922
        %v3955 = vmul.f32 %v3821, %v3923
        %v3956 = vmul.f32 %v3826, %v3924
        %v3957 = vmul.f32 %v3831, %v3925
        %v3958 = vmul.f32 %v3836, %v3926
        %v3959 = vmul.f32 %v3841, %v3927
        %v3960 = vmul.f32 %v3846, %v3928
        %v3961 = vmul.f32 %v3851, %v3929
        %v3962 = vmul.f32 %v3856, %v3930
        %v3963 = vmul.f32 %v3861, %v3931
        %v3964 = vmul.f32 %v3866, %v3932
        %v3965 = vmul.f32 %v3871, %v3933
        %v3966 = vmul.f32 %v3876, %v3934
        %v3967 = vmul.f32 %v3881, %v3935
        %v3968 = vmul.f32 %v3886, %v3936
        %v3969 = vmul.f32 %v3891, %v3937
        %v3970 = vmul.f32 %v3896, %v3938
        %v3971 = vmul.f32 %v3901, %v3939
        %v3972 = vmul.f32 %v3906, %v3940
        %3973 = vmatprep.subr.mxu0 0.0
        %3974 = vmatpush1.msra.mxu0 %v1937
        %3975 = vmatprep.subr.mxu0 0.0
        %3976 = vmatpush1.msra.mxu0 %v1936
        %3977 = vmatprep.subr.mxu0 0.0
        %3978 = vmatpush1.msra.mxu0 %v1935
        %3979 = vmatprep.subr.mxu0 0.0
        %3980 = vmatpush1.msra.mxu0 %v1934
        %3981 = vmatprep.subr.mxu0 0.0
        %3982 = vmatpush1.msra.mxu0 %v1933
        %3983 = vmatprep.subr.mxu0 0.0
        %3984 = vmatpush1.msra.mxu0 %v1932
        %3985 = vmatprep.subr.mxu0 0.0
        %3986 = vmatpush1.msra.mxu0 %v1931
        %3987 = vmatprep.subr.mxu0 0.0
        %3988 = vmatpush1.msra.mxu0 %v1930
        %3989 = vmatprep.subr.mxu0 0.0
        %3990 = vmatpush1.msra.mxu0 %v1929
        %3991 = vmatprep.subr.mxu0 0.0
        %3992 = vmatpush1.msra.mxu0 %v1928
        %3993 = vmatprep.subr.mxu0 0.0
        %3994 = vmatpush1.msra.mxu0 %v1927
        %3995 = vmatprep.subr.mxu0 0.0
        %3996 = vmatpush1.msra.mxu0 %v1926
        %3997 = vmatprep.subr.mxu0 0.0
        %3998 = vmatpush1.msra.mxu0 %v1925
        %3999 = vmatprep.subr.mxu0 0.0
        %4000 = vmatpush1.msra.mxu0 %v1924
        %4001 = vmatprep.subr.mxu0 0.0
        %4002 = vmatpush1.msra.mxu0 %v1923
        %4003 = vmatprep.subr.mxu0 0.0
        %4004 = vmatpush1.msra.mxu0 %v1922
        %4005 = vmatprep.subr.mxu0 0.0
        %4006 = vmatpush2.msra.mxu0 %v1953
        %4007 = vmatprep.subr.mxu0 0.0
        %4008 = vmatpush2.msra.mxu0 %v1952
        %4009 = vmatprep.subr.mxu0 0.0
        %4010 = vmatpush2.msra.mxu0 %v1951
        %4011 = vmatprep.subr.mxu0 0.0
        %4012 = vmatpush2.msra.mxu0 %v1950
        %4013 = vmatprep.subr.mxu0 0.0
        %4014 = vmatpush2.msra.mxu0 %v1949
        %4015 = vmatprep.subr.mxu0 0.0
        %4016 = vmatpush2.msra.mxu0 %v1948
        %4017 = vmatprep.subr.mxu0 0.0
        %4018 = vmatpush2.msra.mxu0 %v1947
        %4019 = vmatprep.subr.mxu0 0.0
        %4020 = vmatpush2.msra.mxu0 %v1946
        %4021 = vmatprep.subr.mxu0 0.0
        %4022 = vmatpush2.msra.mxu0 %v1945
        %4023 = vmatprep.subr.mxu0 0.0
        %4024 = vmatpush2.msra.mxu0 %v1944
        %4025 = vmatprep.subr.mxu0 0.0
        %4026 = vmatpush2.msra.mxu0 %v1943
        %4027 = vmatprep.subr.mxu0 0.0
        %4028 = vmatpush2.msra.mxu0 %v1942
        %4029 = vmatprep.subr.mxu0 0.0
        %4030 = vmatpush2.msra.mxu0 %v1941
        %4031 = vmatprep.subr.mxu0 0.0
        %4032 = vmatpush2.msra.mxu0 %v1940
        %4033 = vmatprep.subr.mxu0 0.0
        %4034 = vmatpush2.msra.mxu0 %v1939
        %4035 = vmatprep.subr.mxu0 0.0
        %4036 = vmatpush2.msra.mxu0 %v1938
        %4037 = vmatprep.mubr.f32.mxu0 %v2598
        %4038 = vmatmul.mubr.f32.gmra.mxu0 %v2596
        %v4039 = vpop.f32.mrf.mxu0
        %v4040 = vadd.f32 0.0, %v4039
        %v4041 = vpop.f32.mrf.mxu0
        %4042 = vmatprep.mubr.f32.mxu0 %v2602
        %4043 = vmatmul.mubr.f32.gmra.mxu0 %v2600
        %v4044 = vpop.f32.mrf.mxu0
        %v4045 = vadd.f32 0.0, %v4044
        %v4046 = vpop.f32.mrf.mxu0
        %4047 = vmatprep.mubr.f32.mxu0 %v2606
        %4048 = vmatmul.mubr.f32.gmra.mxu0 %v2604
        %v4049 = vpop.f32.mrf.mxu0
        %v4050 = vadd.f32 0.0, %v4049
        %v4051 = vpop.f32.mrf.mxu0
        %4052 = vmatprep.mubr.f32.mxu0 %v2610
        %4053 = vmatmul.mubr.f32.gmra.mxu0 %v2608
        %v4054 = vpop.f32.mrf.mxu0
        %v4055 = vadd.f32 0.0, %v4054
        %v4056 = vpop.f32.mrf.mxu0
        %4057 = vmatprep.mubr.f32.mxu0 %v2614
        %4058 = vmatmul.mubr.f32.gmra.mxu0 %v2612
        %v4059 = vpop.f32.mrf.mxu0
        %v4060 = vadd.f32 0.0, %v4059
        %v4061 = vpop.f32.mrf.mxu0
        %4062 = vmatprep.mubr.f32.mxu0 %v2618
        %4063 = vmatmul.mubr.f32.gmra.mxu0 %v2616
        %v4064 = vpop.f32.mrf.mxu0
        %v4065 = vadd.f32 0.0, %v4064
        %v4066 = vpop.f32.mrf.mxu0
        %4067 = vmatprep.mubr.f32.mxu0 %v2622
        %4068 = vmatmul.mubr.f32.gmra.mxu0 %v2620
        %v4069 = vpop.f32.mrf.mxu0
        %v4070 = vadd.f32 0.0, %v4069
        %v4071 = vpop.f32.mrf.mxu0
        %4072 = vmatprep.mubr.f32.mxu0 %v2626
        %4073 = vmatmul.mubr.f32.gmra.mxu0 %v2624
        %v4074 = vpop.f32.mrf.mxu0
        %v4075 = vadd.f32 0.0, %v4074
        %v4076 = vpop.f32.mrf.mxu0
        %4077 = vmatprep.mubr.f32.mxu0 %v2630
        %4078 = vmatmul.mubr.f32.gmra.mxu0 %v2628
        %v4079 = vpop.f32.mrf.mxu0
        %v4080 = vadd.f32 0.0, %v4079
        %v4081 = vpop.f32.mrf.mxu0
        %4082 = vmatprep.mubr.f32.mxu0 %v2634
        %4083 = vmatmul.mubr.f32.gmra.mxu0 %v2632
        %v4084 = vpop.f32.mrf.mxu0
        %v4085 = vadd.f32 0.0, %v4084
        %v4086 = vpop.f32.mrf.mxu0
        %4087 = vmatprep.mubr.f32.mxu0 %v2638
        %4088 = vmatmul.mubr.f32.gmra.mxu0 %v2636
        %v4089 = vpop.f32.mrf.mxu0
        %v4090 = vadd.f32 0.0, %v4089
        %v4091 = vpop.f32.mrf.mxu0
        %4092 = vmatprep.mubr.f32.mxu0 %v2642
        %4093 = vmatmul.mubr.f32.gmra.mxu0 %v2640
        %v4094 = vpop.f32.mrf.mxu0
        %v4095 = vadd.f32 0.0, %v4094
        %v4096 = vpop.f32.mrf.mxu0
        %4097 = vmatprep.mubr.f32.mxu0 %v2646
        %4098 = vmatmul.mubr.f32.gmra.mxu0 %v2644
        %v4099 = vpop.f32.mrf.mxu0
        %v4100 = vadd.f32 0.0, %v4099
        %v4101 = vpop.f32.mrf.mxu0
        %4102 = vmatprep.mubr.f32.mxu0 %v2650
        %4103 = vmatmul.mubr.f32.gmra.mxu0 %v2648
        %v4104 = vpop.f32.mrf.mxu0
        %v4105 = vadd.f32 0.0, %v4104
        %v4106 = vpop.f32.mrf.mxu0
        %4107 = vmatprep.mubr.f32.mxu0 %v2654
        %4108 = vmatmul.mubr.f32.gmra.mxu0 %v2652
        %v4109 = vpop.f32.mrf.mxu0
        %v4110 = vadd.f32 0.0, %v4109
        %v4111 = vpop.f32.mrf.mxu0
        %4112 = vmatprep.mubr.f32.mxu0 %v2658
        %4113 = vmatmul.mubr.f32.gmra.mxu0 %v2656
        %v4114 = vpop.f32.mrf.mxu0
        %v4115 = vadd.f32 0.0, %v4114
        %v4116 = vpop.f32.mrf.mxu0
        %4117 = vmatprep.mubr.f32.mxu0 %v2662
        %4118 = vmatmul.mubr.f32.gmra.mxu0 %v2660
        %v4119 = vpop.f32.mrf.mxu0
        %v4120 = vadd.f32 0.0, %v4119
        %v4121 = vpop.f32.mrf.mxu0
        %4122 = vmatprep.mubr.f32.mxu0 %v2666
        %4123 = vmatmul.mubr.f32.gmra.mxu0 %v2664
        %v4124 = vpop.f32.mrf.mxu0
        %v4125 = vadd.f32 0.0, %v4124
        %v4126 = vpop.f32.mrf.mxu0
        %4127 = vmatprep.mubr.f32.mxu0 %v2670
        %4128 = vmatmul.mubr.f32.gmra.mxu0 %v2668
        %v4129 = vpop.f32.mrf.mxu0
        %v4130 = vadd.f32 0.0, %v4129
        %v4131 = vpop.f32.mrf.mxu0
        %4132 = vmatprep.mubr.f32.mxu0 %v2674
        %4133 = vmatmul.mubr.f32.gmra.mxu0 %v2672
        %v4134 = vpop.f32.mrf.mxu0
        %v4135 = vadd.f32 0.0, %v4134
        %v4136 = vpop.f32.mrf.mxu0
        %4137 = vmatprep.mubr.f32.mxu0 %v2678
        %4138 = vmatmul.mubr.f32.gmra.mxu0 %v2676
        %v4139 = vpop.f32.mrf.mxu0
        %v4140 = vadd.f32 0.0, %v4139
        %v4141 = vpop.f32.mrf.mxu0
        %4142 = vmatprep.mubr.f32.mxu0 %v2682
        %4143 = vmatmul.mubr.f32.gmra.mxu0 %v2680
        %v4144 = vpop.f32.mrf.mxu0
        %v4145 = vadd.f32 0.0, %v4144
        %v4146 = vpop.f32.mrf.mxu0
        %4147 = vmatprep.mubr.f32.mxu0 %v2686
        %4148 = vmatmul.mubr.f32.gmra.mxu0 %v2684
        %v4149 = vpop.f32.mrf.mxu0
        %v4150 = vadd.f32 0.0, %v4149
        %v4151 = vpop.f32.mrf.mxu0
        %4152 = vmatprep.mubr.f32.mxu0 %v2690
        %4153 = vmatmul.mubr.f32.gmra.mxu0 %v2688
        %v4154 = vpop.f32.mrf.mxu0
        %v4155 = vadd.f32 0.0, %v4154
        %v4156 = vpop.f32.mrf.mxu0
        %4157 = vmatprep.mubr.f32.mxu0 %v2694
        %4158 = vmatmul.mubr.f32.gmra.mxu0 %v2692
        %v4159 = vpop.f32.mrf.mxu0
        %v4160 = vadd.f32 0.0, %v4159
        %v4161 = vpop.f32.mrf.mxu0
        %4162 = vmatprep.mubr.f32.mxu0 %v2698
        %4163 = vmatmul.mubr.f32.gmra.mxu0 %v2696
        %v4164 = vpop.f32.mrf.mxu0
        %v4165 = vadd.f32 0.0, %v4164
        %v4166 = vpop.f32.mrf.mxu0
        %4167 = vmatprep.mubr.f32.mxu0 %v2702
        %4168 = vmatmul.mubr.f32.gmra.mxu0 %v2700
        %v4169 = vpop.f32.mrf.mxu0
        %v4170 = vadd.f32 0.0, %v4169
        %v4171 = vpop.f32.mrf.mxu0
        %4172 = vmatprep.mubr.f32.mxu0 %v2706
        %4173 = vmatmul.mubr.f32.gmra.mxu0 %v2704
        %v4174 = vpop.f32.mrf.mxu0
        %v4175 = vadd.f32 0.0, %v4174
        %v4176 = vpop.f32.mrf.mxu0
        %4177 = vmatprep.mubr.f32.mxu0 %v2710
        %4178 = vmatmul.mubr.f32.gmra.mxu0 %v2708
        %v4179 = vpop.f32.mrf.mxu0
        %v4180 = vadd.f32 0.0, %v4179
        %v4181 = vpop.f32.mrf.mxu0
        %4182 = vmatprep.mubr.f32.mxu0 %v2714
        %4183 = vmatmul.mubr.f32.gmra.mxu0 %v2712
        %v4184 = vpop.f32.mrf.mxu0
        %v4185 = vadd.f32 0.0, %v4184
        %v4186 = vpop.f32.mrf.mxu0
        %4187 = vmatprep.mubr.f32.mxu0 %v2718
        %4188 = vmatmul.mubr.f32.gmra.mxu0 %v2716
        %v4189 = vpop.f32.mrf.mxu0
        %v4190 = vadd.f32 0.0, %v4189
        %v4191 = vpop.f32.mrf.mxu0
        %4192 = vmatprep.mubr.f32.mxu0 %v2722
        %4193 = vmatmul.mubr.f32.gmra.mxu0 %v2720
        %v4194 = vpop.f32.mrf.mxu0
        %v4195 = vadd.f32 0.0, %v4194
        %v4196 = vpop.f32.mrf.mxu0
        %4197 = vdwg.mxu0
        %v4198 = vrcp.pop %v2725
        %v4199 = vrcp.pop %v2728
        %v4200 = vrcp.pop %v2731
        %v4201 = vrcp.pop %v2734
        %v4202 = vrcp.pop %v2737
        %v4203 = vrcp.pop %v2740
        %v4204 = vrcp.pop %v2743
        %v4205 = vrcp.pop %v2746
        %v4206 = vrcp.pop %v2749
        %v4207 = vrcp.pop %v2752
        %v4208 = vrcp.pop %v2755
        %v4209 = vrcp.pop %v2758
        %v4210 = vrcp.pop %v2761
        %v4211 = vrcp.pop %v2764
        %v4212 = vrcp.pop %v2767
        %v4213 = vrcp.pop %v2770
        %v4214 = vrcp.pop %v2773
        %v4215 = vrcp.pop %v2776
        %v4216 = vrcp.pop %v2779
        %v4217 = vrcp.pop %v2782
        %v4218 = vrcp.pop %v2785
        %v4219 = vrcp.pop %v2788
        %v4220 = vrcp.pop %v2791
        %v4221 = vrcp.pop %v2794
        %v4222 = vrcp.pop %v2797
        %v4223 = vrcp.pop %v2800
        %v4224 = vrcp.pop %v2803
        %v4225 = vrcp.pop %v2806
        %v4226 = vrcp.pop %v2809
        %v4227 = vrcp.pop %v2812
        %v4228 = vrcp.pop %v2815
        %v4229 = vrcp.pop %v2818
        %v4230 = vmul.f32 %v4040, %v4198
        %v4231 = vmul.f32 %v4045, %v4199
        %v4232 = vmul.f32 %v4050, %v4200
        %v4233 = vmul.f32 %v4055, %v4201
        %v4234 = vmul.f32 %v4060, %v4202
        %v4235 = vmul.f32 %v4065, %v4203
        %v4236 = vmul.f32 %v4070, %v4204
        %v4237 = vmul.f32 %v4075, %v4205
        %v4238 = vmul.f32 %v4080, %v4206
        %v4239 = vmul.f32 %v4085, %v4207
        %v4240 = vmul.f32 %v4090, %v4208
        %v4241 = vmul.f32 %v4095, %v4209
        %v4242 = vmul.f32 %v4100, %v4210
        %v4243 = vmul.f32 %v4105, %v4211
        %v4244 = vmul.f32 %v4110, %v4212
        %v4245 = vmul.f32 %v4115, %v4213
        %v4246 = vmul.f32 %v4120, %v4214
        %v4247 = vmul.f32 %v4125, %v4215
        %v4248 = vmul.f32 %v4130, %v4216
        %v4249 = vmul.f32 %v4135, %v4217
        %v4250 = vmul.f32 %v4140, %v4218
        %v4251 = vmul.f32 %v4145, %v4219
        %v4252 = vmul.f32 %v4150, %v4220
        %v4253 = vmul.f32 %v4155, %v4221
        %v4254 = vmul.f32 %v4160, %v4222
        %v4255 = vmul.f32 %v4165, %v4223
        %v4256 = vmul.f32 %v4170, %v4224
        %v4257 = vmul.f32 %v4175, %v4225
        %v4258 = vmul.f32 %v4180, %v4226
        %v4259 = vmul.f32 %v4185, %v4227
        %v4260 = vmul.f32 %v4190, %v4228
        %v4261 = vmul.f32 %v4195, %v4229
        %v4262 = vadd.f32 %v1400, %v3941
        %v4263 = vadd.f32 %v1401, %v3942
        %v4264 = vadd.f32 %v1402, %v3943
        %v4265 = vadd.f32 %v1403, %v3944
        %v4266 = vadd.f32 %v1404, %v3945
        %v4267 = vadd.f32 %v1405, %v3946
        %v4268 = vadd.f32 %v1406, %v3947
        %v4269 = vadd.f32 %v1407, %v3948
        %v4270 = vadd.f32 %v1408, %v3949
        %v4271 = vadd.f32 %v1409, %v3950
        %v4272 = vadd.f32 %v1410, %v3951
        %v4273 = vadd.f32 %v1411, %v3952
        %v4274 = vadd.f32 %v1412, %v3953
        %v4275 = vadd.f32 %v1413, %v3954
        %v4276 = vadd.f32 %v1414, %v3955
        %v4277 = vadd.f32 %v1415, %v3956
        %v4278 = vadd.f32 %v1416, %v3957
        %v4279 = vadd.f32 %v1417, %v3958
        %v4280 = vadd.f32 %v1418, %v3959
        %v4281 = vadd.f32 %v1419, %v3960
        %v4282 = vadd.f32 %v1420, %v3961
        %v4283 = vadd.f32 %v1421, %v3962
        %v4284 = vadd.f32 %v1422, %v3963
        %v4285 = vadd.f32 %v1423, %v3964
        %v4286 = vadd.f32 %v1424, %v3965
        %v4287 = vadd.f32 %v1425, %v3966
        %v4288 = vadd.f32 %v1426, %v3967
        %v4289 = vadd.f32 %v1427, %v3968
        %v4290 = vadd.f32 %v1428, %v3969
        %v4291 = vadd.f32 %v1429, %v3970
        %v4292 = vadd.f32 %v1430, %v3971
        %v4293 = vadd.f32 %v1431, %v3972
        %v4294 = vld [vmem:[%s5 + $0x4] sm:$0x1]
        %v4295 = vld [vmem:[%s5 + $0x5] sm:$0x1]
        %v4296 = vsel %vm910, %v4262, 0.0
        %4297 = vadd.xlane.f32.xlu0 %v4296
        %v4298 = vpop.xlane.xlu0 %4297
        %v4299 = vsel %vm910, %v4263, 0.0
        %4300 = vadd.xlane.f32.xlu0 %v4299
        %v4301 = vpop.xlane.xlu0 %4300
        %v4302 = vsel %vm910, %v4264, 0.0
        %4303 = vadd.xlane.f32.xlu0 %v4302
        %v4304 = vpop.xlane.xlu0 %4303
        %v4305 = vsel %vm910, %v4265, 0.0
        %4306 = vadd.xlane.f32.xlu0 %v4305
        %v4307 = vpop.xlane.xlu0 %4306
        %v4308 = vsel %vm910, %v4266, 0.0
        %4309 = vadd.xlane.f32.xlu0 %v4308
        %v4310 = vpop.xlane.xlu0 %4309
        %v4311 = vsel %vm910, %v4267, 0.0
        %4312 = vadd.xlane.f32.xlu0 %v4311
        %v4313 = vpop.xlane.xlu0 %4312
        %v4314 = vsel %vm910, %v4268, 0.0
        %4315 = vadd.xlane.f32.xlu0 %v4314
        %v4316 = vpop.xlane.xlu0 %4315
        %v4317 = vsel %vm910, %v4269, 0.0
        %4318 = vadd.xlane.f32.xlu0 %v4317
        %v4319 = vpop.xlane.xlu0 %4318
        %v4320 = vsel %vm910, %v4270, 0.0
        %4321 = vadd.xlane.f32.xlu0 %v4320
        %v4322 = vpop.xlane.xlu0 %4321
        %v4323 = vsel %vm910, %v4271, 0.0
        %4324 = vadd.xlane.f32.xlu0 %v4323
        %v4325 = vpop.xlane.xlu0 %4324
        %v4326 = vsel %vm910, %v4272, 0.0
        %4327 = vadd.xlane.f32.xlu0 %v4326
        %v4328 = vpop.xlane.xlu0 %4327
        %v4329 = vsel %vm910, %v4273, 0.0
        %4330 = vadd.xlane.f32.xlu0 %v4329
        %v4331 = vpop.xlane.xlu0 %4330
        %v4332 = vsel %vm910, %v4274, 0.0
        %4333 = vadd.xlane.f32.xlu0 %v4332
        %v4334 = vpop.xlane.xlu0 %4333
        %v4335 = vsel %vm910, %v4275, 0.0
        %4336 = vadd.xlane.f32.xlu0 %v4335
        %v4337 = vpop.xlane.xlu0 %4336
        %v4338 = vsel %vm910, %v4276, 0.0
        %4339 = vadd.xlane.f32.xlu0 %v4338
        %v4340 = vpop.xlane.xlu0 %4339
        %v4341 = vsel %vm910, %v4277, 0.0
        %4342 = vadd.xlane.f32.xlu0 %v4341
        %v4343 = vpop.xlane.xlu0 %4342
        %v4344 = vsel %vm910, %v4278, 0.0
        %4345 = vadd.xlane.f32.xlu0 %v4344
        %v4346 = vpop.xlane.xlu0 %4345
        %v4347 = vsel %vm910, %v4279, 0.0
        %4348 = vadd.xlane.f32.xlu0 %v4347
        %v4349 = vpop.xlane.xlu0 %4348
        %v4350 = vsel %vm910, %v4280, 0.0
        %4351 = vadd.xlane.f32.xlu0 %v4350
        %v4352 = vpop.xlane.xlu0 %4351
        %v4353 = vsel %vm910, %v4281, 0.0
        %4354 = vadd.xlane.f32.xlu0 %v4353
        %v4355 = vpop.xlane.xlu0 %4354
        %v4356 = vsel %vm910, %v4282, 0.0
        %4357 = vadd.xlane.f32.xlu0 %v4356
        %v4358 = vpop.xlane.xlu0 %4357
        %v4359 = vsel %vm910, %v4283, 0.0
        %4360 = vadd.xlane.f32.xlu0 %v4359
        %v4361 = vpop.xlane.xlu0 %4360
        %v4362 = vsel %vm910, %v4284, 0.0
        %4363 = vadd.xlane.f32.xlu0 %v4362
        %v4364 = vpop.xlane.xlu0 %4363
        %v4365 = vsel %vm910, %v4285, 0.0
        %4366 = vadd.xlane.f32.xlu0 %v4365
        %v4367 = vpop.xlane.xlu0 %4366
        %v4368 = vsel %vm910, %v4286, 0.0
        %4369 = vadd.xlane.f32.xlu0 %v4368
        %v4370 = vpop.xlane.xlu0 %4369
        %v4371 = vsel %vm910, %v4287, 0.0
        %4372 = vadd.xlane.f32.xlu0 %v4371
        %v4373 = vpop.xlane.xlu0 %4372
        %v4374 = vsel %vm910, %v4288, 0.0
        %4375 = vadd.xlane.f32.xlu0 %v4374
        %v4376 = vpop.xlane.xlu0 %4375
        %v4377 = vsel %vm910, %v4289, 0.0
        %4378 = vadd.xlane.f32.xlu0 %v4377
        %v4379 = vpop.xlane.xlu0 %4378
        %v4380 = vsel %vm910, %v4290, 0.0
        %4381 = vadd.xlane.f32.xlu0 %v4380
        %v4382 = vpop.xlane.xlu0 %4381
        %v4383 = vsel %vm910, %v4291, 0.0
        %4384 = vadd.xlane.f32.xlu0 %v4383
        %v4385 = vpop.xlane.xlu0 %4384
        %v4386 = vsel %vm910, %v4292, 0.0
        %4387 = vadd.xlane.f32.xlu0 %v4386
        %v4388 = vpop.xlane.xlu0 %4387
        %v4389 = vsel %vm910, %v4293, 0.0
        %4390 = vadd.xlane.f32.xlu0 %v4389
        %v4391 = vpop.xlane.xlu0 %4390
        %v4392 = vmul.f32 %v4298, %v1007
        %v4393 = vmul.f32 %v4301, %v1007
        %v4394 = vmul.f32 %v4304, %v1007
        %v4395 = vmul.f32 %v4307, %v1007
        %v4396 = vmul.f32 %v4310, %v1007
        %v4397 = vmul.f32 %v4313, %v1007
        %v4398 = vmul.f32 %v4316, %v1007
        %v4399 = vmul.f32 %v4319, %v1007
        %v4400 = vmul.f32 %v4322, %v1007
        %v4401 = vmul.f32 %v4325, %v1007
        %v4402 = vmul.f32 %v4328, %v1007
        %v4403 = vmul.f32 %v4331, %v1007
        %v4404 = vmul.f32 %v4334, %v1007
        %v4405 = vmul.f32 %v4337, %v1007
        %v4406 = vmul.f32 %v4340, %v1007
        %v4407 = vmul.f32 %v4343, %v1007
        %v4408 = vmul.f32 %v4346, %v1007
        %v4409 = vmul.f32 %v4349, %v1007
        %v4410 = vmul.f32 %v4352, %v1007
        %v4411 = vmul.f32 %v4355, %v1007
        %v4412 = vmul.f32 %v4358, %v1007
        %v4413 = vmul.f32 %v4361, %v1007
        %v4414 = vmul.f32 %v4364, %v1007
        %v4415 = vmul.f32 %v4367, %v1007
        %v4416 = vmul.f32 %v4370, %v1007
        %v4417 = vmul.f32 %v4373, %v1007
        %v4418 = vmul.f32 %v4376, %v1007
        %v4419 = vmul.f32 %v4379, %v1007
        %v4420 = vmul.f32 %v4382, %v1007
        %v4421 = vmul.f32 %v4385, %v1007
        %v4422 = vmul.f32 %v4388, %v1007
        %v4423 = vmul.f32 %v4391, %v1007
        %v4424 = vsub.f32 %v4262, %v4392
        %v4425 = vsub.f32 %v4263, %v4393
        %v4426 = vsub.f32 %v4264, %v4394
        %v4427 = vsub.f32 %v4265, %v4395
        %v4428 = vsub.f32 %v4266, %v4396
        %v4429 = vsub.f32 %v4267, %v4397
        %v4430 = vsub.f32 %v4268, %v4398
        %v4431 = vsub.f32 %v4269, %v4399
        %v4432 = vsub.f32 %v4270, %v4400
        %v4433 = vsub.f32 %v4271, %v4401
        %v4434 = vsub.f32 %v4272, %v4402
        %v4435 = vsub.f32 %v4273, %v4403
        %v4436 = vsub.f32 %v4274, %v4404
        %v4437 = vsub.f32 %v4275, %v4405
        %v4438 = vsub.f32 %v4276, %v4406
        %v4439 = vsub.f32 %v4277, %v4407
        %v4440 = vsub.f32 %v4278, %v4408
        %v4441 = vsub.f32 %v4279, %v4409
        %v4442 = vsub.f32 %v4280, %v4410
        %v4443 = vsub.f32 %v4281, %v4411
        %v4444 = vsub.f32 %v4282, %v4412
        %v4445 = vsub.f32 %v4283, %v4413
        %v4446 = vsub.f32 %v4284, %v4414
        %v4447 = vsub.f32 %v4285, %v4415
        %v4448 = vsub.f32 %v4286, %v4416
        %v4449 = vsub.f32 %v4287, %v4417
        %v4450 = vsub.f32 %v4288, %v4418
        %v4451 = vsub.f32 %v4289, %v4419
        %v4452 = vsub.f32 %v4290, %v4420
        %v4453 = vsub.f32 %v4291, %v4421
        %v4454 = vsub.f32 %v4292, %v4422
        %v4455 = vsub.f32 %v4293, %v4423
        %v4456 = vmul.f32 %v4424, %v4424
        %v4457 = vmul.f32 %v4425, %v4425
        %v4458 = vmul.f32 %v4426, %v4426
        %v4459 = vmul.f32 %v4427, %v4427
        %v4460 = vmul.f32 %v4428, %v4428
        %v4461 = vmul.f32 %v4429, %v4429
        %v4462 = vmul.f32 %v4430, %v4430
        %v4463 = vmul.f32 %v4431, %v4431
        %v4464 = vmul.f32 %v4432, %v4432
        %v4465 = vmul.f32 %v4433, %v4433
        %v4466 = vmul.f32 %v4434, %v4434
        %v4467 = vmul.f32 %v4435, %v4435
        %v4468 = vmul.f32 %v4436, %v4436
        %v4469 = vmul.f32 %v4437, %v4437
        %v4470 = vmul.f32 %v4438, %v4438
        %v4471 = vmul.f32 %v4439, %v4439
        %v4472 = vmul.f32 %v4440, %v4440
        %v4473 = vmul.f32 %v4441, %v4441
        %v4474 = vmul.f32 %v4442, %v4442
        %v4475 = vmul.f32 %v4443, %v4443
        %v4476 = vmul.f32 %v4444, %v4444
        %v4477 = vmul.f32 %v4445, %v4445
        %v4478 = vmul.f32 %v4446, %v4446
        %v4479 = vmul.f32 %v4447, %v4447
        %v4480 = vmul.f32 %v4448, %v4448
        %v4481 = vmul.f32 %v4449, %v4449
        %v4482 = vmul.f32 %v4450, %v4450
        %v4483 = vmul.f32 %v4451, %v4451
        %v4484 = vmul.f32 %v4452, %v4452
        %v4485 = vmul.f32 %v4453, %v4453
        %v4486 = vmul.f32 %v4454, %v4454
        %v4487 = vmul.f32 %v4455, %v4455
        %v4488 = vsel %vm910, %v4456, 0.0
        %4489 = vadd.xlane.f32.xlu0 %v4488
        %v4490 = vpop.xlane.xlu0 %4489
        %v4491 = vsel %vm910, %v4457, 0.0
        %4492 = vadd.xlane.f32.xlu0 %v4491
        %v4493 = vpop.xlane.xlu0 %4492
        %v4494 = vsel %vm910, %v4458, 0.0
        %4495 = vadd.xlane.f32.xlu0 %v4494
        %v4496 = vpop.xlane.xlu0 %4495
        %v4497 = vsel %vm910, %v4459, 0.0
        %4498 = vadd.xlane.f32.xlu0 %v4497
        %v4499 = vpop.xlane.xlu0 %4498
        %v4500 = vsel %vm910, %v4460, 0.0
        %4501 = vadd.xlane.f32.xlu0 %v4500
        %v4502 = vpop.xlane.xlu0 %4501
        %v4503 = vsel %vm910, %v4461, 0.0
        %4504 = vadd.xlane.f32.xlu0 %v4503
        %v4505 = vpop.xlane.xlu0 %4504
        %v4506 = vsel %vm910, %v4462, 0.0
        %4507 = vadd.xlane.f32.xlu0 %v4506
        %v4508 = vpop.xlane.xlu0 %4507
        %v4509 = vsel %vm910, %v4463, 0.0
        %4510 = vadd.xlane.f32.xlu0 %v4509
        %v4511 = vpop.xlane.xlu0 %4510
        %v4512 = vsel %vm910, %v4464, 0.0
        %4513 = vadd.xlane.f32.xlu0 %v4512
        %v4514 = vpop.xlane.xlu0 %4513
        %v4515 = vsel %vm910, %v4465, 0.0
        %4516 = vadd.xlane.f32.xlu0 %v4515
        %v4517 = vpop.xlane.xlu0 %4516
        %v4518 = vsel %vm910, %v4466, 0.0
        %4519 = vadd.xlane.f32.xlu0 %v4518
        %v4520 = vpop.xlane.xlu0 %4519
        %v4521 = vsel %vm910, %v4467, 0.0
        %4522 = vadd.xlane.f32.xlu0 %v4521
        %v4523 = vpop.xlane.xlu0 %4522
        %v4524 = vsel %vm910, %v4468, 0.0
        %4525 = vadd.xlane.f32.xlu0 %v4524
        %v4526 = vpop.xlane.xlu0 %4525
        %v4527 = vsel %vm910, %v4469, 0.0
        %4528 = vadd.xlane.f32.xlu0 %v4527
        %v4529 = vpop.xlane.xlu0 %4528
        %v4530 = vsel %vm910, %v4470, 0.0
        %4531 = vadd.xlane.f32.xlu0 %v4530
        %v4532 = vpop.xlane.xlu0 %4531
        %v4533 = vsel %vm910, %v4471, 0.0
        %4534 = vadd.xlane.f32.xlu0 %v4533
        %v4535 = vpop.xlane.xlu0 %4534
        %v4536 = vsel %vm910, %v4472, 0.0
        %4537 = vadd.xlane.f32.xlu0 %v4536
        %v4538 = vpop.xlane.xlu0 %4537
        %v4539 = vsel %vm910, %v4473, 0.0
        %4540 = vadd.xlane.f32.xlu0 %v4539
        %v4541 = vpop.xlane.xlu0 %4540
        %v4542 = vsel %vm910, %v4474, 0.0
        %4543 = vadd.xlane.f32.xlu0 %v4542
        %v4544 = vpop.xlane.xlu0 %4543
        %v4545 = vsel %vm910, %v4475, 0.0
        %4546 = vadd.xlane.f32.xlu0 %v4545
        %v4547 = vpop.xlane.xlu0 %4546
        %v4548 = vsel %vm910, %v4476, 0.0
        %4549 = vadd.xlane.f32.xlu0 %v4548
        %v4550 = vpop.xlane.xlu0 %4549
        %v4551 = vsel %vm910, %v4477, 0.0
        %4552 = vadd.xlane.f32.xlu0 %v4551
        %v4553 = vpop.xlane.xlu0 %4552
        %v4554 = vsel %vm910, %v4478, 0.0
        %4555 = vadd.xlane.f32.xlu0 %v4554
        %v4556 = vpop.xlane.xlu0 %4555
        %v4557 = vsel %vm910, %v4479, 0.0
        %4558 = vadd.xlane.f32.xlu0 %v4557
        %v4559 = vpop.xlane.xlu0 %4558
        %v4560 = vsel %vm910, %v4480, 0.0
        %4561 = vadd.xlane.f32.xlu0 %v4560
        %v4562 = vpop.xlane.xlu0 %4561
        %v4563 = vsel %vm910, %v4481, 0.0
        %4564 = vadd.xlane.f32.xlu0 %v4563
        %v4565 = vpop.xlane.xlu0 %4564
        %v4566 = vsel %vm910, %v4482, 0.0
        %4567 = vadd.xlane.f32.xlu0 %v4566
        %v4568 = vpop.xlane.xlu0 %4567
        %v4569 = vsel %vm910, %v4483, 0.0
        %4570 = vadd.xlane.f32.xlu0 %v4569
        %v4571 = vpop.xlane.xlu0 %4570
        %v4572 = vsel %vm910, %v4484, 0.0
        %4573 = vadd.xlane.f32.xlu0 %v4572
        %v4574 = vpop.xlane.xlu0 %4573
        %v4575 = vsel %vm910, %v4485, 0.0
        %4576 = vadd.xlane.f32.xlu0 %v4575
        %v4577 = vpop.xlane.xlu0 %4576
        %v4578 = vsel %vm910, %v4486, 0.0
        %4579 = vadd.xlane.f32.xlu0 %v4578
        %v4580 = vpop.xlane.xlu0 %4579
        %v4581 = vsel %vm910, %v4487, 0.0
        %4582 = vadd.xlane.f32.xlu0 %v4581
        %v4583 = vpop.xlane.xlu0 %4582
        %v4584 = vmul.f32 %v4490, %v1007
        %v4585 = vmul.f32 %v4493, %v1007
        %v4586 = vmul.f32 %v4496, %v1007
        %v4587 = vmul.f32 %v4499, %v1007
        %v4588 = vmul.f32 %v4502, %v1007
        %v4589 = vmul.f32 %v4505, %v1007
        %v4590 = vmul.f32 %v4508, %v1007
        %v4591 = vmul.f32 %v4511, %v1007
        %v4592 = vmul.f32 %v4514, %v1007
        %v4593 = vmul.f32 %v4517, %v1007
        %v4594 = vmul.f32 %v4520, %v1007
        %v4595 = vmul.f32 %v4523, %v1007
        %v4596 = vmul.f32 %v4526, %v1007
        %v4597 = vmul.f32 %v4529, %v1007
        %v4598 = vmul.f32 %v4532, %v1007
        %v4599 = vmul.f32 %v4535, %v1007
        %v4600 = vmul.f32 %v4538, %v1007
        %v4601 = vmul.f32 %v4541, %v1007
        %v4602 = vmul.f32 %v4544, %v1007
        %v4603 = vmul.f32 %v4547, %v1007
        %v4604 = vmul.f32 %v4550, %v1007
        %v4605 = vmul.f32 %v4553, %v1007
        %v4606 = vmul.f32 %v4556, %v1007
        %v4607 = vmul.f32 %v4559, %v1007
        %v4608 = vmul.f32 %v4562, %v1007
        %v4609 = vmul.f32 %v4565, %v1007
        %v4610 = vmul.f32 %v4568, %v1007
        %v4611 = vmul.f32 %v4571, %v1007
        %v4612 = vmul.f32 %v4574, %v1007
        %v4613 = vmul.f32 %v4577, %v1007
        %v4614 = vmul.f32 %v4580, %v1007
        %v4615 = vmul.f32 %v4583, %v1007
        %v4616 = vadd.f32 %v4584, 1e-05
        %v4617 = vadd.f32 %v4585, 1e-05
        %v4618 = vadd.f32 %v4586, 1e-05
        %v4619 = vadd.f32 %v4587, 1e-05
        %v4620 = vadd.f32 %v4588, 1e-05
        %v4621 = vadd.f32 %v4589, 1e-05
        %v4622 = vadd.f32 %v4590, 1e-05
        %v4623 = vadd.f32 %v4591, 1e-05
        %v4624 = vadd.f32 %v4592, 1e-05
        %v4625 = vadd.f32 %v4593, 1e-05
        %v4626 = vadd.f32 %v4594, 1e-05
        %v4627 = vadd.f32 %v4595, 1e-05
        %v4628 = vadd.f32 %v4596, 1e-05
        %v4629 = vadd.f32 %v4597, 1e-05
        %v4630 = vadd.f32 %v4598, 1e-05
        %v4631 = vadd.f32 %v4599, 1e-05
        %v4632 = vadd.f32 %v4600, 1e-05
        %v4633 = vadd.f32 %v4601, 1e-05
        %v4634 = vadd.f32 %v4602, 1e-05
        %v4635 = vadd.f32 %v4603, 1e-05
        %v4636 = vadd.f32 %v4604, 1e-05
        %v4637 = vadd.f32 %v4605, 1e-05
        %v4638 = vadd.f32 %v4606, 1e-05
        %v4639 = vadd.f32 %v4607, 1e-05
        %v4640 = vadd.f32 %v4608, 1e-05
        %v4641 = vadd.f32 %v4609, 1e-05
        %v4642 = vadd.f32 %v4610, 1e-05
        %v4643 = vadd.f32 %v4611, 1e-05
        %v4644 = vadd.f32 %v4612, 1e-05
        %v4645 = vadd.f32 %v4613, 1e-05
        %v4646 = vadd.f32 %v4614, 1e-05
        %v4647 = vadd.f32 %v4615, 1e-05
        %v4648 = vrsqrt.pop %v4616
        %v4649 = vrsqrt.pop %v4617
        %v4650 = vrsqrt.pop %v4618
        %v4651 = vrsqrt.pop %v4619
        %v4652 = vrsqrt.pop %v4620
        %v4653 = vrsqrt.pop %v4621
        %v4654 = vrsqrt.pop %v4622
        %v4655 = vrsqrt.pop %v4623
        %v4656 = vrsqrt.pop %v4624
        %v4657 = vrsqrt.pop %v4625
        %v4658 = vrsqrt.pop %v4626
        %v4659 = vrsqrt.pop %v4627
        %v4660 = vrsqrt.pop %v4628
        %v4661 = vrsqrt.pop %v4629
        %v4662 = vrsqrt.pop %v4630
        %v4663 = vrsqrt.pop %v4631
        %v4664 = vrsqrt.pop %v4632
        %v4665 = vrsqrt.pop %v4633
        %v4666 = vrsqrt.pop %v4634
        %v4667 = vrsqrt.pop %v4635
        %v4668 = vrsqrt.pop %v4636
        %v4669 = vrsqrt.pop %v4637
        %v4670 = vrsqrt.pop %v4638
        %v4671 = vrsqrt.pop %v4639
        %v4672 = vrsqrt.pop %v4640
        %v4673 = vrsqrt.pop %v4641
        %v4674 = vrsqrt.pop %v4642
        %v4675 = vrsqrt.pop %v4643
        %v4676 = vrsqrt.pop %v4644
        %v4677 = vrsqrt.pop %v4645
        %v4678 = vrsqrt.pop %v4646
        %v4679 = vrsqrt.pop %v4647
        %v4680 = vmul.f32 %v4424, %v4648
        %v4681 = vmul.f32 %v4425, %v4649
        %v4682 = vmul.f32 %v4426, %v4650
        %v4683 = vmul.f32 %v4427, %v4651
        %v4684 = vmul.f32 %v4428, %v4652
        %v4685 = vmul.f32 %v4429, %v4653
        %v4686 = vmul.f32 %v4430, %v4654
        %v4687 = vmul.f32 %v4431, %v4655
        %v4688 = vmul.f32 %v4432, %v4656
        %v4689 = vmul.f32 %v4433, %v4657
        %v4690 = vmul.f32 %v4434, %v4658
        %v4691 = vmul.f32 %v4435, %v4659
        %v4692 = vmul.f32 %v4436, %v4660
        %v4693 = vmul.f32 %v4437, %v4661
        %v4694 = vmul.f32 %v4438, %v4662
        %v4695 = vmul.f32 %v4439, %v4663
        %v4696 = vmul.f32 %v4440, %v4664
        %v4697 = vmul.f32 %v4441, %v4665
        %v4698 = vmul.f32 %v4442, %v4666
        %v4699 = vmul.f32 %v4443, %v4667
        %v4700 = vmul.f32 %v4444, %v4668
        %v4701 = vmul.f32 %v4445, %v4669
        %v4702 = vmul.f32 %v4446, %v4670
        %v4703 = vmul.f32 %v4447, %v4671
        %v4704 = vmul.f32 %v4448, %v4672
        %v4705 = vmul.f32 %v4449, %v4673
        %v4706 = vmul.f32 %v4450, %v4674
        %v4707 = vmul.f32 %v4451, %v4675
        %v4708 = vmul.f32 %v4452, %v4676
        %v4709 = vmul.f32 %v4453, %v4677
        %v4710 = vmul.f32 %v4454, %v4678
        %v4711 = vmul.f32 %v4455, %v4679
        %v4712 = vlaneseq
        %v4713 = vshrl.u32 %v4712, 7
        %v4714 = vsub.s32 0, %v4713
        %v4715 = vrot.slane %v4294, %v4714
        %v4716 = vmul.f32 %v4680, %v4715
        %v4717 = vmul.f32 %v4681, %v4715
        %v4718 = vmul.f32 %v4682, %v4715
        %v4719 = vmul.f32 %v4683, %v4715
        %v4720 = vmul.f32 %v4684, %v4715
        %v4721 = vmul.f32 %v4685, %v4715
        %v4722 = vmul.f32 %v4686, %v4715
        %v4723 = vmul.f32 %v4687, %v4715
        %v4724 = vmul.f32 %v4688, %v4715
        %v4725 = vmul.f32 %v4689, %v4715
        %v4726 = vmul.f32 %v4690, %v4715
        %v4727 = vmul.f32 %v4691, %v4715
        %v4728 = vmul.f32 %v4692, %v4715
        %v4729 = vmul.f32 %v4693, %v4715
        %v4730 = vmul.f32 %v4694, %v4715
        %v4731 = vmul.f32 %v4695, %v4715
        %v4732 = vmul.f32 %v4696, %v4715
        %v4733 = vmul.f32 %v4697, %v4715
        %v4734 = vmul.f32 %v4698, %v4715
        %v4735 = vmul.f32 %v4699, %v4715
        %v4736 = vmul.f32 %v4700, %v4715
        %v4737 = vmul.f32 %v4701, %v4715
        %v4738 = vmul.f32 %v4702, %v4715
        %v4739 = vmul.f32 %v4703, %v4715
        %v4740 = vmul.f32 %v4704, %v4715
        %v4741 = vmul.f32 %v4705, %v4715
        %v4742 = vmul.f32 %v4706, %v4715
        %v4743 = vmul.f32 %v4707, %v4715
        %v4744 = vmul.f32 %v4708, %v4715
        %v4745 = vmul.f32 %v4709, %v4715
        %v4746 = vmul.f32 %v4710, %v4715
        %v4747 = vmul.f32 %v4711, %v4715
        %v4748 = vlaneseq
        %v4749 = vshrl.u32 %v4748, 7
        %v4750 = vsub.s32 0, %v4749
        %v4751 = vrot.slane %v4295, %v4750
        %v4752 = vadd.f32 %v4716, %v4751
        %v4753 = vadd.f32 %v4717, %v4751
        %v4754 = vadd.f32 %v4718, %v4751
        %v4755 = vadd.f32 %v4719, %v4751
        %v4756 = vadd.f32 %v4720, %v4751
        %v4757 = vadd.f32 %v4721, %v4751
        %v4758 = vadd.f32 %v4722, %v4751
        %v4759 = vadd.f32 %v4723, %v4751
        %v4760 = vadd.f32 %v4724, %v4751
        %v4761 = vadd.f32 %v4725, %v4751
        %v4762 = vadd.f32 %v4726, %v4751
        %v4763 = vadd.f32 %v4727, %v4751
        %v4764 = vadd.f32 %v4728, %v4751
        %v4765 = vadd.f32 %v4729, %v4751
        %v4766 = vadd.f32 %v4730, %v4751
        %v4767 = vadd.f32 %v4731, %v4751
        %v4768 = vadd.f32 %v4732, %v4751
        %v4769 = vadd.f32 %v4733, %v4751
        %v4770 = vadd.f32 %v4734, %v4751
        %v4771 = vadd.f32 %v4735, %v4751
        %v4772 = vadd.f32 %v4736, %v4751
        %v4773 = vadd.f32 %v4737, %v4751
        %v4774 = vadd.f32 %v4738, %v4751
        %v4775 = vadd.f32 %v4739, %v4751
        %v4776 = vadd.f32 %v4740, %v4751
        %v4777 = vadd.f32 %v4741, %v4751
        %v4778 = vadd.f32 %v4742, %v4751
        %v4779 = vadd.f32 %v4743, %v4751
        %v4780 = vadd.f32 %v4744, %v4751
        %v4781 = vadd.f32 %v4745, %v4751
        %v4782 = vadd.f32 %v4746, %v4751
        %v4783 = vadd.f32 %v4747, %v4751
        %4784 = vst.msk [vmem:[%s346] sm:$0xff] %vm910, %v4752
        %4785 = vst.msk [vmem:[%s346 + $0x8] sm:$0xff] %vm910, %v4753
        %4786 = vst.msk [vmem:[%s346 + $0x10] sm:$0xff] %vm910, %v4754
        %4787 = vst.msk [vmem:[%s346 + $0x18] sm:$0xff] %vm910, %v4755
        %4788 = vst.msk [vmem:[%s346 + $0x20] sm:$0xff] %vm910, %v4756
        %4789 = vst.msk [vmem:[%s346 + $0x28] sm:$0xff] %vm910, %v4757
        %4790 = vst.msk [vmem:[%s346 + $0x30] sm:$0xff] %vm910, %v4758
        %4791 = vst.msk [vmem:[%s346 + $0x38] sm:$0xff] %vm910, %v4759
        %4792 = vst.msk [vmem:[%s346 + $0x40] sm:$0xff] %vm910, %v4760
        %4793 = vst.msk [vmem:[%s346 + $0x48] sm:$0xff] %vm910, %v4761
        %4794 = vst.msk [vmem:[%s346 + $0x50] sm:$0xff] %vm910, %v4762
        %4795 = vst.msk [vmem:[%s346 + $0x58] sm:$0xff] %vm910, %v4763
        %4796 = vst.msk [vmem:[%s346 + $0x60] sm:$0xff] %vm910, %v4764
        %4797 = vst.msk [vmem:[%s346 + $0x68] sm:$0xff] %vm910, %v4765
        %4798 = vst.msk [vmem:[%s346 + $0x70] sm:$0xff] %vm910, %v4766
        %4799 = vst.msk [vmem:[%s346 + $0x78] sm:$0xff] %vm910, %v4767
        %4800 = vst.msk [vmem:[%s346 + $0x80] sm:$0xff] %vm910, %v4768
        %4801 = vst.msk [vmem:[%s346 + $0x88] sm:$0xff] %vm910, %v4769
        %4802 = vst.msk [vmem:[%s346 + $0x90] sm:$0xff] %vm910, %v4770
        %4803 = vst.msk [vmem:[%s346 + $0x98] sm:$0xff] %vm910, %v4771
        %4804 = vst.msk [vmem:[%s346 + $0xa0] sm:$0xff] %vm910, %v4772
        %4805 = vst.msk [vmem:[%s346 + $0xa8] sm:$0xff] %vm910, %v4773
        %4806 = vst.msk [vmem:[%s346 + $0xb0] sm:$0xff] %vm910, %v4774
        %4807 = vst.msk [vmem:[%s346 + $0xb8] sm:$0xff] %vm910, %v4775
        %4808 = vst.msk [vmem:[%s346 + $0xc0] sm:$0xff] %vm910, %v4776
        %4809 = vst.msk [vmem:[%s346 + $0xc8] sm:$0xff] %vm910, %v4777
        %4810 = vst.msk [vmem:[%s346 + $0xd0] sm:$0xff] %vm910, %v4778
        %4811 = vst.msk [vmem:[%s346 + $0xd8] sm:$0xff] %vm910, %v4779
        %4812 = vst.msk [vmem:[%s346 + $0xe0] sm:$0xff] %vm910, %v4780
        %4813 = vst.msk [vmem:[%s346 + $0xe8] sm:$0xff] %vm910, %v4781
        %4814 = vst.msk [vmem:[%s346 + $0xf0] sm:$0xff] %vm910, %v4782
        %4815 = vst.msk [vmem:[%s346 + $0xf8] sm:$0xff] %vm910, %v4783
        %v4816 = vadd.f32 %v1922, %v4230
        %v4817 = vadd.f32 %v1923, %v4231
        %v4818 = vadd.f32 %v1924, %v4232
        %v4819 = vadd.f32 %v1925, %v4233
        %v4820 = vadd.f32 %v1926, %v4234
        %v4821 = vadd.f32 %v1927, %v4235
        %v4822 = vadd.f32 %v1928, %v4236
        %v4823 = vadd.f32 %v1929, %v4237
        %v4824 = vadd.f32 %v1930, %v4238
        %v4825 = vadd.f32 %v1931, %v4239
        %v4826 = vadd.f32 %v1932, %v4240
        %v4827 = vadd.f32 %v1933, %v4241
        %v4828 = vadd.f32 %v1934, %v4242
        %v4829 = vadd.f32 %v1935, %v4243
        %v4830 = vadd.f32 %v1936, %v4244
        %v4831 = vadd.f32 %v1937, %v4245
        %v4832 = vadd.f32 %v1938, %v4246
        %v4833 = vadd.f32 %v1939, %v4247
        %v4834 = vadd.f32 %v1940, %v4248
        %v4835 = vadd.f32 %v1941, %v4249
        %v4836 = vadd.f32 %v1942, %v4250
        %v4837 = vadd.f32 %v1943, %v4251
        %v4838 = vadd.f32 %v1944, %v4252
        %v4839 = vadd.f32 %v1945, %v4253
        %v4840 = vadd.f32 %v1946, %v4254
        %v4841 = vadd.f32 %v1947, %v4255
        %v4842 = vadd.f32 %v1948, %v4256
        %v4843 = vadd.f32 %v1949, %v4257
        %v4844 = vadd.f32 %v1950, %v4258
        %v4845 = vadd.f32 %v1951, %v4259
        %v4846 = vadd.f32 %v1952, %v4260
        %v4847 = vadd.f32 %v1953, %v4261
        %v4848 = vld [vmem:[%s5 + $0x6] sm:$0x1]
        %v4849 = vld [vmem:[%s5 + $0x7] sm:$0x1]
        %v4850 = vsel %vm910, %v4816, 0.0
        %4851 = vadd.xlane.f32.xlu0 %v4850
        %v4852 = vpop.xlane.xlu0 %4851
        %v4853 = vsel %vm910, %v4817, 0.0
        %4854 = vadd.xlane.f32.xlu0 %v4853
        %v4855 = vpop.xlane.xlu0 %4854
        %v4856 = vsel %vm910, %v4818, 0.0
        %4857 = vadd.xlane.f32.xlu0 %v4856
        %v4858 = vpop.xlane.xlu0 %4857
        %v4859 = vsel %vm910, %v4819, 0.0
        %4860 = vadd.xlane.f32.xlu0 %v4859
        %v4861 = vpop.xlane.xlu0 %4860
        %v4862 = vsel %vm910, %v4820, 0.0
        %4863 = vadd.xlane.f32.xlu0 %v4862
        %v4864 = vpop.xlane.xlu0 %4863
        %v4865 = vsel %vm910, %v4821, 0.0
        %4866 = vadd.xlane.f32.xlu0 %v4865
        %v4867 = vpop.xlane.xlu0 %4866
        %v4868 = vsel %vm910, %v4822, 0.0
        %4869 = vadd.xlane.f32.xlu0 %v4868
        %v4870 = vpop.xlane.xlu0 %4869
        %v4871 = vsel %vm910, %v4823, 0.0
        %4872 = vadd.xlane.f32.xlu0 %v4871
        %v4873 = vpop.xlane.xlu0 %4872
        %v4874 = vsel %vm910, %v4824, 0.0
        %4875 = vadd.xlane.f32.xlu0 %v4874
        %v4876 = vpop.xlane.xlu0 %4875
        %v4877 = vsel %vm910, %v4825, 0.0
        %4878 = vadd.xlane.f32.xlu0 %v4877
        %v4879 = vpop.xlane.xlu0 %4878
        %v4880 = vsel %vm910, %v4826, 0.0
        %4881 = vadd.xlane.f32.xlu0 %v4880
        %v4882 = vpop.xlane.xlu0 %4881
        %v4883 = vsel %vm910, %v4827, 0.0
        %4884 = vadd.xlane.f32.xlu0 %v4883
        %v4885 = vpop.xlane.xlu0 %4884
        %v4886 = vsel %vm910, %v4828, 0.0
        %4887 = vadd.xlane.f32.xlu0 %v4886
        %v4888 = vpop.xlane.xlu0 %4887
        %v4889 = vsel %vm910, %v4829, 0.0
        %4890 = vadd.xlane.f32.xlu0 %v4889
        %v4891 = vpop.xlane.xlu0 %4890
        %v4892 = vsel %vm910, %v4830, 0.0
        %4893 = vadd.xlane.f32.xlu0 %v4892
        %v4894 = vpop.xlane.xlu0 %4893
        %v4895 = vsel %vm910, %v4831, 0.0
        %4896 = vadd.xlane.f32.xlu0 %v4895
        %v4897 = vpop.xlane.xlu0 %4896
        %v4898 = vsel %vm910, %v4832, 0.0
        %4899 = vadd.xlane.f32.xlu0 %v4898
        %v4900 = vpop.xlane.xlu0 %4899
        %v4901 = vsel %vm910, %v4833, 0.0
        %4902 = vadd.xlane.f32.xlu0 %v4901
        %v4903 = vpop.xlane.xlu0 %4902
        %v4904 = vsel %vm910, %v4834, 0.0
        %4905 = vadd.xlane.f32.xlu0 %v4904
        %v4906 = vpop.xlane.xlu0 %4905
        %v4907 = vsel %vm910, %v4835, 0.0
        %4908 = vadd.xlane.f32.xlu0 %v4907
        %v4909 = vpop.xlane.xlu0 %4908
        %v4910 = vsel %vm910, %v4836, 0.0
        %4911 = vadd.xlane.f32.xlu0 %v4910
        %v4912 = vpop.xlane.xlu0 %4911
        %v4913 = vsel %vm910, %v4837, 0.0
        %4914 = vadd.xlane.f32.xlu0 %v4913
        %v4915 = vpop.xlane.xlu0 %4914
        %v4916 = vsel %vm910, %v4838, 0.0
        %4917 = vadd.xlane.f32.xlu0 %v4916
        %v4918 = vpop.xlane.xlu0 %4917
        %v4919 = vsel %vm910, %v4839, 0.0
        %4920 = vadd.xlane.f32.xlu0 %v4919
        %v4921 = vpop.xlane.xlu0 %4920
        %v4922 = vsel %vm910, %v4840, 0.0
        %4923 = vadd.xlane.f32.xlu0 %v4922
        %v4924 = vpop.xlane.xlu0 %4923
        %v4925 = vsel %vm910, %v4841, 0.0
        %4926 = vadd.xlane.f32.xlu0 %v4925
        %v4927 = vpop.xlane.xlu0 %4926
        %v4928 = vsel %vm910, %v4842, 0.0
        %4929 = vadd.xlane.f32.xlu0 %v4928
        %v4930 = vpop.xlane.xlu0 %4929
        %v4931 = vsel %vm910, %v4843, 0.0
        %4932 = vadd.xlane.f32.xlu0 %v4931
        %v4933 = vpop.xlane.xlu0 %4932
        %v4934 = vsel %vm910, %v4844, 0.0
        %4935 = vadd.xlane.f32.xlu0 %v4934
        %v4936 = vpop.xlane.xlu0 %4935
        %v4937 = vsel %vm910, %v4845, 0.0
        %4938 = vadd.xlane.f32.xlu0 %v4937
        %v4939 = vpop.xlane.xlu0 %4938
        %v4940 = vsel %vm910, %v4846, 0.0
        %4941 = vadd.xlane.f32.xlu0 %v4940
        %v4942 = vpop.xlane.xlu0 %4941
        %v4943 = vsel %vm910, %v4847, 0.0
        %4944 = vadd.xlane.f32.xlu0 %v4943
        %v4945 = vpop.xlane.xlu0 %4944
        %v4946 = vmul.f32 %v4852, %v1007
        %v4947 = vmul.f32 %v4855, %v1007
        %v4948 = vmul.f32 %v4858, %v1007
        %v4949 = vmul.f32 %v4861, %v1007
        %v4950 = vmul.f32 %v4864, %v1007
        %v4951 = vmul.f32 %v4867, %v1007
        %v4952 = vmul.f32 %v4870, %v1007
        %v4953 = vmul.f32 %v4873, %v1007
        %v4954 = vmul.f32 %v4876, %v1007
        %v4955 = vmul.f32 %v4879, %v1007
        %v4956 = vmul.f32 %v4882, %v1007
        %v4957 = vmul.f32 %v4885, %v1007
        %v4958 = vmul.f32 %v4888, %v1007
        %v4959 = vmul.f32 %v4891, %v1007
        %v4960 = vmul.f32 %v4894, %v1007
        %v4961 = vmul.f32 %v4897, %v1007
        %v4962 = vmul.f32 %v4900, %v1007
        %v4963 = vmul.f32 %v4903, %v1007
        %v4964 = vmul.f32 %v4906, %v1007
        %v4965 = vmul.f32 %v4909, %v1007
        %v4966 = vmul.f32 %v4912, %v1007
        %v4967 = vmul.f32 %v4915, %v1007
        %v4968 = vmul.f32 %v4918, %v1007
        %v4969 = vmul.f32 %v4921, %v1007
        %v4970 = vmul.f32 %v4924, %v1007
        %v4971 = vmul.f32 %v4927, %v1007
        %v4972 = vmul.f32 %v4930, %v1007
        %v4973 = vmul.f32 %v4933, %v1007
        %v4974 = vmul.f32 %v4936, %v1007
        %v4975 = vmul.f32 %v4939, %v1007
        %v4976 = vmul.f32 %v4942, %v1007
        %v4977 = vmul.f32 %v4945, %v1007
        %v4978 = vsub.f32 %v4816, %v4946
        %v4979 = vsub.f32 %v4817, %v4947
        %v4980 = vsub.f32 %v4818, %v4948
        %v4981 = vsub.f32 %v4819, %v4949
        %v4982 = vsub.f32 %v4820, %v4950
        %v4983 = vsub.f32 %v4821, %v4951
        %v4984 = vsub.f32 %v4822, %v4952
        %v4985 = vsub.f32 %v4823, %v4953
        %v4986 = vsub.f32 %v4824, %v4954
        %v4987 = vsub.f32 %v4825, %v4955
        %v4988 = vsub.f32 %v4826, %v4956
        %v4989 = vsub.f32 %v4827, %v4957
        %v4990 = vsub.f32 %v4828, %v4958
        %v4991 = vsub.f32 %v4829, %v4959
        %v4992 = vsub.f32 %v4830, %v4960
        %v4993 = vsub.f32 %v4831, %v4961
        %v4994 = vsub.f32 %v4832, %v4962
        %v4995 = vsub.f32 %v4833, %v4963
        %v4996 = vsub.f32 %v4834, %v4964
        %v4997 = vsub.f32 %v4835, %v4965
        %v4998 = vsub.f32 %v4836, %v4966
        %v4999 = vsub.f32 %v4837, %v4967
        %v5000 = vsub.f32 %v4838, %v4968
        %v5001 = vsub.f32 %v4839, %v4969
        %v5002 = vsub.f32 %v4840, %v4970
        %v5003 = vsub.f32 %v4841, %v4971
        %v5004 = vsub.f32 %v4842, %v4972
        %v5005 = vsub.f32 %v4843, %v4973
        %v5006 = vsub.f32 %v4844, %v4974
        %v5007 = vsub.f32 %v4845, %v4975
        %v5008 = vsub.f32 %v4846, %v4976
        %v5009 = vsub.f32 %v4847, %v4977
        %v5010 = vmul.f32 %v4978, %v4978
        %v5011 = vmul.f32 %v4979, %v4979
        %v5012 = vmul.f32 %v4980, %v4980
        %v5013 = vmul.f32 %v4981, %v4981
        %v5014 = vmul.f32 %v4982, %v4982
        %v5015 = vmul.f32 %v4983, %v4983
        %v5016 = vmul.f32 %v4984, %v4984
        %v5017 = vmul.f32 %v4985, %v4985
        %v5018 = vmul.f32 %v4986, %v4986
        %v5019 = vmul.f32 %v4987, %v4987
        %v5020 = vmul.f32 %v4988, %v4988
        %v5021 = vmul.f32 %v4989, %v4989
        %v5022 = vmul.f32 %v4990, %v4990
        %v5023 = vmul.f32 %v4991, %v4991
        %v5024 = vmul.f32 %v4992, %v4992
        %v5025 = vmul.f32 %v4993, %v4993
        %v5026 = vmul.f32 %v4994, %v4994
        %v5027 = vmul.f32 %v4995, %v4995
        %v5028 = vmul.f32 %v4996, %v4996
        %v5029 = vmul.f32 %v4997, %v4997
        %v5030 = vmul.f32 %v4998, %v4998
        %v5031 = vmul.f32 %v4999, %v4999
        %v5032 = vmul.f32 %v5000, %v5000
        %v5033 = vmul.f32 %v5001, %v5001
        %v5034 = vmul.f32 %v5002, %v5002
        %v5035 = vmul.f32 %v5003, %v5003
        %v5036 = vmul.f32 %v5004, %v5004
        %v5037 = vmul.f32 %v5005, %v5005
        %v5038 = vmul.f32 %v5006, %v5006
        %v5039 = vmul.f32 %v5007, %v5007
        %v5040 = vmul.f32 %v5008, %v5008
        %v5041 = vmul.f32 %v5009, %v5009
        %v5042 = vsel %vm910, %v5010, 0.0
        %5043 = vadd.xlane.f32.xlu0 %v5042
        %v5044 = vpop.xlane.xlu0 %5043
        %v5045 = vsel %vm910, %v5011, 0.0
        %5046 = vadd.xlane.f32.xlu0 %v5045
        %v5047 = vpop.xlane.xlu0 %5046
        %v5048 = vsel %vm910, %v5012, 0.0
        %5049 = vadd.xlane.f32.xlu0 %v5048
        %v5050 = vpop.xlane.xlu0 %5049
        %v5051 = vsel %vm910, %v5013, 0.0
        %5052 = vadd.xlane.f32.xlu0 %v5051
        %v5053 = vpop.xlane.xlu0 %5052
        %v5054 = vsel %vm910, %v5014, 0.0
        %5055 = vadd.xlane.f32.xlu0 %v5054
        %v5056 = vpop.xlane.xlu0 %5055
        %v5057 = vsel %vm910, %v5015, 0.0
        %5058 = vadd.xlane.f32.xlu0 %v5057
        %v5059 = vpop.xlane.xlu0 %5058
        %v5060 = vsel %vm910, %v5016, 0.0
        %5061 = vadd.xlane.f32.xlu0 %v5060
        %v5062 = vpop.xlane.xlu0 %5061
        %v5063 = vsel %vm910, %v5017, 0.0
        %5064 = vadd.xlane.f32.xlu0 %v5063
        %v5065 = vpop.xlane.xlu0 %5064
        %v5066 = vsel %vm910, %v5018, 0.0
        %5067 = vadd.xlane.f32.xlu0 %v5066
        %v5068 = vpop.xlane.xlu0 %5067
        %v5069 = vsel %vm910, %v5019, 0.0
        %5070 = vadd.xlane.f32.xlu0 %v5069
        %v5071 = vpop.xlane.xlu0 %5070
        %v5072 = vsel %vm910, %v5020, 0.0
        %5073 = vadd.xlane.f32.xlu0 %v5072
        %v5074 = vpop.xlane.xlu0 %5073
        %v5075 = vsel %vm910, %v5021, 0.0
        %5076 = vadd.xlane.f32.xlu0 %v5075
        %v5077 = vpop.xlane.xlu0 %5076
        %v5078 = vsel %vm910, %v5022, 0.0
        %5079 = vadd.xlane.f32.xlu0 %v5078
        %v5080 = vpop.xlane.xlu0 %5079
        %v5081 = vsel %vm910, %v5023, 0.0
        %5082 = vadd.xlane.f32.xlu0 %v5081
        %v5083 = vpop.xlane.xlu0 %5082
        %v5084 = vsel %vm910, %v5024, 0.0
        %5085 = vadd.xlane.f32.xlu0 %v5084
        %v5086 = vpop.xlane.xlu0 %5085
        %v5087 = vsel %vm910, %v5025, 0.0
        %5088 = vadd.xlane.f32.xlu0 %v5087
        %v5089 = vpop.xlane.xlu0 %5088
        %v5090 = vsel %vm910, %v5026, 0.0
        %5091 = vadd.xlane.f32.xlu0 %v5090
        %v5092 = vpop.xlane.xlu0 %5091
        %v5093 = vsel %vm910, %v5027, 0.0
        %5094 = vadd.xlane.f32.xlu0 %v5093
        %v5095 = vpop.xlane.xlu0 %5094
        %v5096 = vsel %vm910, %v5028, 0.0
        %5097 = vadd.xlane.f32.xlu0 %v5096
        %v5098 = vpop.xlane.xlu0 %5097
        %v5099 = vsel %vm910, %v5029, 0.0
        %5100 = vadd.xlane.f32.xlu0 %v5099
        %v5101 = vpop.xlane.xlu0 %5100
        %v5102 = vsel %vm910, %v5030, 0.0
        %5103 = vadd.xlane.f32.xlu0 %v5102
        %v5104 = vpop.xlane.xlu0 %5103
        %v5105 = vsel %vm910, %v5031, 0.0
        %5106 = vadd.xlane.f32.xlu0 %v5105
        %v5107 = vpop.xlane.xlu0 %5106
        %v5108 = vsel %vm910, %v5032, 0.0
        %5109 = vadd.xlane.f32.xlu0 %v5108
        %v5110 = vpop.xlane.xlu0 %5109
        %v5111 = vsel %vm910, %v5033, 0.0
        %5112 = vadd.xlane.f32.xlu0 %v5111
        %v5113 = vpop.xlane.xlu0 %5112
        %v5114 = vsel %vm910, %v5034, 0.0
        %5115 = vadd.xlane.f32.xlu0 %v5114
        %v5116 = vpop.xlane.xlu0 %5115
        %v5117 = vsel %vm910, %v5035, 0.0
        %5118 = vadd.xlane.f32.xlu0 %v5117
        %v5119 = vpop.xlane.xlu0 %5118
        %v5120 = vsel %vm910, %v5036, 0.0
        %5121 = vadd.xlane.f32.xlu0 %v5120
        %v5122 = vpop.xlane.xlu0 %5121
        %v5123 = vsel %vm910, %v5037, 0.0
        %5124 = vadd.xlane.f32.xlu0 %v5123
        %v5125 = vpop.xlane.xlu0 %5124
        %v5126 = vsel %vm910, %v5038, 0.0
        %5127 = vadd.xlane.f32.xlu0 %v5126
        %v5128 = vpop.xlane.xlu0 %5127
        %v5129 = vsel %vm910, %v5039, 0.0
        %5130 = vadd.xlane.f32.xlu0 %v5129
        %v5131 = vpop.xlane.xlu0 %5130
        %v5132 = vsel %vm910, %v5040, 0.0
        %5133 = vadd.xlane.f32.xlu0 %v5132
        %v5134 = vpop.xlane.xlu0 %5133
        %v5135 = vsel %vm910, %v5041, 0.0
        %5136 = vadd.xlane.f32.xlu0 %v5135
        %v5137 = vpop.xlane.xlu0 %5136
        %v5138 = vmul.f32 %v5044, %v1007
        %v5139 = vmul.f32 %v5047, %v1007
        %v5140 = vmul.f32 %v5050, %v1007
        %v5141 = vmul.f32 %v5053, %v1007
        %v5142 = vmul.f32 %v5056, %v1007
        %v5143 = vmul.f32 %v5059, %v1007
        %v5144 = vmul.f32 %v5062, %v1007
        %v5145 = vmul.f32 %v5065, %v1007
        %v5146 = vmul.f32 %v5068, %v1007
        %v5147 = vmul.f32 %v5071, %v1007
        %v5148 = vmul.f32 %v5074, %v1007
        %v5149 = vmul.f32 %v5077, %v1007
        %v5150 = vmul.f32 %v5080, %v1007
        %v5151 = vmul.f32 %v5083, %v1007
        %v5152 = vmul.f32 %v5086, %v1007
        %v5153 = vmul.f32 %v5089, %v1007
        %v5154 = vmul.f32 %v5092, %v1007
        %v5155 = vmul.f32 %v5095, %v1007
        %v5156 = vmul.f32 %v5098, %v1007
        %v5157 = vmul.f32 %v5101, %v1007
        %v5158 = vmul.f32 %v5104, %v1007
        %v5159 = vmul.f32 %v5107, %v1007
        %v5160 = vmul.f32 %v5110, %v1007
        %v5161 = vmul.f32 %v5113, %v1007
        %v5162 = vmul.f32 %v5116, %v1007
        %v5163 = vmul.f32 %v5119, %v1007
        %v5164 = vmul.f32 %v5122, %v1007
        %v5165 = vmul.f32 %v5125, %v1007
        %v5166 = vmul.f32 %v5128, %v1007
        %v5167 = vmul.f32 %v5131, %v1007
        %v5168 = vmul.f32 %v5134, %v1007
        %v5169 = vmul.f32 %v5137, %v1007
        %v5170 = vadd.f32 %v5138, 1e-05
        %v5171 = vadd.f32 %v5139, 1e-05
        %v5172 = vadd.f32 %v5140, 1e-05
        %v5173 = vadd.f32 %v5141, 1e-05
        %v5174 = vadd.f32 %v5142, 1e-05
        %v5175 = vadd.f32 %v5143, 1e-05
        %v5176 = vadd.f32 %v5144, 1e-05
        %v5177 = vadd.f32 %v5145, 1e-05
        %v5178 = vadd.f32 %v5146, 1e-05
        %v5179 = vadd.f32 %v5147, 1e-05
        %v5180 = vadd.f32 %v5148, 1e-05
        %v5181 = vadd.f32 %v5149, 1e-05
        %v5182 = vadd.f32 %v5150, 1e-05
        %v5183 = vadd.f32 %v5151, 1e-05
        %v5184 = vadd.f32 %v5152, 1e-05
        %v5185 = vadd.f32 %v5153, 1e-05
        %v5186 = vadd.f32 %v5154, 1e-05
        %v5187 = vadd.f32 %v5155, 1e-05
        %v5188 = vadd.f32 %v5156, 1e-05
        %v5189 = vadd.f32 %v5157, 1e-05
        %v5190 = vadd.f32 %v5158, 1e-05
        %v5191 = vadd.f32 %v5159, 1e-05
        %v5192 = vadd.f32 %v5160, 1e-05
        %v5193 = vadd.f32 %v5161, 1e-05
        %v5194 = vadd.f32 %v5162, 1e-05
        %v5195 = vadd.f32 %v5163, 1e-05
        %v5196 = vadd.f32 %v5164, 1e-05
        %v5197 = vadd.f32 %v5165, 1e-05
        %v5198 = vadd.f32 %v5166, 1e-05
        %v5199 = vadd.f32 %v5167, 1e-05
        %v5200 = vadd.f32 %v5168, 1e-05
        %v5201 = vadd.f32 %v5169, 1e-05
        %v5202 = vrsqrt.pop %v5170
        %v5203 = vrsqrt.pop %v5171
        %v5204 = vrsqrt.pop %v5172
        %v5205 = vrsqrt.pop %v5173
        %v5206 = vrsqrt.pop %v5174
        %v5207 = vrsqrt.pop %v5175
        %v5208 = vrsqrt.pop %v5176
        %v5209 = vrsqrt.pop %v5177
        %v5210 = vrsqrt.pop %v5178
        %v5211 = vrsqrt.pop %v5179
        %v5212 = vrsqrt.pop %v5180
        %v5213 = vrsqrt.pop %v5181
        %v5214 = vrsqrt.pop %v5182
        %v5215 = vrsqrt.pop %v5183
        %v5216 = vrsqrt.pop %v5184
        %v5217 = vrsqrt.pop %v5185
        %v5218 = vrsqrt.pop %v5186
        %v5219 = vrsqrt.pop %v5187
        %v5220 = vrsqrt.pop %v5188
        %v5221 = vrsqrt.pop %v5189
        %v5222 = vrsqrt.pop %v5190
        %v5223 = vrsqrt.pop %v5191
        %v5224 = vrsqrt.pop %v5192
        %v5225 = vrsqrt.pop %v5193
        %v5226 = vrsqrt.pop %v5194
        %v5227 = vrsqrt.pop %v5195
        %v5228 = vrsqrt.pop %v5196
        %v5229 = vrsqrt.pop %v5197
        %v5230 = vrsqrt.pop %v5198
        %v5231 = vrsqrt.pop %v5199
        %v5232 = vrsqrt.pop %v5200
        %v5233 = vrsqrt.pop %v5201
        %v5234 = vmul.f32 %v4978, %v5202
        %v5235 = vmul.f32 %v4979, %v5203
        %v5236 = vmul.f32 %v4980, %v5204
        %v5237 = vmul.f32 %v4981, %v5205
        %v5238 = vmul.f32 %v4982, %v5206
        %v5239 = vmul.f32 %v4983, %v5207
        %v5240 = vmul.f32 %v4984, %v5208
        %v5241 = vmul.f32 %v4985, %v5209
        %v5242 = vmul.f32 %v4986, %v5210
        %v5243 = vmul.f32 %v4987, %v5211
        %v5244 = vmul.f32 %v4988, %v5212
        %v5245 = vmul.f32 %v4989, %v5213
        %v5246 = vmul.f32 %v4990, %v5214
        %v5247 = vmul.f32 %v4991, %v5215
        %v5248 = vmul.f32 %v4992, %v5216
        %v5249 = vmul.f32 %v4993, %v5217
        %v5250 = vmul.f32 %v4994, %v5218
        %v5251 = vmul.f32 %v4995, %v5219
        %v5252 = vmul.f32 %v4996, %v5220
        %v5253 = vmul.f32 %v4997, %v5221
        %v5254 = vmul.f32 %v4998, %v5222
        %v5255 = vmul.f32 %v4999, %v5223
        %v5256 = vmul.f32 %v5000, %v5224
        %v5257 = vmul.f32 %v5001, %v5225
        %v5258 = vmul.f32 %v5002, %v5226
        %v5259 = vmul.f32 %v5003, %v5227
        %v5260 = vmul.f32 %v5004, %v5228
        %v5261 = vmul.f32 %v5005, %v5229
        %v5262 = vmul.f32 %v5006, %v5230
        %v5263 = vmul.f32 %v5007, %v5231
        %v5264 = vmul.f32 %v5008, %v5232
        %v5265 = vmul.f32 %v5009, %v5233
        %v5266 = vlaneseq
        %v5267 = vshrl.u32 %v5266, 7
        %v5268 = vsub.s32 0, %v5267
        %v5269 = vrot.slane %v4848, %v5268
        %v5270 = vmul.f32 %v5234, %v5269
        %v5271 = vmul.f32 %v5235, %v5269
        %v5272 = vmul.f32 %v5236, %v5269
        %v5273 = vmul.f32 %v5237, %v5269
        %v5274 = vmul.f32 %v5238, %v5269
        %v5275 = vmul.f32 %v5239, %v5269
        %v5276 = vmul.f32 %v5240, %v5269
        %v5277 = vmul.f32 %v5241, %v5269
        %v5278 = vmul.f32 %v5242, %v5269
        %v5279 = vmul.f32 %v5243, %v5269
        %v5280 = vmul.f32 %v5244, %v5269
        %v5281 = vmul.f32 %v5245, %v5269
        %v5282 = vmul.f32 %v5246, %v5269
        %v5283 = vmul.f32 %v5247, %v5269
        %v5284 = vmul.f32 %v5248, %v5269
        %v5285 = vmul.f32 %v5249, %v5269
        %v5286 = vmul.f32 %v5250, %v5269
        %v5287 = vmul.f32 %v5251, %v5269
        %v5288 = vmul.f32 %v5252, %v5269
        %v5289 = vmul.f32 %v5253, %v5269
        %v5290 = vmul.f32 %v5254, %v5269
        %v5291 = vmul.f32 %v5255, %v5269
        %v5292 = vmul.f32 %v5256, %v5269
        %v5293 = vmul.f32 %v5257, %v5269
        %v5294 = vmul.f32 %v5258, %v5269
        %v5295 = vmul.f32 %v5259, %v5269
        %v5296 = vmul.f32 %v5260, %v5269
        %v5297 = vmul.f32 %v5261, %v5269
        %v5298 = vmul.f32 %v5262, %v5269
        %v5299 = vmul.f32 %v5263, %v5269
        %v5300 = vmul.f32 %v5264, %v5269
        %v5301 = vmul.f32 %v5265, %v5269
        %v5302 = vlaneseq
        %v5303 = vshrl.u32 %v5302, 7
        %v5304 = vsub.s32 0, %v5303
        %v5305 = vrot.slane %v4849, %v5304
        %v5306 = vadd.f32 %v5270, %v5305
        %v5307 = vadd.f32 %v5271, %v5305
        %v5308 = vadd.f32 %v5272, %v5305
        %v5309 = vadd.f32 %v5273, %v5305
        %v5310 = vadd.f32 %v5274, %v5305
        %v5311 = vadd.f32 %v5275, %v5305
        %v5312 = vadd.f32 %v5276, %v5305
        %v5313 = vadd.f32 %v5277, %v5305
        %v5314 = vadd.f32 %v5278, %v5305
        %v5315 = vadd.f32 %v5279, %v5305
        %v5316 = vadd.f32 %v5280, %v5305
        %v5317 = vadd.f32 %v5281, %v5305
        %v5318 = vadd.f32 %v5282, %v5305
        %v5319 = vadd.f32 %v5283, %v5305
        %v5320 = vadd.f32 %v5284, %v5305
        %v5321 = vadd.f32 %v5285, %v5305
        %v5322 = vadd.f32 %v5286, %v5305
        %v5323 = vadd.f32 %v5287, %v5305
        %v5324 = vadd.f32 %v5288, %v5305
        %v5325 = vadd.f32 %v5289, %v5305
        %v5326 = vadd.f32 %v5290, %v5305
        %v5327 = vadd.f32 %v5291, %v5305
        %v5328 = vadd.f32 %v5292, %v5305
        %v5329 = vadd.f32 %v5293, %v5305
        %v5330 = vadd.f32 %v5294, %v5305
        %v5331 = vadd.f32 %v5295, %v5305
        %v5332 = vadd.f32 %v5296, %v5305
        %v5333 = vadd.f32 %v5297, %v5305
        %v5334 = vadd.f32 %v5298, %v5305
        %v5335 = vadd.f32 %v5299, %v5305
        %v5336 = vadd.f32 %v5300, %v5305
        %v5337 = vadd.f32 %v5301, %v5305
        %5338 = vst.msk [vmem:[%s351] sm:$0xff] %vm910, %v5306
        %5339 = vst.msk [vmem:[%s351 + $0x8] sm:$0xff] %vm910, %v5307
        %5340 = vst.msk [vmem:[%s351 + $0x10] sm:$0xff] %vm910, %v5308
        %5341 = vst.msk [vmem:[%s351 + $0x18] sm:$0xff] %vm910, %v5309
        %5342 = vst.msk [vmem:[%s351 + $0x20] sm:$0xff] %vm910, %v5310
        %5343 = vst.msk [vmem:[%s351 + $0x28] sm:$0xff] %vm910, %v5311
        %5344 = vst.msk [vmem:[%s351 + $0x30] sm:$0xff] %vm910, %v5312
        %5345 = vst.msk [vmem:[%s351 + $0x38] sm:$0xff] %vm910, %v5313
        %5346 = vst.msk [vmem:[%s351 + $0x40] sm:$0xff] %vm910, %v5314
        %5347 = vst.msk [vmem:[%s351 + $0x48] sm:$0xff] %vm910, %v5315
        %5348 = vst.msk [vmem:[%s351 + $0x50] sm:$0xff] %vm910, %v5316
        %5349 = vst.msk [vmem:[%s351 + $0x58] sm:$0xff] %vm910, %v5317
        %5350 = vst.msk [vmem:[%s351 + $0x60] sm:$0xff] %vm910, %v5318
        %5351 = vst.msk [vmem:[%s351 + $0x68] sm:$0xff] %vm910, %v5319
        %5352 = vst.msk [vmem:[%s351 + $0x70] sm:$0xff] %vm910, %v5320
        %5353 = vst.msk [vmem:[%s351 + $0x78] sm:$0xff] %vm910, %v5321
        %5354 = vst.msk [vmem:[%s351 + $0x80] sm:$0xff] %vm910, %v5322
        %5355 = vst.msk [vmem:[%s351 + $0x88] sm:$0xff] %vm910, %v5323
        %5356 = vst.msk [vmem:[%s351 + $0x90] sm:$0xff] %vm910, %v5324
        %5357 = vst.msk [vmem:[%s351 + $0x98] sm:$0xff] %vm910, %v5325
        %5358 = vst.msk [vmem:[%s351 + $0xa0] sm:$0xff] %vm910, %v5326
        %5359 = vst.msk [vmem:[%s351 + $0xa8] sm:$0xff] %vm910, %v5327
        %5360 = vst.msk [vmem:[%s351 + $0xb0] sm:$0xff] %vm910, %v5328
        %5361 = vst.msk [vmem:[%s351 + $0xb8] sm:$0xff] %vm910, %v5329
        %5362 = vst.msk [vmem:[%s351 + $0xc0] sm:$0xff] %vm910, %v5330
        %5363 = vst.msk [vmem:[%s351 + $0xc8] sm:$0xff] %vm910, %v5331
        %5364 = vst.msk [vmem:[%s351 + $0xd0] sm:$0xff] %vm910, %v5332
        %5365 = vst.msk [vmem:[%s351 + $0xd8] sm:$0xff] %vm910, %v5333
        %5366 = vst.msk [vmem:[%s351 + $0xe0] sm:$0xff] %vm910, %v5334
        %5367 = vst.msk [vmem:[%s351 + $0xe8] sm:$0xff] %vm910, %v5335
        %5368 = vst.msk [vmem:[%s351 + $0xf0] sm:$0xff] %vm910, %v5336
        %5369 = vst.msk [vmem:[%s351 + $0xf8] sm:$0xff] %vm910, %v5337
        %p5370 = scmp.lt.s32.totalorder %s25, 1
        %s5371 = scalar_select %p5370, %s25, 1
        %s5372 = smul.addr %s5371, 32
        %s5373 = smul.addr %s5372, 8
        %s5374 = scalar_lea.vmem %s6, %s5373
        %p5375 = scmp.lt.s32.totalorder %s25, 1
        %s5376 = scalar_select %p5375, %s25, 1
        %s5377 = smul.addr %s5376, 32
        %s5378 = smul.addr %s5377, 8
        %s5379 = scalar_lea.vmem %s7, %s5378
        // Predicated region
        $region53: #{tpu_custom_call.1} parent=43 // pred_check
          %p5380 = pneg %p179
        $region54: #{tpu_custom_call.1} parent=43 // pred_check_branch
          %5382 = sbr.rel (%p5380) target = $region56
        $region55: #{tpu_custom_call.1} parent=43 // pred_region
          _
        $region56: #{tpu_custom_call.1} parent=43 // pred_fallthru
          _
        // Predicated region
        $region57: #{tpu_custom_call.1} parent=43 // pred_check
          %p5383 = pneg %p205
        $region58: #{tpu_custom_call.1} parent=43 // pred_check_branch
          %5385 = sbr.rel (%p5383) target = $region60
        $region59: #{tpu_custom_call.1} parent=43 // pred_region
          _
        $region60: #{tpu_custom_call.1} parent=43 // pred_fallthru
          _
      $region44: #{tpu_custom_call.1} parent=5 // pred_fallthru
        _
      %p5386 = scmp.le.s32.totalorder 2, %s20
      // Predicated region
      $region61: #{tpu_custom_call.1} parent=5 // pred_check
        %p5387 = pneg %p5386
      $region62: #{tpu_custom_call.1} parent=5 // pred_check_branch
        %5389 = sbr.rel (%p5387) target = $region64
      $region63: #{tpu_custom_call.1} parent=5 // pred_region
        %s5390 = ssub.s32 %s20, 2
        // Predicated region
        $region65: #{tpu_custom_call.1} parent=63 // pred_check
          %p5391 = pneg %p185
        $region66: #{tpu_custom_call.1} parent=63 // pred_check_branch
          %5393 = sbr.rel (%p5391) target = $region68
        $region67: #{tpu_custom_call.1} parent=63 // pred_region
          %p5394 = scmp.lt.s32.totalorder %s26, 1
          %s5395 = scalar_select %p5394, %s26, 1
          %s5396 = smul.addr %s5395, 32
          %s5397 = smul.addr %s5396, 8
          %s5398 = scalar_lea.vmem %s6, %s5397
        $region68: #{tpu_custom_call.1} parent=63 // pred_fallthru
          _
        // Predicated region
        $region69: #{tpu_custom_call.1} parent=63 // pred_check
          %p5399 = pneg %p211
        $region70: #{tpu_custom_call.1} parent=63 // pred_check_branch
          %5401 = sbr.rel (%p5399) target = $region72
        $region71: #{tpu_custom_call.1} parent=63 // pred_region
          %p5402 = scmp.lt.s32.totalorder %s26, 1
          %s5403 = scalar_select %p5402, %s26, 1
          %s5404 = smul.addr %s5403, 32
          %s5405 = smul.addr %s5404, 8
          %s5406 = scalar_lea.vmem %s7, %s5405
        $region72: #{tpu_custom_call.1} parent=63 // pred_fallthru
          _
      $region64: #{tpu_custom_call.1} parent=5 // pred_fallthru
        _
    $region6: #{tpu_custom_call.1} parent=1 // loop_footer
      %s24 = sadd.s32 1, %s20
    $region7: #{tpu_custom_call.1} parent=1 // loop_footer_branch
      %19 = sbr.rel target = $region3
    $region8: #{tpu_custom_call.1} parent=1 // loop_exit
      _
    %5407 = vsyncpa [#allocation3], 1
    %s5408 = scalar_lea.sflag [#allocation3], 1
    %5409 = vsyncpa %s5408, 1
    %5410 = vsyncpa [#allocation5], 1
    %s5411 = scalar_lea.sflag [#allocation5], 1
    %5412 = vsyncpa %s5411, 1

</llo_original>
